<compile_context>
chip_gen: v7x
topology: tpu7x:2x2x1
jax: 0.10.0
libtpu: 0.0.40
codegen_flags: <defaults>
</compile_context>

<pallas_src>
import functools
import math

import jax
import jax.numpy as jnp
from jax import lax
from jax.experimental import pallas as pl
from jax.experimental.pallas import tpu as pltpu


def find_multiple(n: int, k: int) -> int:
    if n % k == 0:
        return n
    return n + k - n % k


# ----------------------------- chip dispatch ---------------------------------

@functools.lru_cache(maxsize=1)
def chip_config():
    """Tile targets / VMEM limit per TPU generation (v7x has 64 MiB VMEM per TC)."""
    vmem_bytes = None
    try:
        vmem_bytes = int(pltpu.get_tpu_info().vmem_capacity_bytes)
    except Exception:
        try:
            kind = jax.devices()[0].device_kind.lower()
            if "v7" in kind:
                vmem_bytes = 64 * 1024 * 1024
        except Exception:
            vmem_bytes = None
    if vmem_bytes is not None and vmem_bytes <= 64 * 1024 * 1024:
        # v7x-class: smaller tiles, tighter scoped-VMEM request, 2 TCs share the grid.
        return dict(tm_norm=512, tn_norm=256, tm_lin=256, tn_lin=256, tk_lin=512,
                    tq=256, tkv=256, vmem_limit=26 * 1024 * 1024)
    # v5e / v6e: 128 MiB VMEM -> larger tiles, fewer grid steps, less HBM re-read.
    return dict(tm_norm=1024, tn_norm=512, tm_lin=512, tn_lin=512, tk_lin=1024,
                tq=512, tkv=512, vmem_limit=48 * 1024 * 1024)


# ------------------------------ tile helpers ----------------------------------

def _tile_strict(n: int, target: int, align: int) -> int:
    """Largest divisor of n that is <= target and a multiple of align; else n."""
    if n <= target:
        return n
    for cand in range(target, align - 1, -1):
        if n % cand == 0 and cand % align == 0:
            return cand
    return n


def _tile(n: int, target: int, align: int) -> int:
    """Prefer the whole dim when it is small; else the largest aligned divisor."""
    if n <= 2 * target:
        return n
    return _tile_strict(n, target, align)


def _feature_tile(D: int, head_dim: int, target: int) -> int:
    """Output-feature tile for the QKV kernel: whole heads and lane-aligned."""
    if D <= 2 * target:
        return D
    step = head_dim * 128 // math.gcd(head_dim, 128)      # lcm(head_dim, 128)
    cand = (min(target, D) // step) * step
    while cand >= step:
        if D % cand == 0:
            return cand
        cand -= step
    return D


def _norm_row_tile(n_rows: int, d: int, target: int, vmem_limit: int) -> int:
    """Row tile for the fused-norm kernels; cap the f32 row block at ~1/8 of VMEM."""
    cap = max(8, (vmem_limit // 8) // (4 * d) // 8 * 8)
    return _tile_strict(n_rows, min(target, cap), 8)


# ----------------------------- Pallas kernels ---------------------------------

def rmsnorm_qkv_rope_kernel(x_ref, g_ref, cos_ref, sin_ref,
                            wq_ref, wk_ref, wv_ref,
                            q_ref, k_ref, v_ref, xn_sc,
                            *, eps, head_dim, heads_per_tile):
    """attention_norm + QKV projection + rotary(q, k) for one (row, feature) tile.

    The rotary de-interleave permutation and the softmax scale are folded into the
    q/k weight columns offline, so rotary here is pure elementwise math in the
    de-interleaved layout.  The normalized row block is cached in VMEM scratch and
    recomputed only when the row tile changes (feature axis = innermost, arbitrary).
    """
    n = pl.program_id(2)

    @pl.when(n == 0)
    def _():
        xb = x_ref[0].astype(jnp.float32)                     # (tm, D)
        ms = jnp.mean(xb * xb, axis=-1, keepdims=True)
        xn_sc[...] = (xb * lax.rsqrt(ms + eps) * g_ref[...]).astype(jnp.bfloat16)

    xn = xn_sc[...]
    q = jnp.dot(xn, wq_ref[...], preferred_element_type=jnp.float32)
    k = jnp.dot(xn, wk_ref[...], preferred_element_type=jnp.float32)
    v = jnp.dot(xn, wv_ref[...], preferred_element_type=jnp.float32)

    cos, sin = cos_ref[...], sin_ref[...]                     # (tm, half) f32
    half = head_dim // 2
    q_parts, k_parts = [], []
    for h in range(heads_per_tile):
        off = h * head_dim
        qa, qb = q[:, off:off + half], q[:, off + half:off + head_dim]
        ka, kb = k[:, off:off + half], k[:, off + half:off + head_dim]
        q_parts += [qa * cos - qb * sin, qb * cos + qa * sin]
        k_parts += [ka * cos - kb * sin, kb * cos + ka * sin]
    q_ref[0] = jnp.concatenate(q_parts, axis=-1).astype(q_ref.dtype)   # lane-dense
    k_ref[0] = jnp.concatenate(k_parts, axis=-1).astype(k_ref.dtype)
    v_ref[0] = v.astype(v_ref.dtype)


def attention_kernel(q_ref, k_ref, v_ref, o_ref, m_sc, l_sc, acc_sc,
                     *, n_head, head_dim):
    """Flash attention for all heads of one (batch, q-tile) over one kv-tile.

    q/k are already rotary-rotated and scale-folded (bf16); all softmax state is f32.
    """
    kv = pl.program_id(2)

    @pl.when(kv == 0)
    def _():
        m_sc[...] = jnp.full_like(m_sc, -jnp.inf)
        l_sc[...] = jnp.zeros_like(l_sc)
        acc_sc[...] = jnp.zeros_like(acc_sc)

    for h in range(n_head):
        off = h * head_dim
        q_h = q_ref[0, :, off:off + head_dim]                 # (tq,  hd) bf16
        k_h = k_ref[0, :, off:off + head_dim]                 # (tkv, hd) bf16
        s = lax.dot_general(q_h, k_h, (((1,), (1,)), ((), ())),
                            preferred_element_type=jnp.float32)        # (tq, tkv)

        m_prev = m_sc[:, h:h + 1]
        l_prev = l_sc[:, h:h + 1]
        m_new = jnp.maximum(m_prev, jnp.max(s, axis=-1, keepdims=True))
        alpha = jnp.exp(m_prev - m_new)
        p = jnp.exp(s - m_new)
        l_sc[:, h:h + 1] = alpha * l_prev + jnp.sum(p, axis=-1, keepdims=True)
        m_sc[:, h:h + 1] = m_new

        pv = jnp.dot(p.astype(jnp.bfloat16), v_ref[0, :, off:off + head_dim],
                     preferred_element_type=jnp.float32)               # (tq, hd)
        acc_sc[:, off:off + head_dim] = alpha * acc_sc[:, off:off + head_dim] + pv

    @pl.when(kv == pl.num_programs(2) - 1)
    def _():
        # Per-head normalize + store (no concatenate temp); exact reciprocal here.
        for h in range(n_head):
            off = h * head_dim
            inv = pl.reciprocal(l_sc[:, h:h + 1], approx=False)
            o_ref[0, :, off:off + head_dim] = (
                acc_sc[:, off:off + head_dim] * inv).astype(o_ref.dtype)


def matmul_residual_kernel(x_ref, w_ref, r_ref, o_ref, acc_ref):
    """Tiled x @ w with f32 accumulator over the K grid axis; residual on flush."""
    kk = pl.program_id(2)

    @pl.when(kk == 0)
    def _():
        acc_ref[...] = jnp.zeros_like(acc_ref)

    acc_ref[...] += jnp.dot(x_ref[...], w_ref[...],
                            preferred_element_type=jnp.float32)

    @pl.when(kk == pl.num_programs(2) - 1)
    def _():
        o_ref[...] = (acc_ref[...] + r_ref[...].astype(jnp.float32)
                      ).astype(o_ref.dtype)


def rmsnorm_ffn_up_kernel(h_ref, g_ref, w1_ref, w3_ref, o_ref, hn_sc, *, eps):
    """ffn_norm (cached per row tile) fused with w1 / w3 projections + SiLU gate."""
    j = pl.program_id(1)

    @pl.when(j == 0)
    def _():
        hb = h_ref[...].astype(jnp.float32)                   # (tm, D)
        ms = jnp.mean(hb * hb, axis=-1, keepdims=True)
        hn_sc[...] = (hb * lax.rsqrt(ms + eps) * g_ref[...]).astype(jnp.bfloat16)

    hn = hn_sc[...]
    u1 = jnp.dot(hn, w1_ref[...], preferred_element_type=jnp.float32)
    u3 = jnp.dot(hn, w3_ref[...], preferred_element_type=jnp.float32)
    silu = u1 * pl.reciprocal(1.0 + jnp.exp(-u1), approx=True)   # sigmoid on EUP
    o_ref[...] = (silu * u3).astype(o_ref.dtype)


# ------------------------------ pallas wrappers --------------------------------

def rmsnorm_qkv_rope(x, g, cos, sin, wq_t, wk_t, wv_t, *, eps, head_dim, cfg):
    B, S, D = x.shape
    half = head_dim // 2
    tm = _norm_row_tile(S, D, cfg["tm_norm"], cfg["vmem_limit"])
    tn = _feature_tile(D, head_dim, cfg["tn_norm"])
    assert tn % head_dim == 0
    out = jax.ShapeDtypeStruct((B, S, D), jnp.bfloat16)
    kern = functools.partial(rmsnorm_qkv_rope_kernel, eps=eps, head_dim=head_dim,
                             heads_per_tile=tn // head_dim)
    return pl.pallas_call(
        kern,
        out_shape=(out, out, out),
        grid=(B, S // tm, D // tn),
        in_specs=[pl.BlockSpec((1, tm, D), lambda b, s, n: (b, s, 0)),
                  pl.BlockSpec((1, D), lambda b, s, n: (0, 0)),
                  pl.BlockSpec((tm, half), lambda b, s, n: (s, 0)),
                  pl.BlockSpec((tm, half), lambda b, s, n: (s, 0)),
                  pl.BlockSpec((D, tn), lambda b, s, n: (0, n)),
                  pl.BlockSpec((D, tn), lambda b, s, n: (0, n)),
                  pl.BlockSpec((D, tn), lambda b, s, n: (0, n))],
        out_specs=(pl.BlockSpec((1, tm, tn), lambda b, s, n: (b, s, n)),) * 3,
        scratch_shapes=[pltpu.VMEM((tm, D), jnp.bfloat16)],      # cached xn
        compiler_params=pltpu.CompilerParams(
            dimension_semantics=("parallel", "parallel", "arbitrary"),
            vmem_limit_bytes=cfg["vmem_limit"]),
    )(x, g, cos, sin, wq_t, wk_t, wv_t)


def flash_attention(q, k, v, *, n_head, head_dim, cfg):
    B, S, D = q.shape
    assert D == n_head * head_dim
    tq = _tile(S, cfg["tq"], 8)
    tkv = _tile(S, cfg["tkv"], 8)
    kern = functools.partial(attention_kernel, n_head=n_head, head_dim=head_dim)
    return pl.pallas_call(
        kern,
        out_shape=jax.ShapeDtypeStruct((B, S, D), jnp.bfloat16),
        grid=(B, S // tq, S // tkv),
        in_specs=[pl.BlockSpec((1, tq, D), lambda b, qi, kv: (b, qi, 0)),
                  pl.BlockSpec((1, tkv, D), lambda b, qi, kv: (b, kv, 0)),
                  pl.BlockSpec((1, tkv, D), lambda b, qi, kv: (b, kv, 0))],
        out_specs=pl.BlockSpec((1, tq, D), lambda b, qi, kv: (b, qi, 0)),
        scratch_shapes=[pltpu.VMEM((tq, n_head), jnp.float32),   # m
                        pltpu.VMEM((tq, n_head), jnp.float32),   # l
                        pltpu.VMEM((tq, D), jnp.float32)],       # acc
        compiler_params=pltpu.CompilerParams(
            dimension_semantics=("parallel", "parallel", "arbitrary"),
            vmem_limit_bytes=cfg["vmem_limit"]),
    )(q, k, v)


def linear_residual(x, w_t, r, *, out_dtype, cfg):
    """out = r + x @ w_t, tiled over (M, N, K) with an f32 accumulator."""
    M, K = x.shape
    _, N = w_t.shape
    tm = _tile(M, cfg["tm_lin"], 8)
    tn = _tile(N, cfg["tn_lin"], 128)
    tk = _tile(K, cfg["tk_lin"], 128)
    return pl.pallas_call(
        matmul_residual_kernel,
        out_shape=jax.ShapeDtypeStruct((M, N), out_dtype),
        grid=(M // tm, N // tn, K // tk),
        in_specs=[pl.BlockSpec((tm, tk), lambda i, j, kk: (i, kk)),
                  pl.BlockSpec((tk, tn), lambda i, j, kk: (kk, j)),
                  pl.BlockSpec((tm, tn), lambda i, j, kk: (i, j))],
        out_specs=pl.BlockSpec((tm, tn), lambda i, j, kk: (i, j)),
        scratch_shapes=[pltpu.VMEM((tm, tn), jnp.float32)],
        compiler_params=pltpu.CompilerParams(
            dimension_semantics=("parallel", "parallel", "arbitrary"),
            vmem_limit_bytes=cfg["vmem_limit"]),
    )(x, w_t, r)


def rmsnorm_ffn_up(h2d, g, w1_t, w3_t, *, eps, cfg):
    M, D = h2d.shape
    _, I = w1_t.shape
    tm = _norm_row_tile(M, D, cfg["tm_norm"], cfg["vmem_limit"])
    tn = _tile(I, cfg["tn_norm"], 128)
    return pl.pallas_call(
        functools.partial(rmsnorm_ffn_up_kernel, eps=eps),
        out_shape=jax.ShapeDtypeStruct((M, I), jnp.bfloat16),
        grid=(M // tm, I // tn),
        in_specs=[pl.BlockSpec((tm, D), lambda i, j: (i, 0)),
                  pl.BlockSpec((1, D), lambda i, j: (0, 0)),
                  pl.BlockSpec((D, tn), lambda i, j: (0, j)),
                  pl.BlockSpec((D, tn), lambda i, j: (0, j))],
        out_specs=pl.BlockSpec((tm, tn), lambda i, j: (i, j)),
        scratch_shapes=[pltpu.VMEM((tm, D), jnp.bfloat16)],      # cached hn
        compiler_params=pltpu.CompilerParams(
            dimension_semantics=("parallel", "arbitrary"),
            vmem_limit_bytes=cfg["vmem_limit"]),
    )(h2d, g, w1_t, w3_t)


# ---------------------- weight prep & block forward ----------------------------

def prepare_params(wqkv, wo, w1, w2, w3, attn_g, ffn_g, freqs_cis,
                   n_head, head_dim):
    """One-time weight transform: transpose to (in, out), cast to bf16, fold the
    rotary de-interleave permutation into the q/k columns, and fold the softmax
    scale (1/sqrt(head_dim)) into the q columns."""
    D = wo.shape[0]
    perm_head = jnp.concatenate([jnp.arange(0, head_dim, 2),
                                 jnp.arange(1, head_dim, 2)])
    perm = (jnp.arange(n_head)[:, None] * head_dim + perm_head[None, :]).reshape(-1)
    wqkv_t = wqkv.T                                     # (D, 3D)
    scale = 1.0 / math.sqrt(head_dim)
    return dict(
        wq_t=(wqkv_t[:, 0:D][:, perm] * scale).astype(jnp.bfloat16),
        wk_t=wqkv_t[:, D:2 * D][:, perm].astype(jnp.bfloat16),
        wv_t=wqkv_t[:, 2 * D:3 * D].astype(jnp.bfloat16),
        wo_t=wo.T.astype(jnp.bfloat16),
        w1_t=w1.T.astype(jnp.bfloat16),
        w3_t=w3.T.astype(jnp.bfloat16),
        w2_t=w2.T.astype(jnp.bfloat16),
        attn_norm_g=attn_g.reshape(1, D).astype(jnp.float32),
        ffn_norm_g=ffn_g.reshape(1, D).astype(jnp.float32),
        cos=freqs_cis[..., 0].astype(jnp.float32),      # (S, head_dim // 2)
        sin=freqs_cis[..., 1].astype(jnp.float32),
    )


def transformer_block_forward(x, params, *, n_head, head_dim, eps):
    B, S, D = x.shape
    M = B * S
    cfg = chip_config()

    # --- attention sub-block: h = x + wo(attn(rope(qkv(norm(x))))) ---
    q, k, v = rmsnorm_qkv_rope(x, params["attn_norm_g"], params["cos"],
                               params["sin"], params["wq_t"], params["wk_t"],
                               params["wv_t"], eps=eps, head_dim=head_dim, cfg=cfg)
    y = flash_attention(q, k, v, n_head=n_head, head_dim=head_dim, cfg=cfg)
    h = linear_residual(y.reshape(M, D), params["wo_t"], x.reshape(M, D),
                        out_dtype=jnp.bfloat16, cfg=cfg)           # (M, D) bf16

    # --- MLP sub-block: out = h + w2(silu(w1(norm(h))) * w3(norm(h))) ---
    gated = rmsnorm_ffn_up(h, params["ffn_norm_g"], params["w1_t"], params["w3_t"],
                           eps=eps, cfg=cfg)                       # (M, I) bf16
    out = linear_residual(gated, params["w2_t"], h, out_dtype=jnp.float32, cfg=cfg)
    return out.reshape(B, S, D)


# ----------------------------- pure-JAX reference ------------------------------

def block_reference(x, wqkv, wo, w1, w2, w3, attn_g, ffn_g, freqs_cis,
                    n_head, head_dim, eps):
    B, S, D = x.shape

    def rmsnorm(v, g):
        return v * lax.rsqrt(jnp.mean(v * v, axis=-1, keepdims=True) + eps) * g

    xn = rmsnorm(x, attn_g)
    qkv = (xn @ wqkv.T).reshape(B, S, 3, D)
    q, k, v = qkv[:, :, 0], qkv[:, :, 1], qkv[:, :, 2]
    q = q.reshape(B, S, n_head, head_dim)
    k = k.reshape(B, S, n_head, head_dim)
    v = v.reshape(B, S, n_head, head_dim)

    def rot(t):
        ts = t.reshape(*t.shape[:-1], head_dim // 2, 2)
        fc = freqs_cis.reshape(1, S, 1, head_dim // 2, 2)
        out = jnp.stack([ts[..., 0] * fc[..., 0] - ts[..., 1] * fc[..., 1],
                         ts[..., 1] * fc[..., 0] + ts[..., 0] * fc[..., 1]], -1)
        return out.reshape(*t.shape)

    q, k = rot(q), rot(k)
    q, k, v = (jnp.transpose(t, (0, 2, 1, 3)) for t in (q, k, v))
    scale = 1.0 / math.sqrt(head_dim)
    att = jax.nn.softmax(jnp.einsum("bhqd,bhkd->bhqk", q, k) * scale, axis=-1)
    y = jnp.einsum("bhqk,bhkd->bhqd", att, v)
    y = jnp.transpose(y, (0, 2, 1, 3)).reshape(B, S, D)
    h = x + y @ wo.T
    hn = rmsnorm(h, ffn_g)
    ffn = (jax.nn.silu(hn @ w1.T) * (hn @ w3.T)) @ w2.T
    return h + ffn


# ----------------------------------- main --------------------------------------

if __name__ == "__main__":
    # Small ModelArgs-consistent shapes: dim = n_head * head_dim.
    B, S = 2, 8
    n_head, head_dim = 4, 8
    dim = n_head * head_dim                                   # 32
    inter = find_multiple(int(2 * (4 * dim) / 3), 256)        # 256
    eps = 1e-5
    rope_base = 10000.0
    assert head_dim % 2 == 0

    key = jax.random.PRNGKey(0)
    ks = jax.random.split(key, 8)
    x = jax.random.normal(ks[0], (B, S, dim), dtype=jnp.float32)
    wqkv = jax.random.normal(ks[1], (3 * dim, dim), jnp.float32) / math.sqrt(dim)
    wo = jax.random.normal(ks[2], (dim, dim), jnp.float32) / math.sqrt(dim)
    w1 = jax.random.normal(ks[3], (inter, dim), jnp.float32) / math.sqrt(dim)
    w3 = jax.random.normal(ks[4], (inter, dim), jnp.float32) / math.sqrt(dim)
    w2 = jax.random.normal(ks[5], (dim, inter), jnp.float32) / math.sqrt(inter)
    attn_g = 1.0 + 0.1 * jax.random.normal(ks[6], (dim,), jnp.float32)
    ffn_g = 1.0 + 0.1 * jax.random.normal(ks[7], (dim,), jnp.float32)

    # freqs_cis: (S, head_dim // 2, 2) with (cos, sin) pairs.
    inv_freq = 1.0 / (rope_base ** (jnp.arange(0, head_dim, 2, dtype=jnp.float32)
                                    / head_dim))
    angles = jnp.arange(S, dtype=jnp.float32)[:, None] * inv_freq[None, :]
    freqs_cis = jnp.stack([jnp.cos(angles), jnp.sin(angles)], axis=-1)

    params = prepare_params(wqkv, wo, w1, w2, w3, attn_g, ffn_g, freqs_cis,
                            n_head, head_dim)

    fwd = jax.jit(functools.partial(transformer_block_forward,
                                    n_head=n_head, head_dim=head_dim, eps=eps))
    out = jax.block_until_ready(fwd(x, params))

    ref = block_reference(x, wqkv, wo, w1, w2, w3, attn_g, ffn_g, freqs_cis,
                          n_head, head_dim, eps)
    assert out.shape == (B, S, dim)
    err = jnp.max(jnp.abs(out - ref))
    # bf16 matmuls + bf16 residual stream + approx sigmoid -> loose tolerance.
    assert jnp.allclose(out, ref, atol=1e-1, rtol=5e-2), f"max abs err = {err}"

    print("KERNEL_OK")
</pallas_src>

<mosaic_0001>
module attributes {stable_mosaic.version = 11 : i64} {
  func.func @rmsnorm_qkv_rope_kernel(%arg0: i32, %arg1: i32, %arg2: i32, %arg3: memref<1x8x32xf32, #tpu.memory_space<vmem>>, %arg4: memref<1x32xf32, #tpu.memory_space<vmem>>, %arg5: memref<8x4xf32, #tpu.memory_space<vmem>>, %arg6: memref<8x4xf32, #tpu.memory_space<vmem>>, %arg7: memref<32x32xbf16, #tpu.memory_space<vmem>>, %arg8: memref<32x32xbf16, #tpu.memory_space<vmem>>, %arg9: memref<32x32xbf16, #tpu.memory_space<vmem>>, %arg10: memref<1x8x32xbf16, #tpu.memory_space<vmem>>, %arg11: memref<1x8x32xbf16, #tpu.memory_space<vmem>>, %arg12: memref<1x8x32xbf16, #tpu.memory_space<vmem>>, %arg13: memref<8x32xbf16, #tpu.memory_space<vmem>>) attributes {dimension_semantics = [#tpu.dimension_semantics<parallel>, #tpu.dimension_semantics<parallel>, #tpu.dimension_semantics<arbitrary>], iteration_bounds = array<i64: 2, 1, 1>, scalar_prefetch = 0 : i64, scratch_operands = 1 : i64, tpu.core_type = #tpu.core_type<tc>, window_params = [{transform_indices = @transform_0, window_bounds = array<i64: 1, 8, 32>}, {pipeline_mode = #tpu.pipeline_mode<synchronous>, transform_indices = @transform_1, window_bounds = array<i64: 1, 32>}, {transform_indices = @transform_2, window_bounds = array<i64: 8, 4>}, {transform_indices = @transform_3, window_bounds = array<i64: 8, 4>}, {transform_indices = @transform_4, window_bounds = array<i64: 32, 32>}, {transform_indices = @transform_5, window_bounds = array<i64: 32, 32>}, {transform_indices = @transform_6, window_bounds = array<i64: 32, 32>}, {transform_indices = @transform_7, window_bounds = array<i64: 1, 8, 32>}, {transform_indices = @transform_8, window_bounds = array<i64: 1, 8, 32>}, {transform_indices = @transform_9, window_bounds = array<i64: 1, 8, 32>}]} {
    %c0_i32 = arith.constant 0 : i32
    %0 = arith.cmpi eq, %arg2, %c0_i32 : i32
    %1 = arith.extui %0 : i1 to i32
    %c0_i32_0 = arith.constant 0 : i32
    %2 = arith.cmpi ne, %1, %c0_i32_0 : i32
    scf.if %2 {
      %c0_23 = arith.constant 0 : index
      %c0_24 = arith.constant 0 : index
      %c0_25 = arith.constant 0 : index
      %90 = vector.load %arg3[%c0_23, %c0_24, %c0_25] : memref<1x8x32xf32, #tpu.memory_space<vmem>>, vector<1x8x32xf32>
      %91 = vector.shape_cast %90 : vector<1x8x32xf32> to vector<8x32xf32>
      %92 = arith.mulf %91, %91 : vector<8x32xf32>
      %cst_26 = arith.constant dense<0.000000e+00> : vector<8xf32>
      %93 = vector.multi_reduction <add>, %92, %cst_26 [1] : vector<8x32xf32> to vector<8xf32>
      %94 = vector.shape_cast %93 : vector<8xf32> to vector<8x1xf32>
      %cst_27 = arith.constant 3.200000e+01 : f32
      %95 = vector.broadcast %cst_27 : f32 to vector<8x1xf32>
      %96 = arith.divf %94, %95 : vector<8x1xf32>
      %cst_28 = arith.constant 9.99999974E-6 : f32
      %97 = vector.broadcast %cst_28 : f32 to vector<8x1xf32>
      %98 = arith.addf %96, %97 : vector<8x1xf32>
      %99 = math.rsqrt %98 : vector<8x1xf32>
      %100 = vector.broadcast %99 : vector<8x1xf32> to vector<8x32xf32>
      %101 = arith.mulf %91, %100 : vector<8x32xf32>
      %c0_29 = arith.constant 0 : index
      %c0_30 = arith.constant 0 : index
      %102 = vector.load %arg4[%c0_29, %c0_30] : memref<1x32xf32, #tpu.memory_space<vmem>>, vector<1x32xf32>
      %103 = vector.broadcast %102 : vector<1x32xf32> to vector<8x32xf32>
      %104 = arith.mulf %101, %103 : vector<8x32xf32>
      %105 = arith.truncf %104 : vector<8x32xf32> to vector<8x32xbf16>
      %c0_31 = arith.constant 0 : index
      %c0_32 = arith.constant 0 : index
      %106 = vector.load %arg13[%c0_31, %c0_32] : memref<8x32xbf16, #tpu.memory_space<vmem>>, vector<8x32xbf16>
      tpu.vector_store %arg13[%c0_31, %c0_32], %105 {strides = array<i32>} : memref<8x32xbf16, #tpu.memory_space<vmem>>, vector<8x32xbf16>,
    } else {
    }
    %c0 = arith.constant 0 : index
    %c0_1 = arith.constant 0 : index
    %3 = vector.load %arg13[%c0, %c0_1] : memref<8x32xbf16, #tpu.memory_space<vmem>>, vector<8x32xbf16>
    %c0_2 = arith.constant 0 : index
    %c0_3 = arith.constant 0 : index
    %4 = vector.load %arg7[%c0_2, %c0_3] : memref<32x32xbf16, #tpu.memory_space<vmem>>, vector<32x32xbf16>
    %cst = arith.constant dense<0.000000e+00> : vector<8x32xf32>
    %5 = tpu.matmul %3, %4, %cst {dimension_numbers = #tpu.dot_dimension_numbers<[1], [0], [0], [1], [0, 0, 1, 1], [], []>} : vector<8x32xbf16>, vector<32x32xbf16>, vector<8x32xf32> -> vector<8x32xf32>
    %c0_4 = arith.constant 0 : index
    %c0_5 = arith.constant 0 : index
    %6 = vector.load %arg8[%c0_4, %c0_5] : memref<32x32xbf16, #tpu.memory_space<vmem>>, vector<32x32xbf16>
    %cst_6 = arith.constant dense<0.000000e+00> : vector<8x32xf32>
    %7 = tpu.matmul %3, %6, %cst_6 {dimension_numbers = #tpu.dot_dimension_numbers<[1], [0], [0], [1], [0, 0, 1, 1], [], []>} : vector<8x32xbf16>, vector<32x32xbf16>, vector<8x32xf32> -> vector<8x32xf32>
    %c0_7 = arith.constant 0 : index
    %c0_8 = arith.constant 0 : index
    %8 = vector.load %arg9[%c0_7, %c0_8] : memref<32x32xbf16, #tpu.memory_space<vmem>>, vector<32x32xbf16>
    %cst_9 = arith.constant dense<0.000000e+00> : vector<8x32xf32>
    %9 = tpu.matmul %3, %8, %cst_9 {dimension_numbers = #tpu.dot_dimension_numbers<[1], [0], [0], [1], [0, 0, 1, 1], [], []>} : vector<8x32xbf16>, vector<32x32xbf16>, vector<8x32xf32> -> vector<8x32xf32>
    %c0_10 = arith.constant 0 : index
    %c0_11 = arith.constant 0 : index
    %10 = vector.load %arg5[%c0_10, %c0_11] : memref<8x4xf32, #tpu.memory_space<vmem>>, vector<8x4xf32>
    %c0_12 = arith.constant 0 : index
    %c0_13 = arith.constant 0 : index
    %11 = vector.load %arg6[%c0_12, %c0_13] : memref<8x4xf32, #tpu.memory_space<vmem>>, vector<8x4xf32>
    %12 = vector.extract_strided_slice %5 {offsets = [0, 0], sizes = [8, 4], strides = [1, 1]} : vector<8x32xf32> to vector<8x4xf32>
    %13 = vector.extract_strided_slice %5 {offsets = [0, 4], sizes = [8, 4], strides = [1, 1]} : vector<8x32xf32> to vector<8x4xf32>
    %14 = vector.extract_strided_slice %7 {offsets = [0, 0], sizes = [8, 4], strides = [1, 1]} : vector<8x32xf32> to vector<8x4xf32>
    %15 = vector.extract_strided_slice %7 {offsets = [0, 4], sizes = [8, 4], strides = [1, 1]} : vector<8x32xf32> to vector<8x4xf32>
    %16 = arith.mulf %12, %10 : vector<8x4xf32>
    %17 = arith.mulf %13, %11 : vector<8x4xf32>
    %18 = arith.subf %16, %17 : vector<8x4xf32>
    %19 = arith.mulf %13, %10 : vector<8x4xf32>
    %20 = arith.mulf %12, %11 : vector<8x4xf32>
    %21 = arith.addf %19, %20 : vector<8x4xf32>
    %22 = arith.mulf %14, %10 : vector<8x4xf32>
    %23 = arith.mulf %15, %11 : vector<8x4xf32>
    %24 = arith.subf %22, %23 : vector<8x4xf32>
    %25 = arith.mulf %15, %10 : vector<8x4xf32>
    %26 = arith.mulf %14, %11 : vector<8x4xf32>
    %27 = arith.addf %25, %26 : vector<8x4xf32>
    %28 = vector.extract_strided_slice %5 {offsets = [0, 8], sizes = [8, 4], strides = [1, 1]} : vector<8x32xf32> to vector<8x4xf32>
    %29 = vector.extract_strided_slice %5 {offsets = [0, 12], sizes = [8, 4], strides = [1, 1]} : vector<8x32xf32> to vector<8x4xf32>
    %30 = vector.extract_strided_slice %7 {offsets = [0, 8], sizes = [8, 4], strides = [1, 1]} : vector<8x32xf32> to vector<8x4xf32>
    %31 = vector.extract_strided_slice %7 {offsets = [0, 12], sizes = [8, 4], strides = [1, 1]} : vector<8x32xf32> to vector<8x4xf32>
    %32 = arith.mulf %28, %10 : vector<8x4xf32>
    %33 = arith.mulf %29, %11 : vector<8x4xf32>
    %34 = arith.subf %32, %33 : vector<8x4xf32>
    %35 = arith.mulf %29, %10 : vector<8x4xf32>
    %36 = arith.mulf %28, %11 : vector<8x4xf32>
    %37 = arith.addf %35, %36 : vector<8x4xf32>
    %38 = arith.mulf %30, %10 : vector<8x4xf32>
    %39 = arith.mulf %31, %11 : vector<8x4xf32>
    %40 = arith.subf %38, %39 : vector<8x4xf32>
    %41 = arith.mulf %31, %10 : vector<8x4xf32>
    %42 = arith.mulf %30, %11 : vector<8x4xf32>
    %43 = arith.addf %41, %42 : vector<8x4xf32>
    %44 = vector.extract_strided_slice %5 {offsets = [0, 16], sizes = [8, 4], strides = [1, 1]} : vector<8x32xf32> to vector<8x4xf32>
    %45 = vector.extract_strided_slice %5 {offsets = [0, 20], sizes = [8, 4], strides = [1, 1]} : vector<8x32xf32> to vector<8x4xf32>
    %46 = vector.extract_strided_slice %7 {offsets = [0, 16], sizes = [8, 4], strides = [1, 1]} : vector<8x32xf32> to vector<8x4xf32>
    %47 = vector.extract_strided_slice %7 {offsets = [0, 20], sizes = [8, 4], strides = [1, 1]} : vector<8x32xf32> to vector<8x4xf32>
    %48 = arith.mulf %44, %10 : vector<8x4xf32>
    %49 = arith.mulf %45, %11 : vector<8x4xf32>
    %50 = arith.subf %48, %49 : vector<8x4xf32>
    %51 = arith.mulf %45, %10 : vector<8x4xf32>
    %52 = arith.mulf %44, %11 : vector<8x4xf32>
    %53 = arith.addf %51, %52 : vector<8x4xf32>
    %54 = arith.mulf %46, %10 : vector<8x4xf32>
    %55 = arith.mulf %47, %11 : vector<8x4xf32>
    %56 = arith.subf %54, %55 : vector<8x4xf32>
    %57 = arith.mulf %47, %10 : vector<8x4xf32>
    %58 = arith.mulf %46, %11 : vector<8x4xf32>
    %59 = arith.addf %57, %58 : vector<8x4xf32>
    %60 = vector.extract_strided_slice %5 {offsets = [0, 24], sizes = [8, 4], strides = [1, 1]} : vector<8x32xf32> to vector<8x4xf32>
    %61 = vector.extract_strided_slice %5 {offsets = [0, 28], sizes = [8, 4], strides = [1, 1]} : vector<8x32xf32> to vector<8x4xf32>
    %62 = vector.extract_strided_slice %7 {offsets = [0, 24], sizes = [8, 4], strides = [1, 1]} : vector<8x32xf32> to vector<8x4xf32>
    %63 = vector.extract_strided_slice %7 {offsets = [0, 28], sizes = [8, 4], strides = [1, 1]} : vector<8x32xf32> to vector<8x4xf32>
    %64 = arith.mulf %60, %10 : vector<8x4xf32>
    %65 = arith.mulf %61, %11 : vector<8x4xf32>
    %66 = arith.subf %64, %65 : vector<8x4xf32>
    %67 = arith.mulf %61, %10 : vector<8x4xf32>
    %68 = arith.mulf %60, %11 : vector<8x4xf32>
    %69 = arith.addf %67, %68 : vector<8x4xf32>
    %70 = arith.mulf %62, %10 : vector<8x4xf32>
    %71 = arith.mulf %63, %11 : vector<8x4xf32>
    %72 = arith.subf %70, %71 : vector<8x4xf32>
    %73 = arith.mulf %63, %10 : vector<8x4xf32>
    %74 = arith.mulf %62, %11 : vector<8x4xf32>
    %75 = arith.addf %73, %74 : vector<8x4xf32>
    %76 = tpu.concatenate %18, %21, %34, %37, %50, %53, %66, %69 in 1 : vector<8x4xf32>, vector<8x4xf32>, vector<8x4xf32>, vector<8x4xf32>, vector<8x4xf32>, vector<8x4xf32>, vector<8x4xf32>, vector<8x4xf32> -> vector<8x32xf32>
    %77 = arith.truncf %76 : vector<8x32xf32> to vector<8x32xbf16>
    %c0_14 = arith.constant 0 : index
    %c0_15 = arith.constant 0 : index
    %c0_16 = arith.constant 0 : index
    %78 = vector.load %arg10[%c0_14, %c0_15, %c0_16] : memref<1x8x32xbf16, #tpu.memory_space<vmem>>, vector<1x8x32xbf16>
    %79 = vector.shape_cast %78 : vector<1x8x32xbf16> to vector<8x32xbf16>
    %80 = vector.shape_cast %77 : vector<8x32xbf16> to vector<1x8x32xbf16>
    tpu.vector_store %arg10[%c0_14, %c0_15, %c0_16], %80 {strides = array<i32>} : memref<1x8x32xbf16, #tpu.memory_space<vmem>>, vector<1x8x32xbf16>,
    %81 = tpu.concatenate %24, %27, %40, %43, %56, %59, %72, %75 in 1 : vector<8x4xf32>, vector<8x4xf32>, vector<8x4xf32>, vector<8x4xf32>, vector<8x4xf32>, vector<8x4xf32>, vector<8x4xf32>, vector<8x4xf32> -> vector<8x32xf32>
    %82 = arith.truncf %81 : vector<8x32xf32> to vector<8x32xbf16>
    %c0_17 = arith.constant 0 : index
    %c0_18 = arith.constant 0 : index
    %c0_19 = arith.constant 0 : index
    %83 = vector.load %arg11[%c0_17, %c0_18, %c0_19] : memref<1x8x32xbf16, #tpu.memory_space<vmem>>, vector<1x8x32xbf16>
    %84 = vector.shape_cast %83 : vector<1x8x32xbf16> to vector<8x32xbf16>
    %85 = vector.shape_cast %82 : vector<8x32xbf16> to vector<1x8x32xbf16>
    tpu.vector_store %arg11[%c0_17, %c0_18, %c0_19], %85 {strides = array<i32>} : memref<1x8x32xbf16, #tpu.memory_space<vmem>>, vector<1x8x32xbf16>,
    %86 = arith.truncf %9 : vector<8x32xf32> to vector<8x32xbf16>
    %c0_20 = arith.constant 0 : index
    %c0_21 = arith.constant 0 : index
    %c0_22 = arith.constant 0 : index
    %87 = vector.load %arg12[%c0_20, %c0_21, %c0_22] : memref<1x8x32xbf16, #tpu.memory_space<vmem>>, vector<1x8x32xbf16>
    %88 = vector.shape_cast %87 : vector<1x8x32xbf16> to vector<8x32xbf16>
    %89 = vector.shape_cast %86 : vector<8x32xbf16> to vector<1x8x32xbf16>
    tpu.vector_store %arg12[%c0_20, %c0_21, %c0_22], %89 {strides = array<i32>} : memref<1x8x32xbf16, #tpu.memory_space<vmem>>, vector<1x8x32xbf16>,
    return
  }
  func.func @transform_0(%arg0: i32, %arg1: i32, %arg2: i32) -> (i32, i32, i32) {
    %c0_i32 = arith.constant 0 : i32
    %c0_i32_0 = arith.constant 0 : i32
    return %arg0, %arg1, %c0_i32 : i32, i32, i32
  }
  func.func @transform_1(%arg0: i32, %arg1: i32, %arg2: i32) -> (i32, i32) {
    %c0_i32 = arith.constant 0 : i32
    %c0_i32_0 = arith.constant 0 : i32
    %c0_i32_1 = arith.constant 0 : i32
    return %c0_i32, %c0_i32_0 : i32, i32
  }
  func.func @transform_2(%arg0: i32, %arg1: i32, %arg2: i32) -> (i32, i32) {
    %c0_i32 = arith.constant 0 : i32
    %c0_i32_0 = arith.constant 0 : i32
    return %arg1, %c0_i32 : i32, i32
  }
  func.func @transform_3(%arg0: i32, %arg1: i32, %arg2: i32) -> (i32, i32) {
    %c0_i32 = arith.constant 0 : i32
    %c0_i32_0 = arith.constant 0 : i32
    return %arg1, %c0_i32 : i32, i32
  }
  func.func @transform_4(%arg0: i32, %arg1: i32, %arg2: i32) -> (i32, i32) {
    %c0_i32 = arith.constant 0 : i32
    %c0_i32_0 = arith.constant 0 : i32
    return %c0_i32, %arg2 : i32, i32
  }
  func.func @transform_5(%arg0: i32, %arg1: i32, %arg2: i32) -> (i32, i32) {
    %c0_i32 = arith.constant 0 : i32
    %c0_i32_0 = arith.constant 0 : i32
    return %c0_i32, %arg2 : i32, i32
  }
  func.func @transform_6(%arg0: i32, %arg1: i32, %arg2: i32) -> (i32, i32) {
    %c0_i32 = arith.constant 0 : i32
    %c0_i32_0 = arith.constant 0 : i32
    return %c0_i32, %arg2 : i32, i32
  }
  func.func @transform_7(%arg0: i32, %arg1: i32, %arg2: i32) -> (i32, i32, i32) {
    %c0_i32 = arith.constant 0 : i32
    return %arg0, %arg1, %arg2 : i32, i32, i32
  }
  func.func @transform_8(%arg0: i32, %arg1: i32, %arg2: i32) -> (i32, i32, i32) {
    %c0_i32 = arith.constant 0 : i32
    return %arg0, %arg1, %arg2 : i32, i32, i32
  }
  func.func @transform_9(%arg0: i32, %arg1: i32, %arg2: i32) -> (i32, i32, i32) {
    %c0_i32 = arith.constant 0 : i32
    return %arg0, %arg1, %arg2 : i32, i32, i32
  }
}

module attributes {stable_mosaic.version = 11 : i64} {
  func.func @attention_kernel(%arg0: i32, %arg1: i32, %arg2: i32, %arg3: memref<1x8x32xbf16, #tpu.memory_space<vmem>>, %arg4: memref<1x8x32xbf16, #tpu.memory_space<vmem>>, %arg5: memref<1x8x32xbf16, #tpu.memory_space<vmem>>, %arg6: memref<1x8x32xbf16, #tpu.memory_space<vmem>>, %arg7: memref<8x4xf32, #tpu.memory_space<vmem>>, %arg8: memref<8x4xf32, #tpu.memory_space<vmem>>, %arg9: memref<8x32xf32, #tpu.memory_space<vmem>>) attributes {dimension_semantics = [#tpu.dimension_semantics<parallel>, #tpu.dimension_semantics<parallel>, #tpu.dimension_semantics<arbitrary>], iteration_bounds = array<i64: 2, 1, 1>, scalar_prefetch = 0 : i64, scratch_operands = 3 : i64, tpu.core_type = #tpu.core_type<tc>, window_params = [{transform_indices = @transform_0, window_bounds = array<i64: 1, 8, 32>}, {transform_indices = @transform_1, window_bounds = array<i64: 1, 8, 32>}, {transform_indices = @transform_2, window_bounds = array<i64: 1, 8, 32>}, {transform_indices = @transform_3, window_bounds = array<i64: 1, 8, 32>}]} {
    %c0_i32 = arith.constant 0 : i32
    %0 = arith.cmpi eq, %arg2, %c0_i32 : i32
    %1 = arith.extui %0 : i1 to i32
    %c0_i32_0 = arith.constant 0 : i32
    %2 = arith.cmpi ne, %1, %c0_i32_0 : i32
    scf.if %2 {
      %cst_95 = arith.constant 0xFF800000 : f32
      %126 = vector.broadcast %cst_95 : f32 to vector<8x4xf32>
      %c0_96 = arith.constant 0 : index
      %c0_97 = arith.constant 0 : index
      %127 = vector.load %arg7[%c0_96, %c0_97] : memref<8x4xf32, #tpu.memory_space<vmem>>, vector<8x4xf32>
      tpu.vector_store %arg7[%c0_96, %c0_97], %126 {strides = array<i32>} : memref<8x4xf32, #tpu.memory_space<vmem>>, vector<8x4xf32>,
      %cst_98 = arith.constant 0.000000e+00 : f32
      %128 = vector.broadcast %cst_98 : f32 to vector<8x4xf32>
      %c0_99 = arith.constant 0 : index
      %c0_100 = arith.constant 0 : index
      %129 = vector.load %arg8[%c0_99, %c0_100] : memref<8x4xf32, #tpu.memory_space<vmem>>, vector<8x4xf32>
      tpu.vector_store %arg8[%c0_99, %c0_100], %128 {strides = array<i32>} : memref<8x4xf32, #tpu.memory_space<vmem>>, vector<8x4xf32>,
      %cst_101 = arith.constant 0.000000e+00 : f32
      %130 = vector.broadcast %cst_101 : f32 to vector<8x32xf32>
      %c0_102 = arith.constant 0 : index
      %c0_103 = arith.constant 0 : index
      %131 = vector.load %arg9[%c0_102, %c0_103] : memref<8x32xf32, #tpu.memory_space<vmem>>, vector<8x32xf32>
      tpu.vector_store %arg9[%c0_102, %c0_103], %130 {strides = array<i32>} : memref<8x32xf32, #tpu.memory_space<vmem>>, vector<8x32xf32>,
    } else {
    }
    %c0 = arith.constant 0 : index
    %c0_1 = arith.constant 0 : index
    %c0_2 = arith.constant 0 : index
    %3 = vector.load %arg3[%c0, %c0_1, %c0_2] : memref<1x8x32xbf16, #tpu.memory_space<vmem>>, vector<1x8x8xbf16>
    %4 = vector.shape_cast %3 : vector<1x8x8xbf16> to vector<8x8xbf16>
    %c0_3 = arith.constant 0 : index
    %c0_4 = arith.constant 0 : index
    %c0_5 = arith.constant 0 : index
    %5 = vector.load %arg4[%c0_3, %c0_4, %c0_5] : memref<1x8x32xbf16, #tpu.memory_space<vmem>>, vector<1x8x8xbf16>
    %6 = vector.shape_cast %5 : vector<1x8x8xbf16> to vector<8x8xbf16>
    %cst = arith.constant dense<0.000000e+00> : vector<8x8xf32>
    %7 = tpu.matmul %4, %6, %cst {dimension_numbers = #tpu.dot_dimension_numbers<[1], [1], [0], [0], [0, 0, 1, 0], [], []>} : vector<8x8xbf16>, vector<8x8xbf16>, vector<8x8xf32> -> vector<8x8xf32>
    %c0_6 = arith.constant 0 : index
    %c0_7 = arith.constant 0 : index
    %8 = vector.load %arg7[%c0_6, %c0_7] : memref<8x4xf32, #tpu.memory_space<vmem>>, vector<8x1xf32>
    %c0_8 = arith.constant 0 : index
    %c0_9 = arith.constant 0 : index
    %9 = vector.load %arg8[%c0_8, %c0_9] : memref<8x4xf32, #tpu.memory_space<vmem>>, vector<8x1xf32>
    %cst_10 = arith.constant dense<0xFF800000> : vector<8xf32>
    %10 = vector.multi_reduction <maximumf>, %7, %cst_10 [1] : vector<8x8xf32> to vector<8xf32>
    %11 = vector.shape_cast %10 : vector<8xf32> to vector<8x1xf32>
    %12 = arith.maximumf %8, %11 : vector<8x1xf32>
    %13 = arith.subf %8, %12 : vector<8x1xf32>
    %14 = math.exp %13 : vector<8x1xf32>
    %15 = vector.broadcast %12 : vector<8x1xf32> to vector<8x8xf32>
    %16 = arith.subf %7, %15 : vector<8x8xf32>
    %17 = math.exp %16 : vector<8x8xf32>
    %18 = arith.mulf %14, %9 : vector<8x1xf32>
    %cst_11 = arith.constant dense<0.000000e+00> : vector<8xf32>
    %19 = vector.multi_reduction <add>, %17, %cst_11 [1] : vector<8x8xf32> to vector<8xf32>
    %20 = vector.shape_cast %19 : vector<8xf32> to vector<8x1xf32>
    %21 = arith.addf %18, %20 : vector<8x1xf32>
    %c0_12 = arith.constant 0 : index
    %c0_13 = arith.constant 0 : index
    %22 = vector.load %arg8[%c0_12, %c0_13] : memref<8x4xf32, #tpu.memory_space<vmem>>, vector<8x1xf32>
    tpu.vector_store %arg8[%c0_12, %c0_13], %21 {strides = array<i32>} : memref<8x4xf32, #tpu.memory_space<vmem>>, vector<8x1xf32>,
    %c0_14 = arith.constant 0 : index
    %c0_15 = arith.constant 0 : index
    %23 = vector.load %arg7[%c0_14, %c0_15] : memref<8x4xf32, #tpu.memory_space<vmem>>, vector<8x1xf32>
    tpu.vector_store %arg7[%c0_14, %c0_15], %12 {strides = array<i32>} : memref<8x4xf32, #tpu.memory_space<vmem>>, vector<8x1xf32>,
    %24 = arith.truncf %17 : vector<8x8xf32> to vector<8x8xbf16>
    %c0_16 = arith.constant 0 : index
    %c0_17 = arith.constant 0 : index
    %c0_18 = arith.constant 0 : index
    %25 = vector.load %arg5[%c0_16, %c0_17, %c0_18] : memref<1x8x32xbf16, #tpu.memory_space<vmem>>, vector<1x8x8xbf16>
    %26 = vector.shape_cast %25 : vector<1x8x8xbf16> to vector<8x8xbf16>
    %cst_19 = arith.constant dense<0.000000e+00> : vector<8x8xf32>
    %27 = tpu.matmul %24, %26, %cst_19 {dimension_numbers = #tpu.dot_dimension_numbers<[1], [0], [0], [1], [0, 0, 1, 1], [], []>} : vector<8x8xbf16>, vector<8x8xbf16>, vector<8x8xf32> -> vector<8x8xf32>
    %c0_20 = arith.constant 0 : index
    %c0_21 = arith.constant 0 : index
    %28 = vector.load %arg9[%c0_20, %c0_21] : memref<8x32xf32, #tpu.memory_space<vmem>>, vector<8x8xf32>
    %29 = vector.broadcast %14 : vector<8x1xf32> to vector<8x8xf32>
    %30 = arith.mulf %29, %28 : vector<8x8xf32>
    %31 = arith.addf %30, %27 : vector<8x8xf32>
    %c0_22 = arith.constant 0 : index
    %c0_23 = arith.constant 0 : index
    %32 = vector.load %arg9[%c0_22, %c0_23] : memref<8x32xf32, #tpu.memory_space<vmem>>, vector<8x8xf32>
    tpu.vector_store %arg9[%c0_22, %c0_23], %31 {strides = array<i32>} : memref<8x32xf32, #tpu.memory_space<vmem>>, vector<8x8xf32>,
    %c0_24 = arith.constant 0 : index
    %c0_25 = arith.constant 0 : index
    %c8 = arith.constant 8 : index
    %33 = vector.load %arg3[%c0_24, %c0_25, %c8] : memref<1x8x32xbf16, #tpu.memory_space<vmem>>, vector<1x8x8xbf16>
    %34 = vector.shape_cast %33 : vector<1x8x8xbf16> to vector<8x8xbf16>
    %c0_26 = arith.constant 0 : index
    %c0_27 = arith.constant 0 : index
    %c8_28 = arith.constant 8 : index
    %35 = vector.load %arg4[%c0_26, %c0_27, %c8_28] : memref<1x8x32xbf16, #tpu.memory_space<vmem>>, vector<1x8x8xbf16>
    %36 = vector.shape_cast %35 : vector<1x8x8xbf16> to vector<8x8xbf16>
    %cst_29 = arith.constant dense<0.000000e+00> : vector<8x8xf32>
    %37 = tpu.matmul %34, %36, %cst_29 {dimension_numbers = #tpu.dot_dimension_numbers<[1], [1], [0], [0], [0, 0, 1, 0], [], []>} : vector<8x8xbf16>, vector<8x8xbf16>, vector<8x8xf32> -> vector<8x8xf32>
    %c0_30 = arith.constant 0 : index
    %c1 = arith.constant 1 : index
    %38 = vector.load %arg7[%c0_30, %c1] : memref<8x4xf32, #tpu.memory_space<vmem>>, vector<8x1xf32>
    %c0_31 = arith.constant 0 : index
    %c1_32 = arith.constant 1 : index
    %39 = vector.load %arg8[%c0_31, %c1_32] : memref<8x4xf32, #tpu.memory_space<vmem>>, vector<8x1xf32>
    %cst_33 = arith.constant dense<0xFF800000> : vector<8xf32>
    %40 = vector.multi_reduction <maximumf>, %37, %cst_33 [1] : vector<8x8xf32> to vector<8xf32>
    %41 = vector.shape_cast %40 : vector<8xf32> to vector<8x1xf32>
    %42 = arith.maximumf %38, %41 : vector<8x1xf32>
    %43 = arith.subf %38, %42 : vector<8x1xf32>
    %44 = math.exp %43 : vector<8x1xf32>
    %45 = vector.broadcast %42 : vector<8x1xf32> to vector<8x8xf32>
    %46 = arith.subf %37, %45 : vector<8x8xf32>
    %47 = math.exp %46 : vector<8x8xf32>
    %48 = arith.mulf %44, %39 : vector<8x1xf32>
    %cst_34 = arith.constant dense<0.000000e+00> : vector<8xf32>
    %49 = vector.multi_reduction <add>, %47, %cst_34 [1] : vector<8x8xf32> to vector<8xf32>
    %50 = vector.shape_cast %49 : vector<8xf32> to vector<8x1xf32>
    %51 = arith.addf %48, %50 : vector<8x1xf32>
    %c0_35 = arith.constant 0 : index
    %c1_36 = arith.constant 1 : index
    %52 = vector.load %arg8[%c0_35, %c1_36] : memref<8x4xf32, #tpu.memory_space<vmem>>, vector<8x1xf32>
    tpu.vector_store %arg8[%c0_35, %c1_36], %51 {strides = array<i32>} : memref<8x4xf32, #tpu.memory_space<vmem>>, vector<8x1xf32>,
    %c0_37 = arith.constant 0 : index
    %c1_38 = arith.constant 1 : index
    %53 = vector.load %arg7[%c0_37, %c1_38] : memref<8x4xf32, #tpu.memory_space<vmem>>, vector<8x1xf32>
    tpu.vector_store %arg7[%c0_37, %c1_38], %42 {strides = array<i32>} : memref<8x4xf32, #tpu.memory_space<vmem>>, vector<8x1xf32>,
    %54 = arith.truncf %47 : vector<8x8xf32> to vector<8x8xbf16>
    %c0_39 = arith.constant 0 : index
    %c0_40 = arith.constant 0 : index
    %c8_41 = arith.constant 8 : index
    %55 = vector.load %arg5[%c0_39, %c0_40, %c8_41] : memref<1x8x32xbf16, #tpu.memory_space<vmem>>, vector<1x8x8xbf16>
    %56 = vector.shape_cast %55 : vector<1x8x8xbf16> to vector<8x8xbf16>
    %cst_42 = arith.constant dense<0.000000e+00> : vector<8x8xf32>
    %57 = tpu.matmul %54, %56, %cst_42 {dimension_numbers = #tpu.dot_dimension_numbers<[1], [0], [0], [1], [0, 0, 1, 1], [], []>} : vector<8x8xbf16>, vector<8x8xbf16>, vector<8x8xf32> -> vector<8x8xf32>
    %c0_43 = arith.constant 0 : index
    %c8_44 = arith.constant 8 : index
    %58 = vector.load %arg9[%c0_43, %c8_44] : memref<8x32xf32, #tpu.memory_space<vmem>>, vector<8x8xf32>
    %59 = vector.broadcast %44 : vector<8x1xf32> to vector<8x8xf32>
    %60 = arith.mulf %59, %58 : vector<8x8xf32>
    %61 = arith.addf %60, %57 : vector<8x8xf32>
    %c0_45 = arith.constant 0 : index
    %c8_46 = arith.constant 8 : index
    %62 = vector.load %arg9[%c0_45, %c8_46] : memref<8x32xf32, #tpu.memory_space<vmem>>, vector<8x8xf32>
    tpu.vector_store %arg9[%c0_45, %c8_46], %61 {strides = array<i32>} : memref<8x32xf32, #tpu.memory_space<vmem>>, vector<8x8xf32>,
    %c0_47 = arith.constant 0 : index
    %c0_48 = arith.constant 0 : index
    %c16 = arith.constant 16 : index
    %63 = vector.load %arg3[%c0_47, %c0_48, %c16] : memref<1x8x32xbf16, #tpu.memory_space<vmem>>, vector<1x8x8xbf16>
    %64 = vector.shape_cast %63 : vector<1x8x8xbf16> to vector<8x8xbf16>
    %c0_49 = arith.constant 0 : index
    %c0_50 = arith.constant 0 : index
    %c16_51 = arith.constant 16 : index
    %65 = vector.load %arg4[%c0_49, %c0_50, %c16_51] : memref<1x8x32xbf16, #tpu.memory_space<vmem>>, vector<1x8x8xbf16>
    %66 = vector.shape_cast %65 : vector<1x8x8xbf16> to vector<8x8xbf16>
    %cst_52 = arith.constant dense<0.000000e+00> : vector<8x8xf32>
    %67 = tpu.matmul %64, %66, %cst_52 {dimension_numbers = #tpu.dot_dimension_numbers<[1], [1], [0], [0], [0, 0, 1, 0], [], []>} : vector<8x8xbf16>, vector<8x8xbf16>, vector<8x8xf32> -> vector<8x8xf32>
    %c0_53 = arith.constant 0 : index
    %c2 = arith.constant 2 : index
    %68 = vector.load %arg7[%c0_53, %c2] : memref<8x4xf32, #tpu.memory_space<vmem>>, vector<8x1xf32>
    %c0_54 = arith.constant 0 : index
    %c2_55 = arith.constant 2 : index
    %69 = vector.load %arg8[%c0_54, %c2_55] : memref<8x4xf32, #tpu.memory_space<vmem>>, vector<8x1xf32>
    %cst_56 = arith.constant dense<0xFF800000> : vector<8xf32>
    %70 = vector.multi_reduction <maximumf>, %67, %cst_56 [1] : vector<8x8xf32> to vector<8xf32>
    %71 = vector.shape_cast %70 : vector<8xf32> to vector<8x1xf32>
    %72 = arith.maximumf %68, %71 : vector<8x1xf32>
    %73 = arith.subf %68, %72 : vector<8x1xf32>
    %74 = math.exp %73 : vector<8x1xf32>
    %75 = vector.broadcast %72 : vector<8x1xf32> to vector<8x8xf32>
    %76 = arith.subf %67, %75 : vector<8x8xf32>
    %77 = math.exp %76 : vector<8x8xf32>
    %78 = arith.mulf %74, %69 : vector<8x1xf32>
    %cst_57 = arith.constant dense<0.000000e+00> : vector<8xf32>
    %79 = vector.multi_reduction <add>, %77, %cst_57 [1] : vector<8x8xf32> to vector<8xf32>
    %80 = vector.shape_cast %79 : vector<8xf32> to vector<8x1xf32>
    %81 = arith.addf %78, %80 : vector<8x1xf32>
    %c0_58 = arith.constant 0 : index
    %c2_59 = arith.constant 2 : index
    %82 = vector.load %arg8[%c0_58, %c2_59] : memref<8x4xf32, #tpu.memory_space<vmem>>, vector<8x1xf32>
    tpu.vector_store %arg8[%c0_58, %c2_59], %81 {strides = array<i32>} : memref<8x4xf32, #tpu.memory_space<vmem>>, vector<8x1xf32>,
    %c0_60 = arith.constant 0 : index
    %c2_61 = arith.constant 2 : index
    %83 = vector.load %arg7[%c0_60, %c2_61] : memref<8x4xf32, #tpu.memory_space<vmem>>, vector<8x1xf32>
    tpu.vector_store %arg7[%c0_60, %c2_61], %72 {strides = array<i32>} : memref<8x4xf32, #tpu.memory_space<vmem>>, vector<8x1xf32>,
    %84 = arith.truncf %77 : vector<8x8xf32> to vector<8x8xbf16>
    %c0_62 = arith.constant 0 : index
    %c0_63 = arith.constant 0 : index
    %c16_64 = arith.constant 16 : index
    %85 = vector.load %arg5[%c0_62, %c0_63, %c16_64] : memref<1x8x32xbf16, #tpu.memory_space<vmem>>, vector<1x8x8xbf16>
    %86 = vector.shape_cast %85 : vector<1x8x8xbf16> to vector<8x8xbf16>
    %cst_65 = arith.constant dense<0.000000e+00> : vector<8x8xf32>
    %87 = tpu.matmul %84, %86, %cst_65 {dimension_numbers = #tpu.dot_dimension_numbers<[1], [0], [0], [1], [0, 0, 1, 1], [], []>} : vector<8x8xbf16>, vector<8x8xbf16>, vector<8x8xf32> -> vector<8x8xf32>
    %c0_66 = arith.constant 0 : index
    %c16_67 = arith.constant 16 : index
    %88 = vector.load %arg9[%c0_66, %c16_67] : memref<8x32xf32, #tpu.memory_space<vmem>>, vector<8x8xf32>
    %89 = vector.broadcast %74 : vector<8x1xf32> to vector<8x8xf32>
    %90 = arith.mulf %89, %88 : vector<8x8xf32>
    %91 = arith.addf %90, %87 : vector<8x8xf32>
    %c0_68 = arith.constant 0 : index
    %c16_69 = arith.constant 16 : index
    %92 = vector.load %arg9[%c0_68, %c16_69] : memref<8x32xf32, #tpu.memory_space<vmem>>, vector<8x8xf32>
    tpu.vector_store %arg9[%c0_68, %c16_69], %91 {strides = array<i32>} : memref<8x32xf32, #tpu.memory_space<vmem>>, vector<8x8xf32>,
    %c0_70 = arith.constant 0 : index
    %c0_71 = arith.constant 0 : index
    %c24 = arith.constant 24 : index
    %93 = vector.load %arg3[%c0_70, %c0_71, %c24] : memref<1x8x32xbf16, #tpu.memory_space<vmem>>, vector<1x8x8xbf16>
    %94 = vector.shape_cast %93 : vector<1x8x8xbf16> to vector<8x8xbf16>
    %c0_72 = arith.constant 0 : index
    %c0_73 = arith.constant 0 : index
    %c24_74 = arith.constant 24 : index
    %95 = vector.load %arg4[%c0_72, %c0_73, %c24_74] : memref<1x8x32xbf16, #tpu.memory_space<vmem>>, vector<1x8x8xbf16>
    %96 = vector.shape_cast %95 : vector<1x8x8xbf16> to vector<8x8xbf16>
    %cst_75 = arith.constant dense<0.000000e+00> : vector<8x8xf32>
    %97 = tpu.matmul %94, %96, %cst_75 {dimension_numbers = #tpu.dot_dimension_numbers<[1], [1], [0], [0], [0, 0, 1, 0], [], []>} : vector<8x8xbf16>, vector<8x8xbf16>, vector<8x8xf32> -> vector<8x8xf32>
    %c0_76 = arith.constant 0 : index
    %c3 = arith.constant 3 : index
    %98 = vector.load %arg7[%c0_76, %c3] : memref<8x4xf32, #tpu.memory_space<vmem>>, vector<8x1xf32>
    %c0_77 = arith.constant 0 : index
    %c3_78 = arith.constant 3 : index
    %99 = vector.load %arg8[%c0_77, %c3_78] : memref<8x4xf32, #tpu.memory_space<vmem>>, vector<8x1xf32>
    %cst_79 = arith.constant dense<0xFF800000> : vector<8xf32>
    %100 = vector.multi_reduction <maximumf>, %97, %cst_79 [1] : vector<8x8xf32> to vector<8xf32>
    %101 = vector.shape_cast %100 : vector<8xf32> to vector<8x1xf32>
    %102 = arith.maximumf %98, %101 : vector<8x1xf32>
    %103 = arith.subf %98, %102 : vector<8x1xf32>
    %104 = math.exp %103 : vector<8x1xf32>
    %105 = vector.broadcast %102 : vector<8x1xf32> to vector<8x8xf32>
    %106 = arith.subf %97, %105 : vector<8x8xf32>
    %107 = math.exp %106 : vector<8x8xf32>
    %108 = arith.mulf %104, %99 : vector<8x1xf32>
    %cst_80 = arith.constant dense<0.000000e+00> : vector<8xf32>
    %109 = vector.multi_reduction <add>, %107, %cst_80 [1] : vector<8x8xf32> to vector<8xf32>
    %110 = vector.shape_cast %109 : vector<8xf32> to vector<8x1xf32>
    %111 = arith.addf %108, %110 : vector<8x1xf32>
    %c0_81 = arith.constant 0 : index
    %c3_82 = arith.constant 3 : index
    %112 = vector.load %arg8[%c0_81, %c3_82] : memref<8x4xf32, #tpu.memory_space<vmem>>, vector<8x1xf32>
    tpu.vector_store %arg8[%c0_81, %c3_82], %111 {strides = array<i32>} : memref<8x4xf32, #tpu.memory_space<vmem>>, vector<8x1xf32>,
    %c0_83 = arith.constant 0 : index
    %c3_84 = arith.constant 3 : index
    %113 = vector.load %arg7[%c0_83, %c3_84] : memref<8x4xf32, #tpu.memory_space<vmem>>, vector<8x1xf32>
    tpu.vector_store %arg7[%c0_83, %c3_84], %102 {strides = array<i32>} : memref<8x4xf32, #tpu.memory_space<vmem>>, vector<8x1xf32>,
    %114 = arith.truncf %107 : vector<8x8xf32> to vector<8x8xbf16>
    %c0_85 = arith.constant 0 : index
    %c0_86 = arith.constant 0 : index
    %c24_87 = arith.constant 24 : index
    %115 = vector.load %arg5[%c0_85, %c0_86, %c24_87] : memref<1x8x32xbf16, #tpu.memory_space<vmem>>, vector<1x8x8xbf16>
    %116 = vector.shape_cast %115 : vector<1x8x8xbf16> to vector<8x8xbf16>
    %cst_88 = arith.constant dense<0.000000e+00> : vector<8x8xf32>
    %117 = tpu.matmul %114, %116, %cst_88 {dimension_numbers = #tpu.dot_dimension_numbers<[1], [0], [0], [1], [0, 0, 1, 1], [], []>} : vector<8x8xbf16>, vector<8x8xbf16>, vector<8x8xf32> -> vector<8x8xf32>
    %c0_89 = arith.constant 0 : index
    %c24_90 = arith.constant 24 : index
    %118 = vector.load %arg9[%c0_89, %c24_90] : memref<8x32xf32, #tpu.memory_space<vmem>>, vector<8x8xf32>
    %119 = vector.broadcast %104 : vector<8x1xf32> to vector<8x8xf32>
    %120 = arith.mulf %119, %118 : vector<8x8xf32>
    %121 = arith.addf %120, %117 : vector<8x8xf32>
    %c0_91 = arith.constant 0 : index
    %c24_92 = arith.constant 24 : index
    %122 = vector.load %arg9[%c0_91, %c24_92] : memref<8x32xf32, #tpu.memory_space<vmem>>, vector<8x8xf32>
    tpu.vector_store %arg9[%c0_91, %c24_92], %121 {strides = array<i32>} : memref<8x32xf32, #tpu.memory_space<vmem>>, vector<8x8xf32>,
    %c0_i32_93 = arith.constant 0 : i32
    %123 = arith.cmpi eq, %arg2, %c0_i32_93 : i32
    %124 = arith.extui %123 : i1 to i32
    %c0_i32_94 = arith.constant 0 : i32
    %125 = arith.cmpi ne, %124, %c0_i32_94 : i32
    scf.if %125 {
      %c0_95 = arith.constant 0 : index
      %c0_96 = arith.constant 0 : index
      %126 = vector.load %arg8[%c0_95, %c0_96] : memref<8x4xf32, #tpu.memory_space<vmem>>, vector<8x1xf32>
      %127 = tpu.reciprocal %126 : vector<8x1xf32> -> vector<8x1xf32>
      %c0_97 = arith.constant 0 : index
      %c0_98 = arith.constant 0 : index
      %128 = vector.load %arg9[%c0_97, %c0_98] : memref<8x32xf32, #tpu.memory_space<vmem>>, vector<8x8xf32>
      %129 = vector.broadcast %127 : vector<8x1xf32> to vector<8x8xf32>
      %130 = arith.mulf %128, %129 : vector<8x8xf32>
      %131 = arith.truncf %130 : vector<8x8xf32> to vector<8x8xbf16>
      %c0_99 = arith.constant 0 : index
      %c0_100 = arith.constant 0 : index
      %c0_101 = arith.constant 0 : index
      %132 = vector.load %arg6[%c0_99, %c0_100, %c0_101] : memref<1x8x32xbf16, #tpu.memory_space<vmem>>, vector<1x8x8xbf16>
      %133 = vector.shape_cast %132 : vector<1x8x8xbf16> to vector<8x8xbf16>
      %134 = vector.shape_cast %131 : vector<8x8xbf16> to vector<1x8x8xbf16>
      tpu.vector_store %arg6[%c0_99, %c0_100, %c0_101], %134 {strides = array<i32>} : memref<1x8x32xbf16, #tpu.memory_space<vmem>>, vector<1x8x8xbf16>,
      %c0_102 = arith.constant 0 : index
      %c1_103 = arith.constant 1 : index
      %135 = vector.load %arg8[%c0_102, %c1_103] : memref<8x4xf32, #tpu.memory_space<vmem>>, vector<8x1xf32>
      %136 = tpu.reciprocal %135 : vector<8x1xf32> -> vector<8x1xf32>
      %c0_104 = arith.constant 0 : index
      %c8_105 = arith.constant 8 : index
      %137 = vector.load %arg9[%c0_104, %c8_105] : memref<8x32xf32, #tpu.memory_space<vmem>>, vector<8x8xf32>
      %138 = vector.broadcast %136 : vector<8x1xf32> to vector<8x8xf32>
      %139 = arith.mulf %137, %138 : vector<8x8xf32>
      %140 = arith.truncf %139 : vector<8x8xf32> to vector<8x8xbf16>
      %c0_106 = arith.constant 0 : index
      %c0_107 = arith.constant 0 : index
      %c8_108 = arith.constant 8 : index
      %141 = vector.load %arg6[%c0_106, %c0_107, %c8_108] : memref<1x8x32xbf16, #tpu.memory_space<vmem>>, vector<1x8x8xbf16>
      %142 = vector.shape_cast %141 : vector<1x8x8xbf16> to vector<8x8xbf16>
      %143 = vector.shape_cast %140 : vector<8x8xbf16> to vector<1x8x8xbf16>
      tpu.vector_store %arg6[%c0_106, %c0_107, %c8_108], %143 {strides = array<i32>} : memref<1x8x32xbf16, #tpu.memory_space<vmem>>, vector<1x8x8xbf16>,
      %c0_109 = arith.constant 0 : index
      %c2_110 = arith.constant 2 : index
      %144 = vector.load %arg8[%c0_109, %c2_110] : memref<8x4xf32, #tpu.memory_space<vmem>>, vector<8x1xf32>
      %145 = tpu.reciprocal %144 : vector<8x1xf32> -> vector<8x1xf32>
      %c0_111 = arith.constant 0 : index
      %c16_112 = arith.constant 16 : index
      %146 = vector.load %arg9[%c0_111, %c16_112] : memref<8x32xf32, #tpu.memory_space<vmem>>, vector<8x8xf32>
      %147 = vector.broadcast %145 : vector<8x1xf32> to vector<8x8xf32>
      %148 = arith.mulf %146, %147 : vector<8x8xf32>
      %149 = arith.truncf %148 : vector<8x8xf32> to vector<8x8xbf16>
      %c0_113 = arith.constant 0 : index
      %c0_114 = arith.constant 0 : index
      %c16_115 = arith.constant 16 : index
      %150 = vector.load %arg6[%c0_113, %c0_114, %c16_115] : memref<1x8x32xbf16, #tpu.memory_space<vmem>>, vector<1x8x8xbf16>
      %151 = vector.shape_cast %150 : vector<1x8x8xbf16> to vector<8x8xbf16>
      %152 = vector.shape_cast %149 : vector<8x8xbf16> to vector<1x8x8xbf16>
      tpu.vector_store %arg6[%c0_113, %c0_114, %c16_115], %152 {strides = array<i32>} : memref<1x8x32xbf16, #tpu.memory_space<vmem>>, vector<1x8x8xbf16>,
      %c0_116 = arith.constant 0 : index
      %c3_117 = arith.constant 3 : index
      %153 = vector.load %arg8[%c0_116, %c3_117] : memref<8x4xf32, #tpu.memory_space<vmem>>, vector<8x1xf32>
      %154 = tpu.reciprocal %153 : vector<8x1xf32> -> vector<8x1xf32>
      %c0_118 = arith.constant 0 : index
      %c24_119 = arith.constant 24 : index
      %155 = vector.load %arg9[%c0_118, %c24_119] : memref<8x32xf32, #tpu.memory_space<vmem>>, vector<8x8xf32>
      %156 = vector.broadcast %154 : vector<8x1xf32> to vector<8x8xf32>
      %157 = arith.mulf %155, %156 : vector<8x8xf32>
      %158 = arith.truncf %157 : vector<8x8xf32> to vector<8x8xbf16>
      %c0_120 = arith.constant 0 : index
      %c0_121 = arith.constant 0 : index
      %c24_122 = arith.constant 24 : index
      %159 = vector.load %arg6[%c0_120, %c0_121, %c24_122] : memref<1x8x32xbf16, #tpu.memory_space<vmem>>, vector<1x8x8xbf16>
      %160 = vector.shape_cast %159 : vector<1x8x8xbf16> to vector<8x8xbf16>
      %161 = vector.shape_cast %158 : vector<8x8xbf16> to vector<1x8x8xbf16>
      tpu.vector_store %arg6[%c0_120, %c0_121, %c24_122], %161 {strides = array<i32>} : memref<1x8x32xbf16, #tpu.memory_space<vmem>>, vector<1x8x8xbf16>,
    } else {
    }
    return
  }
  func.func @transform_0(%arg0: i32, %arg1: i32, %arg2: i32) -> (i32, i32, i32) {
    %c0_i32 = arith.constant 0 : i32
    %c0_i32_0 = arith.constant 0 : i32
    return %arg0, %arg1, %c0_i32 : i32, i32, i32
  }
  func.func @transform_1(%arg0: i32, %arg1: i32, %arg2: i32) -> (i32, i32, i32) {
    %c0_i32 = arith.constant 0 : i32
    %c0_i32_0 = arith.constant 0 : i32
    return %arg0, %arg2, %c0_i32 : i32, i32, i32
  }
  func.func @transform_2(%arg0: i32, %arg1: i32, %arg2: i32) -> (i32, i32, i32) {
    %c0_i32 = arith.constant 0 : i32
    %c0_i32_0 = arith.constant 0 : i32
    return %arg0, %arg2, %c0_i32 : i32, i32, i32
  }
  func.func @transform_3(%arg0: i32, %arg1: i32, %arg2: i32) -> (i32, i32, i32) {
    %c0_i32 = arith.constant 0 : i32
    %c0_i32_0 = arith.constant 0 : i32
    return %arg0, %arg1, %c0_i32 : i32, i32, i32
  }
}

module attributes {stable_mosaic.version = 11 : i64} {
  func.func @matmul_residual_kernel(%arg0: i32, %arg1: i32, %arg2: i32, %arg3: memref<16x32xbf16, #tpu.memory_space<vmem>>, %arg4: memref<32x32xbf16, #tpu.memory_space<vmem>>, %arg5: memref<16x32xf32, #tpu.memory_space<vmem>>, %arg6: memref<16x32xbf16, #tpu.memory_space<vmem>>, %arg7: memref<16x32xf32, #tpu.memory_space<vmem>>) attributes {dimension_semantics = [#tpu.dimension_semantics<parallel>, #tpu.dimension_semantics<parallel>, #tpu.dimension_semantics<arbitrary>], iteration_bounds = array<i64: 1, 1, 1>, scalar_prefetch = 0 : i64, scratch_operands = 1 : i64, tpu.core_type = #tpu.core_type<tc>, window_params = [{transform_indices = @transform_0, window_bounds = array<i64: 16, 32>}, {transform_indices = @transform_1, window_bounds = array<i64: 32, 32>}, {transform_indices = @transform_2, window_bounds = array<i64: 16, 32>}, {transform_indices = @transform_3, window_bounds = array<i64: 16, 32>}]} {
    %c0_i32 = arith.constant 0 : i32
    %0 = arith.cmpi eq, %arg2, %c0_i32 : i32
    %1 = arith.extui %0 : i1 to i32
    %c0_i32_0 = arith.constant 0 : i32
    %2 = arith.cmpi ne, %1, %c0_i32_0 : i32
    scf.if %2 {
      %cst_10 = arith.constant 0.000000e+00 : f32
      %12 = vector.broadcast %cst_10 : f32 to vector<16x32xf32>
      %c0_11 = arith.constant 0 : index
      %c0_12 = arith.constant 0 : index
      %13 = vector.load %arg7[%c0_11, %c0_12] : memref<16x32xf32, #tpu.memory_space<vmem>>, vector<16x32xf32>
      tpu.vector_store %arg7[%c0_11, %c0_12], %12 {strides = array<i32>} : memref<16x32xf32, #tpu.memory_space<vmem>>, vector<16x32xf32>,
    } else {
    }
    %c0 = arith.constant 0 : index
    %c0_1 = arith.constant 0 : index
    %3 = vector.load %arg7[%c0, %c0_1] : memref<16x32xf32, #tpu.memory_space<vmem>>, vector<16x32xf32>
    %c0_2 = arith.constant 0 : index
    %c0_3 = arith.constant 0 : index
    %4 = vector.load %arg3[%c0_2, %c0_3] : memref<16x32xbf16, #tpu.memory_space<vmem>>, vector<16x32xbf16>
    %c0_4 = arith.constant 0 : index
    %c0_5 = arith.constant 0 : index
    %5 = vector.load %arg4[%c0_4, %c0_5] : memref<32x32xbf16, #tpu.memory_space<vmem>>, vector<32x32xbf16>
    %cst = arith.constant dense<0.000000e+00> : vector<16x32xf32>
    %6 = tpu.matmul %4, %5, %cst {dimension_numbers = #tpu.dot_dimension_numbers<[1], [0], [0], [1], [0, 0, 1, 1], [], []>} : vector<16x32xbf16>, vector<32x32xbf16>, vector<16x32xf32> -> vector<16x32xf32>
    %7 = arith.addf %3, %6 : vector<16x32xf32>
    %c0_6 = arith.constant 0 : index
    %c0_7 = arith.constant 0 : index
    %8 = vector.load %arg7[%c0_6, %c0_7] : memref<16x32xf32, #tpu.memory_space<vmem>>, vector<16x32xf32>
    tpu.vector_store %arg7[%c0_6, %c0_7], %7 {strides = array<i32>} : memref<16x32xf32, #tpu.memory_space<vmem>>, vector<16x32xf32>,
    %c0_i32_8 = arith.constant 0 : i32
    %9 = arith.cmpi eq, %arg2, %c0_i32_8 : i32
    %10 = arith.extui %9 : i1 to i32
    %c0_i32_9 = arith.constant 0 : i32
    %11 = arith.cmpi ne, %10, %c0_i32_9 : i32
    scf.if %11 {
      %c0_10 = arith.constant 0 : index
      %c0_11 = arith.constant 0 : index
      %12 = vector.load %arg7[%c0_10, %c0_11] : memref<16x32xf32, #tpu.memory_space<vmem>>, vector<16x32xf32>
      %c0_12 = arith.constant 0 : index
      %c0_13 = arith.constant 0 : index
      %13 = vector.load %arg5[%c0_12, %c0_13] : memref<16x32xf32, #tpu.memory_space<vmem>>, vector<16x32xf32>
      %14 = arith.addf %12, %13 : vector<16x32xf32>
      %15 = arith.truncf %14 : vector<16x32xf32> to vector<16x32xbf16>
      %c0_14 = arith.constant 0 : index
      %c0_15 = arith.constant 0 : index
      %16 = vector.load %arg6[%c0_14, %c0_15] : memref<16x32xbf16, #tpu.memory_space<vmem>>, vector<16x32xbf16>
      tpu.vector_store %arg6[%c0_14, %c0_15], %15 {strides = array<i32>} : memref<16x32xbf16, #tpu.memory_space<vmem>>, vector<16x32xbf16>,
    } else {
    }
    return
  }
  func.func @transform_0(%arg0: i32, %arg1: i32, %arg2: i32) -> (i32, i32) {
    %c0_i32 = arith.constant 0 : i32
    return %arg0, %arg2 : i32, i32
  }
  func.func @transform_1(%arg0: i32, %arg1: i32, %arg2: i32) -> (i32, i32) {
    %c0_i32 = arith.constant 0 : i32
    return %arg2, %arg1 : i32, i32
  }
  func.func @transform_2(%arg0: i32, %arg1: i32, %arg2: i32) -> (i32, i32) {
    %c0_i32 = arith.constant 0 : i32
    return %arg0, %arg1 : i32, i32
  }
  func.func @transform_3(%arg0: i32, %arg1: i32, %arg2: i32) -> (i32, i32) {
    %c0_i32 = arith.constant 0 : i32
    return %arg0, %arg1 : i32, i32
  }
}

module attributes {stable_mosaic.version = 11 : i64} {
  func.func @rmsnorm_ffn_up_kernel(%arg0: i32, %arg1: i32, %arg2: memref<16x32xbf16, #tpu.memory_space<vmem>>, %arg3: memref<1x32xf32, #tpu.memory_space<vmem>>, %arg4: memref<32x256xbf16, #tpu.memory_space<vmem>>, %arg5: memref<32x256xbf16, #tpu.memory_space<vmem>>, %arg6: memref<16x256xbf16, #tpu.memory_space<vmem>>, %arg7: memref<16x32xbf16, #tpu.memory_space<vmem>>) attributes {dimension_semantics = [#tpu.dimension_semantics<parallel>, #tpu.dimension_semantics<arbitrary>], iteration_bounds = array<i64: 1, 1>, scalar_prefetch = 0 : i64, scratch_operands = 1 : i64, tpu.core_type = #tpu.core_type<tc>, window_params = [{transform_indices = @transform_0, window_bounds = array<i64: 16, 32>}, {pipeline_mode = #tpu.pipeline_mode<synchronous>, transform_indices = @transform_1, window_bounds = array<i64: 1, 32>}, {transform_indices = @transform_2, window_bounds = array<i64: 32, 256>}, {transform_indices = @transform_3, window_bounds = array<i64: 32, 256>}, {transform_indices = @transform_4, window_bounds = array<i64: 16, 256>}]} {
    %c0_i32 = arith.constant 0 : i32
    %0 = arith.cmpi eq, %arg1, %c0_i32 : i32
    %1 = arith.extui %0 : i1 to i32
    %c0_i32_0 = arith.constant 0 : i32
    %2 = arith.cmpi ne, %1, %c0_i32_0 : i32
    scf.if %2 {
      %c0_11 = arith.constant 0 : index
      %c0_12 = arith.constant 0 : index
      %18 = vector.load %arg2[%c0_11, %c0_12] : memref<16x32xbf16, #tpu.memory_space<vmem>>, vector<16x32xbf16>
      %19 = arith.extf %18 : vector<16x32xbf16> to vector<16x32xf32>
      %20 = arith.mulf %19, %19 : vector<16x32xf32>
      %cst_13 = arith.constant dense<0.000000e+00> : vector<16xf32>
      %21 = vector.multi_reduction <add>, %20, %cst_13 [1] : vector<16x32xf32> to vector<16xf32>
      %22 = vector.shape_cast %21 : vector<16xf32> to vector<16x1xf32>
      %cst_14 = arith.constant 3.200000e+01 : f32
      %23 = vector.broadcast %cst_14 : f32 to vector<16x1xf32>
      %24 = arith.divf %22, %23 : vector<16x1xf32>
      %cst_15 = arith.constant 9.99999974E-6 : f32
      %25 = vector.broadcast %cst_15 : f32 to vector<16x1xf32>
      %26 = arith.addf %24, %25 : vector<16x1xf32>
      %27 = math.rsqrt %26 : vector<16x1xf32>
      %28 = vector.broadcast %27 : vector<16x1xf32> to vector<16x32xf32>
      %29 = arith.mulf %19, %28 : vector<16x32xf32>
      %c0_16 = arith.constant 0 : index
      %c0_17 = arith.constant 0 : index
      %30 = vector.load %arg3[%c0_16, %c0_17] : memref<1x32xf32, #tpu.memory_space<vmem>>, vector<1x32xf32>
      %31 = vector.broadcast %30 : vector<1x32xf32> to vector<16x32xf32>
      %32 = arith.mulf %29, %31 : vector<16x32xf32>
      %33 = arith.truncf %32 : vector<16x32xf32> to vector<16x32xbf16>
      %c0_18 = arith.constant 0 : index
      %c0_19 = arith.constant 0 : index
      %34 = vector.load %arg7[%c0_18, %c0_19] : memref<16x32xbf16, #tpu.memory_space<vmem>>, vector<16x32xbf16>
      tpu.vector_store %arg7[%c0_18, %c0_19], %33 {strides = array<i32>} : memref<16x32xbf16, #tpu.memory_space<vmem>>, vector<16x32xbf16>,
    } else {
    }
    %c0 = arith.constant 0 : index
    %c0_1 = arith.constant 0 : index
    %3 = vector.load %arg7[%c0, %c0_1] : memref<16x32xbf16, #tpu.memory_space<vmem>>, vector<16x32xbf16>
    %c0_2 = arith.constant 0 : index
    %c0_3 = arith.constant 0 : index
    %4 = vector.load %arg4[%c0_2, %c0_3] : memref<32x256xbf16, #tpu.memory_space<vmem>>, vector<32x256xbf16>
    %cst = arith.constant dense<0.000000e+00> : vector<16x256xf32>
    %5 = tpu.matmul %3, %4, %cst {dimension_numbers = #tpu.dot_dimension_numbers<[1], [0], [0], [1], [0, 0, 1, 1], [], []>} : vector<16x32xbf16>, vector<32x256xbf16>, vector<16x256xf32> -> vector<16x256xf32>
    %c0_4 = arith.constant 0 : index
    %c0_5 = arith.constant 0 : index
    %6 = vector.load %arg5[%c0_4, %c0_5] : memref<32x256xbf16, #tpu.memory_space<vmem>>, vector<32x256xbf16>
    %cst_6 = arith.constant dense<0.000000e+00> : vector<16x256xf32>
    %7 = tpu.matmul %3, %6, %cst_6 {dimension_numbers = #tpu.dot_dimension_numbers<[1], [0], [0], [1], [0, 0, 1, 1], [], []>} : vector<16x32xbf16>, vector<32x256xbf16>, vector<16x256xf32> -> vector<16x256xf32>
    %cst_7 = arith.constant 0.000000e+00 : f32
    %8 = vector.broadcast %cst_7 : f32 to vector<16x256xf32>
    %9 = arith.subf %8, %5 : vector<16x256xf32>
    %10 = math.exp %9 : vector<16x256xf32>
    %cst_8 = arith.constant 1.000000e+00 : f32
    %11 = vector.broadcast %cst_8 : f32 to vector<16x256xf32>
    %12 = arith.addf %11, %10 : vector<16x256xf32>
    %13 = tpu.reciprocal %12 {approx = true} : vector<16x256xf32> -> vector<16x256xf32>
    %14 = arith.mulf %5, %13 : vector<16x256xf32>
    %15 = arith.mulf %14, %7 : vector<16x256xf32>
    %16 = arith.truncf %15 : vector<16x256xf32> to vector<16x256xbf16>
    %c0_9 = arith.constant 0 : index
    %c0_10 = arith.constant 0 : index
    %17 = vector.load %arg6[%c0_9, %c0_10] : memref<16x256xbf16, #tpu.memory_space<vmem>>, vector<16x256xbf16>
    tpu.vector_store %arg6[%c0_9, %c0_10], %16 {strides = array<i32>} : memref<16x256xbf16, #tpu.memory_space<vmem>>, vector<16x256xbf16>,
    return
  }
  func.func @transform_0(%arg0: i32, %arg1: i32) -> (i32, i32) {
    %c0_i32 = arith.constant 0 : i32
    %c0_i32_0 = arith.constant 0 : i32
    return %arg0, %c0_i32 : i32, i32
  }
  func.func @transform_1(%arg0: i32, %arg1: i32) -> (i32, i32) {
    %c0_i32 = arith.constant 0 : i32
    %c0_i32_0 = arith.constant 0 : i32
    %c0_i32_1 = arith.constant 0 : i32
    return %c0_i32, %c0_i32_0 : i32, i32
  }
  func.func @transform_2(%arg0: i32, %arg1: i32) -> (i32, i32) {
    %c0_i32 = arith.constant 0 : i32
    %c0_i32_0 = arith.constant 0 : i32
    return %c0_i32, %arg1 : i32, i32
  }
  func.func @transform_3(%arg0: i32, %arg1: i32) -> (i32, i32) {
    %c0_i32 = arith.constant 0 : i32
    %c0_i32_0 = arith.constant 0 : i32
    return %c0_i32, %arg1 : i32, i32
  }
  func.func @transform_4(%arg0: i32, %arg1: i32) -> (i32, i32) {
    %c0_i32 = arith.constant 0 : i32
    return %arg0, %arg1 : i32, i32
  }
}

module attributes {stable_mosaic.version = 11 : i64} {
  func.func @matmul_residual_kernel(%arg0: i32, %arg1: i32, %arg2: i32, %arg3: memref<16x256xbf16, #tpu.memory_space<vmem>>, %arg4: memref<256x32xbf16, #tpu.memory_space<vmem>>, %arg5: memref<16x32xbf16, #tpu.memory_space<vmem>>, %arg6: memref<16x32xf32, #tpu.memory_space<vmem>>, %arg7: memref<16x32xf32, #tpu.memory_space<vmem>>) attributes {dimension_semantics = [#tpu.dimension_semantics<parallel>, #tpu.dimension_semantics<parallel>, #tpu.dimension_semantics<arbitrary>], iteration_bounds = array<i64: 1, 1, 1>, scalar_prefetch = 0 : i64, scratch_operands = 1 : i64, tpu.core_type = #tpu.core_type<tc>, window_params = [{transform_indices = @transform_0, window_bounds = array<i64: 16, 256>}, {transform_indices = @transform_1, window_bounds = array<i64: 256, 32>}, {transform_indices = @transform_2, window_bounds = array<i64: 16, 32>}, {transform_indices = @transform_3, window_bounds = array<i64: 16, 32>}]} {
    %c0_i32 = arith.constant 0 : i32
    %0 = arith.cmpi eq, %arg2, %c0_i32 : i32
    %1 = arith.extui %0 : i1 to i32
    %c0_i32_0 = arith.constant 0 : i32
    %2 = arith.cmpi ne, %1, %c0_i32_0 : i32
    scf.if %2 {
      %cst_10 = arith.constant 0.000000e+00 : f32
      %12 = vector.broadcast %cst_10 : f32 to vector<16x32xf32>
      %c0_11 = arith.constant 0 : index
      %c0_12 = arith.constant 0 : index
      %13 = vector.load %arg7[%c0_11, %c0_12] : memref<16x32xf32, #tpu.memory_space<vmem>>, vector<16x32xf32>
      tpu.vector_store %arg7[%c0_11, %c0_12], %12 {strides = array<i32>} : memref<16x32xf32, #tpu.memory_space<vmem>>, vector<16x32xf32>,
    } else {
    }
    %c0 = arith.constant 0 : index
    %c0_1 = arith.constant 0 : index
    %3 = vector.load %arg7[%c0, %c0_1] : memref<16x32xf32, #tpu.memory_space<vmem>>, vector<16x32xf32>
    %c0_2 = arith.constant 0 : index
    %c0_3 = arith.constant 0 : index
    %4 = vector.load %arg3[%c0_2, %c0_3] : memref<16x256xbf16, #tpu.memory_space<vmem>>, vector<16x256xbf16>
    %c0_4 = arith.constant 0 : index
    %c0_5 = arith.constant 0 : index
    %5 = vector.load %arg4[%c0_4, %c0_5] : memref<256x32xbf16, #tpu.memory_space<vmem>>, vector<256x32xbf16>
    %cst = arith.constant dense<0.000000e+00> : vector<16x32xf32>
    %6 = tpu.matmul %4, %5, %cst {dimension_numbers = #tpu.dot_dimension_numbers<[1], [0], [0], [1], [0, 0, 1, 1], [], []>} : vector<16x256xbf16>, vector<256x32xbf16>, vector<16x32xf32> -> vector<16x32xf32>
    %7 = arith.addf %3, %6 : vector<16x32xf32>
    %c0_6 = arith.constant 0 : index
    %c0_7 = arith.constant 0 : index
    %8 = vector.load %arg7[%c0_6, %c0_7] : memref<16x32xf32, #tpu.memory_space<vmem>>, vector<16x32xf32>
    tpu.vector_store %arg7[%c0_6, %c0_7], %7 {strides = array<i32>} : memref<16x32xf32, #tpu.memory_space<vmem>>, vector<16x32xf32>,
    %c0_i32_8 = arith.constant 0 : i32
    %9 = arith.cmpi eq, %arg2, %c0_i32_8 : i32
    %10 = arith.extui %9 : i1 to i32
    %c0_i32_9 = arith.constant 0 : i32
    %11 = arith.cmpi ne, %10, %c0_i32_9 : i32
    scf.if %11 {
      %c0_10 = arith.constant 0 : index
      %c0_11 = arith.constant 0 : index
      %12 = vector.load %arg7[%c0_10, %c0_11] : memref<16x32xf32, #tpu.memory_space<vmem>>, vector<16x32xf32>
      %c0_12 = arith.constant 0 : index
      %c0_13 = arith.constant 0 : index
      %13 = vector.load %arg5[%c0_12, %c0_13] : memref<16x32xbf16, #tpu.memory_space<vmem>>, vector<16x32xbf16>
      %14 = arith.extf %13 : vector<16x32xbf16> to vector<16x32xf32>
      %15 = arith.addf %12, %14 : vector<16x32xf32>
      %c0_14 = arith.constant 0 : index
      %c0_15 = arith.constant 0 : index
      %16 = vector.load %arg6[%c0_14, %c0_15] : memref<16x32xf32, #tpu.memory_space<vmem>>, vector<16x32xf32>
      tpu.vector_store %arg6[%c0_14, %c0_15], %15 {strides = array<i32>} : memref<16x32xf32, #tpu.memory_space<vmem>>, vector<16x32xf32>,
    } else {
    }
    return
  }
  func.func @transform_0(%arg0: i32, %arg1: i32, %arg2: i32) -> (i32, i32) {
    %c0_i32 = arith.constant 0 : i32
    return %arg0, %arg2 : i32, i32
  }
  func.func @transform_1(%arg0: i32, %arg1: i32, %arg2: i32) -> (i32, i32) {
    %c0_i32 = arith.constant 0 : i32
    return %arg2, %arg1 : i32, i32
  }
  func.func @transform_2(%arg0: i32, %arg1: i32, %arg2: i32) -> (i32, i32) {
    %c0_i32 = arith.constant 0 : i32
    return %arg0, %arg1 : i32, i32
  }
  func.func @transform_3(%arg0: i32, %arg1: i32, %arg2: i32) -> (i32, i32) {
    %c0_i32 = arith.constant 0 : i32
    return %arg0, %arg1 : i32, i32
  }
}

</mosaic_0001>

<llo_original>
// kernel: transformer_block_forward.7
$region0: #{transformer_block_forward.7}
  #allocation0 [shape = 'u32[]', space=smem, size = 0x4, offset = 0x4, fixed_abs, tag = 'smem constant byte address 0x4 - core index']
  #allocation1 [shape = 'u32[144,128]{1,0:T(1,128)}', space=vmem, size = 0x12000, scoped, tag = 'internal scratch']
  #allocation2 [shape = 'f32[16,32]{1,0:T(8,128)}', space=vmem, size = 0x2000, scoped, tag = 'scratch operand']
  %s0 = inlined_call_operand.vmem [shape: bf16[16,32], index: 0, kind: input, shape index: {}]
  %s1 = inlined_call_operand.vmem [shape: bf16[32,32], index: 1, kind: input, shape index: {}]
  %s2 = inlined_call_operand.vmem [shape: f32[16,32], index: 2, kind: input, shape index: {}]
  %s3 = inlined_call_operand.vmem [shape: bf16[16,32], index: 3, kind: output, shape index: {}]
  %s4 = sld [smem:[#allocation0]]
  $region30: #{transformer_block_forward.7} parent=0
    _
  %s6 = ssub.s32 1, %s4
  %s7 = scalar_select 0, %s6, %s4
  // Predicated region
  $region2: #{transformer_block_forward.7} parent=0 // pred_check
    _
  $region3: #{transformer_block_forward.7} parent=0 // pred_check_branch
    %9 = sbr.rel (0) target = $region5
  $region4: #{transformer_block_forward.7} parent=0 // pred_region
    _
  $region5: #{transformer_block_forward.7} parent=0 // pred_fallthru
    _
  // Predicated region
  $region6: #{transformer_block_forward.7} parent=0 // pred_check
    _
  $region7: #{transformer_block_forward.7} parent=0 // pred_check_branch
    %11 = sbr.rel (0) target = $region9
  $region8: #{transformer_block_forward.7} parent=0 // pred_region
    _
  $region9: #{transformer_block_forward.7} parent=0 // pred_fallthru
    _
  // Predicated region
  $region10: #{transformer_block_forward.7} parent=0 // pred_check
    _
  $region11: #{transformer_block_forward.7} parent=0 // pred_check_branch
    %13 = sbr.rel (0) target = $region13
  $region12: #{transformer_block_forward.7} parent=0 // pred_region
    _
  $region13: #{transformer_block_forward.7} parent=0 // pred_fallthru
    _
  %p15 = scmp.eq.s32.totalorder 0, 0
  // Predicated region
  $region14: #{transformer_block_forward.7} parent=0 // pred_check
    %p16 = pneg %p15
  $region15: #{transformer_block_forward.7} parent=0 // pred_check_branch
    %18 = sbr.rel (%p16) target = $region17
  $region16: #{transformer_block_forward.7} parent=0 // pred_region
    %vm19 = vcmask 261120
    %20 = vst.msk [vmem:[#allocation2] sm:$0xff] %vm19, 0.0
    %21 = vst.msk [vmem:[#allocation2 + $0x8] sm:$0xff] %vm19, 0.0
  $region17: #{transformer_block_forward.7} parent=0 // pred_fallthru
    _
  %v22 = vld [vmem:[#allocation2] sm:$0xff]
  %v23 = vld [vmem:[#allocation2 + $0x8] sm:$0xff]
  %v24 = vld [vmem:[%s0] sm:$0xf]
  %v25 = vld [vmem:[%s0 + $0x4] sm:$0xf]
  %v26 = vld [vmem:[%s1] sm:$0xf]
  %v27 = vld [vmem:[%s1 + $0x4] sm:$0xf]
  %v28 = vld [vmem:[%s1 + $0x8] sm:$0xf]
  %v29 = vld [vmem:[%s1 + $0xc] sm:$0xf]
  %v32 = vunpack.c.l.b16 %v24
  %v33 = vunpack.c.l.b16 %v25
  %v34 = vpack.c.b16 %v33, %v32
  %v39 = vunpack.c.l.b16 %v26
  %v40 = vunpack.c.l.b16 %v27
  %v41 = vunpack.c.l.b16 %v28
  %v42 = vunpack.c.l.b16 %v29
  %v43 = vpack.c.b16 %v40, %v39
  %v44 = vpack.c.b16 %v42, %v41
  %vm47 = vcmask 261120
  %v49 = vsel %vm47, %v34, 0
  %51 = vmatprep.subr.bf16.mxu0 0
  %52 = vmatpush1.bf16.msra.mxu0 %v43
  %53 = vmatprep.subr.bf16.mxu0 0
  %54 = vmatpush1.bf16.msra.mxu0 %v44
  %55 = vmatprep.subr.bf16.mxu0 0
  %56 = vmatpush1.bf16.msra.mxu0 0
  %57 = vmatprep.subr.bf16.mxu0 0
  %58 = vmatpush1.bf16.msra.mxu0 0
  %59 = vmatprep.subr.bf16.mxu0 0
  %60 = vmatpush1.bf16.msra.mxu0 0
  %61 = vmatprep.subr.bf16.mxu0 0
  %62 = vmatpush1.bf16.msra.mxu0 0
  %63 = vmatprep.subr.bf16.mxu0 0
  %64 = vmatpush1.bf16.msra.mxu0 0
  %65 = vmatprep.subr.bf16.mxu0 0
  %66 = vmatpush1.bf16.msra.mxu0 0
  %67 = vmatprep.subr.bf16.mxu0 0
  %68 = vmatpush1.bf16.msra.mxu0 0
  %69 = vmatprep.subr.bf16.mxu0 0
  %70 = vmatpush1.bf16.msra.mxu0 0
  %71 = vmatprep.subr.bf16.mxu0 0
  %72 = vmatpush1.bf16.msra.mxu0 0
  %73 = vmatprep.subr.bf16.mxu0 0
  %74 = vmatpush1.bf16.msra.mxu0 0
  %75 = vmatprep.subr.bf16.mxu0 0
  %76 = vmatpush1.bf16.msra.mxu0 0
  %77 = vmatprep.subr.bf16.mxu0 0
  %78 = vmatpush1.bf16.msra.mxu0 0
  %79 = vmatprep.subr.bf16.mxu0 0
  %80 = vmatpush1.bf16.msra.mxu0 0
  %81 = vmatprep.subr.bf16.mxu0 0
  %82 = vmatpush1.bf16.msra.mxu0 0
  %83 = vmatprep.mubr.bf16.mxu0 0
  %84 = vmatmul.mubr.bf16.gmra.mrb[0].mxu0 %v49
  %v85 = vpop.f32.mrb[0].mxu0
  %v86 = vadd.f32 0.0, %v85
  %v87 = vpop.f32.mrb[0].mxu0
  %v88 = vpop.f32.mrb[0].mxu0
  %v89 = vadd.f32 0.0, %v88
  %v90 = vpop.f32.mrb[0].mxu0
  %91 = vdwg.mxu0
  %v92 = vadd.f32 %v22, %v86
  %v93 = vadd.f32 %v23, %v89
  %94 = vst.msk [vmem:[#allocation2] sm:$0xff] %vm47, %v92
  %95 = vst.msk [vmem:[#allocation2 + $0x8] sm:$0xff] %vm47, %v93
  // Predicated region
  $region18: #{transformer_block_forward.7} parent=0 // pred_check
    %p96 = pneg %p15
  $region19: #{transformer_block_forward.7} parent=0 // pred_check_branch
    %98 = sbr.rel (%p96) target = $region21
  $region20: #{transformer_block_forward.7} parent=0 // pred_region
    %v99 = vld [vmem:[#allocation2] sm:$0xff]
    %v100 = vld [vmem:[#allocation2 + $0x8] sm:$0xff]
    %v101 = vld [vmem:[%s2] sm:$0xff]
    %v102 = vld [vmem:[%s2 + $0x8] sm:$0xff]
    %v103 = vadd.f32 %v99, %v101
    %v104 = vadd.f32 %v100, %v102
    %v105 = vpack.c.bf16 %v104, %v103
    %v107 = vunpack.c.l.b16 %v105
    %v108 = vunpack.c.h.b16 %v105
    %v109 = vpack.c.b16 %v107, %v107
    %v110 = vpack.c.b16 %v108, %v108
    %vm113 = vcmask 257024
    %114 = vst.msk [vmem:[%s3] sm:$0xf] %vm113, %v109
    %115 = vst.msk [vmem:[%s3 + $0x4] sm:$0xf] %vm113, %v110
  $region21: #{transformer_block_forward.7} parent=0 // pred_fallthru
    _
  // Predicated region
  $region22: #{transformer_block_forward.7} parent=0 // pred_check
    _
  $region23: #{transformer_block_forward.7} parent=0 // pred_check_branch
    %117 = sbr.rel (0) target = $region25
  $region24: #{transformer_block_forward.7} parent=0 // pred_region
    _
  $region25: #{transformer_block_forward.7} parent=0 // pred_fallthru
    _
  // Predicated region
  $region26: #{transformer_block_forward.7} parent=0 // pred_check
    _
  $region27: #{transformer_block_forward.7} parent=0 // pred_check_branch
    %119 = sbr.rel (0) target = $region29
  $region28: #{transformer_block_forward.7} parent=0 // pred_region
    _
  $region29: #{transformer_block_forward.7} parent=0 // pred_fallthru
    _

// kernel: transformer_block_forward.8
$region0: #{transformer_block_forward.8}
  #allocation0 [shape = 'u32[]', space=smem, size = 0x4, offset = 0x4, fixed_abs, tag = 'smem constant byte address 0x4 - core index']
  #allocation1 [shape = 'u32[144,128]{1,0:T(1,128)}', space=vmem, size = 0x12000, scoped, tag = 'internal scratch']
  #allocation2 [shape = 'bf16[16,32]{1,0:T(16,128)(2,1)}', space=vmem, size = 0x1000, scoped, tag = 'scratch operand']
  %s0 = inlined_call_operand.vmem [shape: bf16[16,32], index: 0, kind: input, shape index: {}]
  %s1 = inlined_call_operand.vmem [shape: f32[1,32], index: 1, kind: input, shape index: {}]
  %s2 = inlined_call_operand.vmem [shape: bf16[32,256], index: 2, kind: input, shape index: {}]
  %s3 = inlined_call_operand.vmem [shape: bf16[32,256], index: 3, kind: input, shape index: {}]
  %s4 = inlined_call_operand.vmem [shape: bf16[16,256], index: 4, kind: output, shape index: {}]
  %s5 = sld [smem:[#allocation0]]
  $region30: #{transformer_block_forward.8} parent=0
    _
  %s7 = ssub.s32 1, %s5
  %s8 = scalar_select 0, %s7, %s5
  // Predicated region
  $region2: #{transformer_block_forward.8} parent=0 // pred_check
    _
  $region3: #{transformer_block_forward.8} parent=0 // pred_check_branch
    %10 = sbr.rel (0) target = $region5
  $region4: #{transformer_block_forward.8} parent=0 // pred_region
    _
  $region5: #{transformer_block_forward.8} parent=0 // pred_fallthru
    _
  // Predicated region
  $region6: #{transformer_block_forward.8} parent=0 // pred_check
    _
  $region7: #{transformer_block_forward.8} parent=0 // pred_check_branch
    %12 = sbr.rel (0) target = $region9
  $region8: #{transformer_block_forward.8} parent=0 // pred_region
    _
  $region9: #{transformer_block_forward.8} parent=0 // pred_fallthru
    _
  // Predicated region
  $region10: #{transformer_block_forward.8} parent=0 // pred_check
    _
  $region11: #{transformer_block_forward.8} parent=0 // pred_check_branch
    %14 = sbr.rel (0) target = $region13
  $region12: #{transformer_block_forward.8} parent=0 // pred_region
    _
  $region13: #{transformer_block_forward.8} parent=0 // pred_fallthru
    _
  // Predicated region
  $region14: #{transformer_block_forward.8} parent=0 // pred_check
    _
  $region15: #{transformer_block_forward.8} parent=0 // pred_check_branch
    %16 = sbr.rel (0) target = $region17
  $region16: #{transformer_block_forward.8} parent=0 // pred_region
    _
  $region17: #{transformer_block_forward.8} parent=0 // pred_fallthru
    _
  %p18 = scmp.eq.s32.totalorder 0, 0
  // Predicated region
  $region18: #{transformer_block_forward.8} parent=0 // pred_check
    %p19 = pneg %p18
  $region19: #{transformer_block_forward.8} parent=0 // pred_check_branch
    %21 = sbr.rel (%p19) target = $region21
  $region20: #{transformer_block_forward.8} parent=0 // pred_region
    %v22 = vld [vmem:[%s0] sm:$0xf]
    %v23 = vld [vmem:[%s0 + $0x4] sm:$0xf]
    %v24 = vunpack.c.l.bf16 %v22
    %v25 = vunpack.c.l.bf16 %v23
    %v26 = vmul.f32 %v24, %v24
    %v27 = vmul.f32 %v25, %v25
    %vm28 = vcmask 261120
    %v29 = vsel %vm28, %v26, 0.0
    %30 = vadd.xlane.f32.xlu0 %v29
    %v31 = vpop.xlane.xlu0 %30
    %v32 = vsel %vm28, %v27, 0.0
    %33 = vadd.xlane.f32.xlu0 %v32
    %v34 = vpop.xlane.xlu0 %33
    %v35 = vrcp.pop 32.0
    %v36 = vmul.f32 %v31, %v35
    %v37 = vmul.f32 %v34, %v35
    %v38 = vadd.f32 %v36, 1e-05
    %v39 = vadd.f32 %v37, 1e-05
    %v40 = vrsqrt.pop %v38
    %v41 = vrsqrt.pop %v39
    %v42 = vmul.f32 %v24, %v40
    %v43 = vmul.f32 %v25, %v41
    %v44 = vld [vmem:[%s1] sm:$0x1]
    %v46 = vlaneseq
    %v47 = vshrl.u32 %v46, 7
    %v48 = vsub.s32 0, %v47
    %v49 = vrot.slane %v44, %v48
    %v51 = vmul.f32 %v42, %v49
    %v52 = vmul.f32 %v43, %v49
    %v53 = vpack.c.bf16 %v52, %v51
    %54 = vst.msk [vmem:[#allocation2] sm:$0xff] %vm28, %v53
  $region21: #{transformer_block_forward.8} parent=0 // pred_fallthru
    _
  %v55 = vld [vmem:[#allocation2] sm:$0xff]
  %v56 = vld [vmem:[%s2] sm:$0xff]
  %v57 = vld [vmem:[%s2 + $0x8] sm:$0xff]
  %v58 = vld [vmem:[%s2 + $0x10] sm:$0xff]
  %v59 = vld [vmem:[%s2 + $0x18] sm:$0xff]
  %v64 = vunpack.c.l.b16 %v56
  %v65 = vunpack.c.h.b16 %v56
  %v66 = vunpack.c.l.b16 %v57
  %v67 = vunpack.c.h.b16 %v57
  %v68 = vunpack.c.l.b16 %v58
  %v69 = vunpack.c.h.b16 %v58
  %v70 = vunpack.c.l.b16 %v59
  %v71 = vunpack.c.h.b16 %v59
  %v72 = vpack.c.b16 %v66, %v64
  %v73 = vpack.c.b16 %v67, %v65
  %v74 = vpack.c.b16 %v70, %v68
  %v75 = vpack.c.b16 %v71, %v69
  %vm80 = vcmask 261120
  %v82 = vsel %vm80, %v55, 0
  %84 = vmatprep.subr.bf16.mxu0 %v73
  %85 = vmatpush1.bf16.msra.mxu0 %v72
  %86 = vmatprep.subr.bf16.mxu0 %v75
  %87 = vmatpush1.bf16.msra.mxu0 %v74
  %88 = vmatprep.subr.bf16.mxu0 0
  %89 = vmatpush1.bf16.msra.mxu0 0
  %90 = vmatprep.subr.bf16.mxu0 0
  %91 = vmatpush1.bf16.msra.mxu0 0
  %92 = vmatprep.subr.bf16.mxu0 0
  %93 = vmatpush1.bf16.msra.mxu0 0
  %94 = vmatprep.subr.bf16.mxu0 0
  %95 = vmatpush1.bf16.msra.mxu0 0
  %96 = vmatprep.subr.bf16.mxu0 0
  %97 = vmatpush1.bf16.msra.mxu0 0
  %98 = vmatprep.subr.bf16.mxu0 0
  %99 = vmatpush1.bf16.msra.mxu0 0
  %100 = vmatprep.subr.bf16.mxu0 0
  %101 = vmatpush1.bf16.msra.mxu0 0
  %102 = vmatprep.subr.bf16.mxu0 0
  %103 = vmatpush1.bf16.msra.mxu0 0
  %104 = vmatprep.subr.bf16.mxu0 0
  %105 = vmatpush1.bf16.msra.mxu0 0
  %106 = vmatprep.subr.bf16.mxu0 0
  %107 = vmatpush1.bf16.msra.mxu0 0
  %108 = vmatprep.subr.bf16.mxu0 0
  %109 = vmatpush1.bf16.msra.mxu0 0
  %110 = vmatprep.subr.bf16.mxu0 0
  %111 = vmatpush1.bf16.msra.mxu0 0
  %112 = vmatprep.subr.bf16.mxu0 0
  %113 = vmatpush1.bf16.msra.mxu0 0
  %114 = vmatprep.subr.bf16.mxu0 0
  %115 = vmatpush1.bf16.msra.mxu0 0
  %116 = vmatprep.mubr.bf16.mxu0 0
  %117 = vmatmul.mubr.bf16.gmra.mrb[0].mxu0 %v82
  %v118 = vpop.f32.mrb[0].mxu0
  %v119 = vadd.f32 0.0, %v118
  %v120 = vpop.f32.mrb[0].mxu0
  %v121 = vadd.f32 0.0, %v120
  %v122 = vpop.f32.mrb[0].mxu0
  %v123 = vadd.f32 0.0, %v122
  %v124 = vpop.f32.mrb[0].mxu0
  %v125 = vadd.f32 0.0, %v124
  %126 = vdwg.mxu0
  %v127 = vld [vmem:[%s3] sm:$0xff]
  %v128 = vld [vmem:[%s3 + $0x8] sm:$0xff]
  %v129 = vld [vmem:[%s3 + $0x10] sm:$0xff]
  %v130 = vld [vmem:[%s3 + $0x18] sm:$0xff]
  %v135 = vunpack.c.l.b16 %v127
  %v136 = vunpack.c.h.b16 %v127
  %v137 = vunpack.c.l.b16 %v128
  %v138 = vunpack.c.h.b16 %v128
  %v139 = vunpack.c.l.b16 %v129
  %v140 = vunpack.c.h.b16 %v129
  %v141 = vunpack.c.l.b16 %v130
  %v142 = vunpack.c.h.b16 %v130
  %v143 = vpack.c.b16 %v137, %v135
  %v144 = vpack.c.b16 %v138, %v136
  %v145 = vpack.c.b16 %v141, %v139
  %v146 = vpack.c.b16 %v142, %v140
  %151 = vmatprep.subr.bf16.mxu0 %v144
  %152 = vmatpush1.bf16.msra.mxu0 %v143
  %153 = vmatprep.subr.bf16.mxu0 %v146
  %154 = vmatpush1.bf16.msra.mxu0 %v145
  %155 = vmatprep.subr.bf16.mxu0 0
  %156 = vmatpush1.bf16.msra.mxu0 0
  %157 = vmatprep.subr.bf16.mxu0 0
  %158 = vmatpush1.bf16.msra.mxu0 0
  %159 = vmatprep.subr.bf16.mxu0 0
  %160 = vmatpush1.bf16.msra.mxu0 0
  %161 = vmatprep.subr.bf16.mxu0 0
  %162 = vmatpush1.bf16.msra.mxu0 0
  %163 = vmatprep.subr.bf16.mxu0 0
  %164 = vmatpush1.bf16.msra.mxu0 0
  %165 = vmatprep.subr.bf16.mxu0 0
  %166 = vmatpush1.bf16.msra.mxu0 0
  %167 = vmatprep.subr.bf16.mxu0 0
  %168 = vmatpush1.bf16.msra.mxu0 0
  %169 = vmatprep.subr.bf16.mxu0 0
  %170 = vmatpush1.bf16.msra.mxu0 0
  %171 = vmatprep.subr.bf16.mxu0 0
  %172 = vmatpush1.bf16.msra.mxu0 0
  %173 = vmatprep.subr.bf16.mxu0 0
  %174 = vmatpush1.bf16.msra.mxu0 0
  %175 = vmatprep.subr.bf16.mxu0 0
  %176 = vmatpush1.bf16.msra.mxu0 0
  %177 = vmatprep.subr.bf16.mxu0 0
  %178 = vmatpush1.bf16.msra.mxu0 0
  %179 = vmatprep.subr.bf16.mxu0 0
  %180 = vmatpush1.bf16.msra.mxu0 0
  %181 = vmatprep.subr.bf16.mxu0 0
  %182 = vmatpush1.bf16.msra.mxu0 0
  %183 = vmatprep.mubr.bf16.mxu0 0
  %184 = vmatmul.mubr.bf16.gmra.mrb[0].mxu0 %v82
  %v185 = vpop.f32.mrb[0].mxu0
  %v186 = vadd.f32 0.0, %v185
  %v187 = vpop.f32.mrb[0].mxu0
  %v188 = vadd.f32 0.0, %v187
  %v189 = vpop.f32.mrb[0].mxu0
  %v190 = vadd.f32 0.0, %v189
  %v191 = vpop.f32.mrb[0].mxu0
  %v192 = vadd.f32 0.0, %v191
  %193 = vdwg.mxu0
  %v194 = vsub.f32 0.0, %v119
  %v195 = vsub.f32 0.0, %v121
  %v196 = vsub.f32 0.0, %v123
  %v197 = vsub.f32 0.0, %v125
  %v198 = vmul.f32 %v194, 1.442695
  %v199 = vpow.pop %v198
  %v200 = vmul.f32 %v195, 1.442695
  %v201 = vpow.pop %v200
  %v202 = vmul.f32 %v196, 1.442695
  %v203 = vpow.pop %v202
  %v204 = vmul.f32 %v197, 1.442695
  %v205 = vpow.pop %v204
  %v206 = vadd.f32 %v199, 1.0
  %v207 = vadd.f32 %v201, 1.0
  %v208 = vadd.f32 %v203, 1.0
  %v209 = vadd.f32 %v205, 1.0
  %v210 = vrcp.pop %v206
  %v211 = vrcp.pop %v207
  %v212 = vrcp.pop %v208
  %v213 = vrcp.pop %v209
  %v214 = vmul.f32 %v119, %v210
  %v215 = vmul.f32 %v121, %v211
  %v216 = vmul.f32 %v123, %v212
  %v217 = vmul.f32 %v125, %v213
  %v218 = vmul.f32 %v214, %v186
  %v219 = vmul.f32 %v215, %v188
  %v220 = vmul.f32 %v216, %v190
  %v221 = vmul.f32 %v217, %v192
  %v222 = vpack.c.bf16 %v220, %v218
  %v223 = vpack.c.bf16 %v221, %v219
  %v226 = vunpack.c.l.b16 %v222
  %v227 = vunpack.c.l.b16 %v223
  %v228 = vunpack.c.h.b16 %v222
  %v229 = vunpack.c.h.b16 %v223
  %v230 = vpack.c.b16 %v227, %v226
  %v231 = vpack.c.b16 %v229, %v228
  %234 = vst [vmem:[%s4] sm:$0xff] %v230
  %235 = vst [vmem:[%s4 + $0x8] sm:$0xff] %v231
  // Predicated region
  $region22: #{transformer_block_forward.8} parent=0 // pred_check
    _
  $region23: #{transformer_block_forward.8} parent=0 // pred_check_branch
    %237 = sbr.rel (0) target = $region25
  $region24: #{transformer_block_forward.8} parent=0 // pred_region
    _
  $region25: #{transformer_block_forward.8} parent=0 // pred_fallthru
    _
  // Predicated region
  $region26: #{transformer_block_forward.8} parent=0 // pred_check
    _
  $region27: #{transformer_block_forward.8} parent=0 // pred_check_branch
    %239 = sbr.rel (0) target = $region29
  $region28: #{transformer_block_forward.8} parent=0 // pred_region
    _
  $region29: #{transformer_block_forward.8} parent=0 // pred_fallthru
    _

// kernel: transformer_block_forward.5
$region0: #{transformer_block_forward.5}
  #allocation0 [shape = 'u32[]', space=smem, size = 0x4, offset = 0x4, fixed_abs, tag = 'smem constant byte address 0x4 - core index']
  #allocation1 [shape = 'u32[144,128]{1,0:T(1,128)}', space=vmem, size = 0x12000, scoped, tag = 'internal scratch']
  #allocation2 [shape = 'bf16[8,32]{1,0:T(8,128)(2,1)}', space=vmem, size = 0x800, scoped, tag = 'scratch operand']
  %s0 = inlined_call_operand.vmem [shape: f32[2,8,32], index: 0, kind: input, shape index: {}]
  %s1 = inlined_call_operand.vmem [shape: f32[1,32], index: 1, kind: input, shape index: {}]
  %s2 = inlined_call_operand.vmem [shape: f32[8,4], index: 2, kind: input, shape index: {}]
  %s3 = inlined_call_operand.vmem [shape: f32[8,4], index: 3, kind: input, shape index: {}]
  %s4 = inlined_call_operand.vmem [shape: bf16[32,32], index: 4, kind: input, shape index: {}]
  %s5 = inlined_call_operand.vmem [shape: bf16[32,32], index: 5, kind: input, shape index: {}]
  %s6 = inlined_call_operand.vmem [shape: bf16[32,32], index: 6, kind: input, shape index: {}]
  %s7 = inlined_call_operand.vmem [shape: bf16[2,8,32], index: 7, kind: output, shape index: {0}]
  %s8 = inlined_call_operand.vmem [shape: bf16[2,8,32], index: 8, kind: output, shape index: {1}]
  %s9 = inlined_call_operand.vmem [shape: bf16[2,8,32], index: 9, kind: output, shape index: {2}]
  %10 = xla_tuple %s7, %s8, %s9
  %s11 = sld [smem:[#allocation0]]
  $region81: #{transformer_block_forward.5} parent=0
    _
  %s13 = ssub.s32 1, %s11
  %s14 = scalar_select 0, %s13, %s11
  loop: start=0, step=1, limit=4
  $region2: #{transformer_block_forward.5} parent=0 // loop_pre_header
    _
  $region3: #{transformer_block_forward.5} parent=0 // loop_header
    %s16 = sphi 0, %s20
    %p17 = scmp.ge.s32.totalorder %s16, 4
    %s23 = sphi 0, %s42
    %s24 = sphi 0, %s38
    %s25 = sphi 0, %s34
    %s26 = sphi 0, %s23
    %s27 = sphi 0, %s24
    %s28 = sphi 0, %s25
    %s29 = sphi 0, %s26
    %s30 = sphi 0, %s27
    %s31 = sphi 0, %s28
    %s47 = sphi 0, %s49
    %s50 = sphi 0, %s47
    %s51 = sphi 0, %s50
    %s67 = sphi 0, %s51
    %s71 = sphi 0, %s71
    %s73 = sphi 0, %s71
    %s74 = sphi 0, %s73
    %s88 = sphi 0, %s74
    %s94 = sphi 0, %s96
    %s97 = sphi 0, %s94
    %s98 = sphi 0, %s97
    %s114 = sphi 0, %s98
    %s120 = sphi 0, %s122
    %s123 = sphi 0, %s120
    %s124 = sphi 0, %s123
    %s140 = sphi 0, %s124
    %s146 = sphi 0, %s148
    %s149 = sphi 0, %s146
    %s150 = sphi 0, %s149
    %s166 = sphi 0, %s150
    %s172 = sphi 0, %s174
    %s175 = sphi 0, %s172
    %s176 = sphi 0, %s175
    %s192 = sphi 0, %s176
    %s198 = sphi 0, %s200
    %s201 = sphi 0, %s198
    %s202 = sphi 0, %s201
    %s218 = sphi 0, %s202
    %s228 = sphi 0, %s230
    %s231 = sphi 0, %s228
    %s232 = sphi 0, %s231
    %s248 = sphi 0, %s232
    %s258 = sphi 0, %s260
    %s261 = sphi 0, %s258
    %s262 = sphi 0, %s261
    %s278 = sphi 0, %s262
    %s288 = sphi 0, %s290
    %s291 = sphi 0, %s288
    %s292 = sphi 0, %s291
    %s308 = sphi 0, %s292
  $region4: #{transformer_block_forward.5} parent=0 // loop_header_branch
    %19 = sbr.rel (%p17) target = $region8
  $region5: #{transformer_block_forward.5} parent=0 // loop_body
    %s21 = ssub.s32 %s16, 1
    %s22 = ssub.s32 %s16, 2
    %s32 = sadd.s32 1, %s25
    %p33 = scmp.ge.s32.totalorder %s32, 1
    %s34 = scalar_select %p33, 0, %s32
    %s35 = sadd.s32 1, %s24
    %s36 = scalar_select %p33, %s35, %s24
    %p37 = scmp.ge.s32.totalorder %s36, 1
    %s38 = scalar_select %p37, 0, %s36
    %s39 = sadd.s32 1, %s23
    %s40 = scalar_select %p37, %s39, %s23
    %p41 = scmp.ge.s32.totalorder %s40, 2
    %s42 = scalar_select %p41, 0, %s40
    %s43 = ssub.s32 %s23, %s42
    %s44 = ssub.s32 %s24, %s38
    %s45 = sor.u32 %s43, %s44
    %p46 = scmp.eq.s32.totalorder %s45, 0
    %s48 = sadd.s32 %s47, 1
    %s49 = scalar_select %p46, %s47, %s48
    %p52 = pneg %p46
    %p53 = scmp.eq.s32.totalorder %s16, 1
    %p54 = por %p52, %p53
    %p55 = scmp.ne.s32.totalorder %s47, %s50
    %p56 = scmp.eq.s32.totalorder %s16, 0
    %p57 = por %p55, %p56
    %p58 = scmp.ne.s32.totalorder %s47, %s50
    %p59 = scmp.eq.s32.totalorder %s21, 1
    %p60 = por %p58, %p59
    %p61 = scmp.ne.s32.totalorder %s50, %s51
    %p62 = scmp.eq.s32.totalorder %s21, 0
    %p63 = por %p61, %p62
    %p64 = scmp.ne.s32.totalorder %s50, %s51
    %p65 = scmp.eq.s32.totalorder %s22, 1
    %p66 = por %p64, %p65
    %p68 = scmp.ne.s32.totalorder %s51, %s67
    %p69 = scmp.eq.s32.totalorder %s22, 0
    %p70 = por %p68, %p69
    %s72 = sadd.s32 %s71, 1
    %p75 = scmp.eq.s32.totalorder %s16, 1
    %p76 = scmp.ne.s32.totalorder %s71, %s73
    %p77 = scmp.eq.s32.totalorder %s16, 0
    %p78 = por %p76, %p77
    %p79 = scmp.ne.s32.totalorder %s71, %s73
    %p80 = scmp.eq.s32.totalorder %s21, 1
    %p81 = por %p79, %p80
    %p82 = scmp.ne.s32.totalorder %s73, %s74
    %p83 = scmp.eq.s32.totalorder %s21, 0
    %p84 = por %p82, %p83
    %p85 = scmp.ne.s32.totalorder %s73, %s74
    %p86 = scmp.eq.s32.totalorder %s22, 1
    %p87 = por %p85, %p86
    %p89 = scmp.ne.s32.totalorder %s74, %s88
    %p90 = scmp.eq.s32.totalorder %s22, 0
    %p91 = por %p89, %p90
    %s92 = ssub.s32 %s24, %s38
    %p93 = scmp.eq.s32.totalorder %s92, 0
    %s95 = sadd.s32 %s94, 1
    %s96 = scalar_select %p93, %s94, %s95
    %p99 = pneg %p93
    %p100 = scmp.eq.s32.totalorder %s16, 1
    %p101 = por %p99, %p100
    %p102 = scmp.ne.s32.totalorder %s94, %s97
    %p103 = scmp.eq.s32.totalorder %s16, 0
    %p104 = por %p102, %p103
    %p105 = scmp.ne.s32.totalorder %s94, %s97
    %p106 = scmp.eq.s32.totalorder %s21, 1
    %p107 = por %p105, %p106
    %p108 = scmp.ne.s32.totalorder %s97, %s98
    %p109 = scmp.eq.s32.totalorder %s21, 0
    %p110 = por %p108, %p109
    %p111 = scmp.ne.s32.totalorder %s97, %s98
    %p112 = scmp.eq.s32.totalorder %s22, 1
    %p113 = por %p111, %p112
    %p115 = scmp.ne.s32.totalorder %s98, %s114
    %p116 = scmp.eq.s32.totalorder %s22, 0
    %p117 = por %p115, %p116
    %s118 = ssub.s32 %s24, %s38
    %p119 = scmp.eq.s32.totalorder %s118, 0
    %s121 = sadd.s32 %s120, 1
    %s122 = scalar_select %p119, %s120, %s121
    %p125 = pneg %p119
    %p126 = scmp.eq.s32.totalorder %s16, 1
    %p127 = por %p125, %p126
    %p128 = scmp.ne.s32.totalorder %s120, %s123
    %p129 = scmp.eq.s32.totalorder %s16, 0
    %p130 = por %p128, %p129
    %p131 = scmp.ne.s32.totalorder %s120, %s123
    %p132 = scmp.eq.s32.totalorder %s21, 1
    %p133 = por %p131, %p132
    %p134 = scmp.ne.s32.totalorder %s123, %s124
    %p135 = scmp.eq.s32.totalorder %s21, 0
    %p136 = por %p134, %p135
    %p137 = scmp.ne.s32.totalorder %s123, %s124
    %p138 = scmp.eq.s32.totalorder %s22, 1
    %p139 = por %p137, %p138
    %p141 = scmp.ne.s32.totalorder %s124, %s140
    %p142 = scmp.eq.s32.totalorder %s22, 0
    %p143 = por %p141, %p142
    %s144 = ssub.s32 %s25, %s34
    %p145 = scmp.eq.s32.totalorder %s144, 0
    %s147 = sadd.s32 %s146, 1
    %s148 = scalar_select %p145, %s146, %s147
    %p151 = pneg %p145
    %p152 = scmp.eq.s32.totalorder %s16, 1
    %p153 = por %p151, %p152
    %p154 = scmp.ne.s32.totalorder %s146, %s149
    %p155 = scmp.eq.s32.totalorder %s16, 0
    %p156 = por %p154, %p155
    %p157 = scmp.ne.s32.totalorder %s146, %s149
    %p158 = scmp.eq.s32.totalorder %s21, 1
    %p159 = por %p157, %p158
    %p160 = scmp.ne.s32.totalorder %s149, %s150
    %p161 = scmp.eq.s32.totalorder %s21, 0
    %p162 = por %p160, %p161
    %p163 = scmp.ne.s32.totalorder %s149, %s150
    %p164 = scmp.eq.s32.totalorder %s22, 1
    %p165 = por %p163, %p164
    %p167 = scmp.ne.s32.totalorder %s150, %s166
    %p168 = scmp.eq.s32.totalorder %s22, 0
    %p169 = por %p167, %p168
    %s170 = ssub.s32 %s25, %s34
    %p171 = scmp.eq.s32.totalorder %s170, 0
    %s173 = sadd.s32 %s172, 1
    %s174 = scalar_select %p171, %s172, %s173
    %p177 = pneg %p171
    %p178 = scmp.eq.s32.totalorder %s16, 1
    %p179 = por %p177, %p178
    %p180 = scmp.ne.s32.totalorder %s172, %s175
    %p181 = scmp.eq.s32.totalorder %s16, 0
    %p182 = por %p180, %p181
    %p183 = scmp.ne.s32.totalorder %s172, %s175
    %p184 = scmp.eq.s32.totalorder %s21, 1
    %p185 = por %p183, %p184
    %p186 = scmp.ne.s32.totalorder %s175, %s176
    %p187 = scmp.eq.s32.totalorder %s21, 0
    %p188 = por %p186, %p187
    %p189 = scmp.ne.s32.totalorder %s175, %s176
    %p190 = scmp.eq.s32.totalorder %s22, 1
    %p191 = por %p189, %p190
    %p193 = scmp.ne.s32.totalorder %s176, %s192
    %p194 = scmp.eq.s32.totalorder %s22, 0
    %p195 = por %p193, %p194
    %s196 = ssub.s32 %s25, %s34
    %p197 = scmp.eq.s32.totalorder %s196, 0
    %s199 = sadd.s32 %s198, 1
    %s200 = scalar_select %p197, %s198, %s199
    %p203 = pneg %p197
    %p204 = scmp.eq.s32.totalorder %s16, 1
    %p205 = por %p203, %p204
    %p206 = scmp.ne.s32.totalorder %s198, %s201
    %p207 = scmp.eq.s32.totalorder %s16, 0
    %p208 = por %p206, %p207
    %p209 = scmp.ne.s32.totalorder %s198, %s201
    %p210 = scmp.eq.s32.totalorder %s21, 1
    %p211 = por %p209, %p210
    %p212 = scmp.ne.s32.totalorder %s201, %s202
    %p213 = scmp.eq.s32.totalorder %s21, 0
    %p214 = por %p212, %p213
    %p215 = scmp.ne.s32.totalorder %s201, %s202
    %p216 = scmp.eq.s32.totalorder %s22, 1
    %p217 = por %p215, %p216
    %p219 = scmp.ne.s32.totalorder %s202, %s218
    %p220 = scmp.eq.s32.totalorder %s22, 0
    %p221 = por %p219, %p220
    %s222 = ssub.s32 %s23, %s42
    %s223 = ssub.s32 %s24, %s38
    %s224 = sor.u32 %s222, %s223
    %s225 = ssub.s32 %s25, %s34
    %s226 = sor.u32 %s224, %s225
    %p227 = scmp.eq.s32.totalorder %s226, 0
    %s229 = sadd.s32 %s228, 1
    %s230 = scalar_select %p227, %s228, %s229
    %p233 = pneg %p227
    %p234 = scmp.eq.s32.totalorder %s16, 1
    %p235 = por %p233, %p234
    %p236 = scmp.ne.s32.totalorder %s228, %s231
    %p237 = scmp.eq.s32.totalorder %s16, 0
    %p238 = por %p236, %p237
    %p239 = scmp.ne.s32.totalorder %s228, %s231
    %p240 = scmp.eq.s32.totalorder %s21, 1
    %p241 = por %p239, %p240
    %p242 = scmp.ne.s32.totalorder %s231, %s232
    %p243 = scmp.eq.s32.totalorder %s21, 0
    %p244 = por %p242, %p243
    %p245 = scmp.ne.s32.totalorder %s231, %s232
    %p246 = scmp.eq.s32.totalorder %s22, 1
    %p247 = por %p245, %p246
    %p249 = scmp.ne.s32.totalorder %s232, %s248
    %p250 = scmp.eq.s32.totalorder %s22, 0
    %p251 = por %p249, %p250
    %s252 = ssub.s32 %s23, %s42
    %s253 = ssub.s32 %s24, %s38
    %s254 = sor.u32 %s252, %s253
    %s255 = ssub.s32 %s25, %s34
    %s256 = sor.u32 %s254, %s255
    %p257 = scmp.eq.s32.totalorder %s256, 0
    %s259 = sadd.s32 %s258, 1
    %s260 = scalar_select %p257, %s258, %s259
    %p263 = pneg %p257
    %p264 = scmp.eq.s32.totalorder %s16, 1
    %p265 = por %p263, %p264
    %p266 = scmp.ne.s32.totalorder %s258, %s261
    %p267 = scmp.eq.s32.totalorder %s16, 0
    %p268 = por %p266, %p267
    %p269 = scmp.ne.s32.totalorder %s258, %s261
    %p270 = scmp.eq.s32.totalorder %s21, 1
    %p271 = por %p269, %p270
    %p272 = scmp.ne.s32.totalorder %s261, %s262
    %p273 = scmp.eq.s32.totalorder %s21, 0
    %p274 = por %p272, %p273
    %p275 = scmp.ne.s32.totalorder %s261, %s262
    %p276 = scmp.eq.s32.totalorder %s22, 1
    %p277 = por %p275, %p276
    %p279 = scmp.ne.s32.totalorder %s262, %s278
    %p280 = scmp.eq.s32.totalorder %s22, 0
    %p281 = por %p279, %p280
    %s282 = ssub.s32 %s23, %s42
    %s283 = ssub.s32 %s24, %s38
    %s284 = sor.u32 %s282, %s283
    %s285 = ssub.s32 %s25, %s34
    %s286 = sor.u32 %s284, %s285
    %p287 = scmp.eq.s32.totalorder %s286, 0
    %s289 = sadd.s32 %s288, 1
    %s290 = scalar_select %p287, %s288, %s289
    %p293 = pneg %p287
    %p294 = scmp.eq.s32.totalorder %s16, 1
    %p295 = por %p293, %p294
    %p296 = scmp.ne.s32.totalorder %s288, %s291
    %p297 = scmp.eq.s32.totalorder %s16, 0
    %p298 = por %p296, %p297
    %p299 = scmp.ne.s32.totalorder %s288, %s291
    %p300 = scmp.eq.s32.totalorder %s21, 1
    %p301 = por %p299, %p300
    %p302 = scmp.ne.s32.totalorder %s291, %s292
    %p303 = scmp.eq.s32.totalorder %s21, 0
    %p304 = por %p302, %p303
    %p305 = scmp.ne.s32.totalorder %s291, %s292
    %p306 = scmp.eq.s32.totalorder %s22, 1
    %p307 = por %p305, %p306
    %p309 = scmp.ne.s32.totalorder %s292, %s308
    %p310 = scmp.eq.s32.totalorder %s22, 0
    %p311 = por %p309, %p310
    %p312 = scmp.le.s32.totalorder 1, %s16
    %p313 = scmp.lt.s32.totalorder %s16, 3
    %p314 = pnand %p312, %p313
    %p315 = pneg %p314
    // Predicated region
    $region9: #{transformer_block_forward.5} parent=5 // pred_check
      _
    $region10: #{transformer_block_forward.5} parent=5 // pred_check_branch
      %317 = sbr.rel (%p314) target = $region12
    $region11: #{transformer_block_forward.5} parent=5 // pred_region
      %s318 = ssub.s32 %s16, 1
      // Predicated region
      $region13: #{transformer_block_forward.5} parent=11 // pred_check
        %p319 = pneg %p84
      $region14: #{transformer_block_forward.5} parent=11 // pred_check_branch
        %321 = sbr.rel (%p319) target = $region16
      $region15: #{transformer_block_forward.5} parent=11 // pred_region
        _
      $region16: #{transformer_block_forward.5} parent=11 // pred_fallthru
        _
      // Predicated region
      $region17: #{transformer_block_forward.5} parent=11 // pred_check
        %p322 = pneg %p110
      $region18: #{transformer_block_forward.5} parent=11 // pred_check_branch
        %324 = sbr.rel (%p322) target = $region20
      $region19: #{transformer_block_forward.5} parent=11 // pred_region
        %p325 = scmp.lt.s32.totalorder %s27, 0
        %s326 = scalar_select %p325, %s27, 0
        %s327 = smul.addr %s326, 8
        %s328 = scalar_lea.vmem %s2, %s327
      $region20: #{transformer_block_forward.5} parent=11 // pred_fallthru
        _
      // Predicated region
      $region21: #{transformer_block_forward.5} parent=11 // pred_check
        %p329 = pneg %p136
      $region22: #{transformer_block_forward.5} parent=11 // pred_check_branch
        %331 = sbr.rel (%p329) target = $region24
      $region23: #{transformer_block_forward.5} parent=11 // pred_region
        %p332 = scmp.lt.s32.totalorder %s27, 0
        %s333 = scalar_select %p332, %s27, 0
        %s334 = smul.addr %s333, 8
        %s335 = scalar_lea.vmem %s3, %s334
      $region24: #{transformer_block_forward.5} parent=11 // pred_fallthru
        _
      // Predicated region
      $region25: #{transformer_block_forward.5} parent=11 // pred_check
        %p336 = pneg %p162
      $region26: #{transformer_block_forward.5} parent=11 // pred_check_branch
        %338 = sbr.rel (%p336) target = $region28
      $region27: #{transformer_block_forward.5} parent=11 // pred_region
        %p339 = scmp.lt.s32.totalorder %s28, 0
        %s340 = scalar_select %p339, %s28, 0
        %s341 = smul.addr %s340, 4
        %s342 = scalar_lea.vmem %s4, %s341
      $region28: #{transformer_block_forward.5} parent=11 // pred_fallthru
        _
      // Predicated region
      $region29: #{transformer_block_forward.5} parent=11 // pred_check
        %p343 = pneg %p188
      $region30: #{transformer_block_forward.5} parent=11 // pred_check_branch
        %345 = sbr.rel (%p343) target = $region32
      $region31: #{transformer_block_forward.5} parent=11 // pred_region
        %p346 = scmp.lt.s32.totalorder %s28, 0
        %s347 = scalar_select %p346, %s28, 0
        %s348 = smul.addr %s347, 4
        %s349 = scalar_lea.vmem %s5, %s348
      $region32: #{transformer_block_forward.5} parent=11 // pred_fallthru
        _
      // Predicated region
      $region33: #{transformer_block_forward.5} parent=11 // pred_check
        %p350 = pneg %p214
      $region34: #{transformer_block_forward.5} parent=11 // pred_check_branch
        %352 = sbr.rel (%p350) target = $region36
      $region35: #{transformer_block_forward.5} parent=11 // pred_region
        %p353 = scmp.lt.s32.totalorder %s28, 0
        %s354 = scalar_select %p353, %s28, 0
        %s355 = smul.addr %s354, 4
        %s356 = scalar_lea.vmem %s6, %s355
      $region36: #{transformer_block_forward.5} parent=11 // pred_fallthru
        _
    $region12: #{transformer_block_forward.5} parent=5 // pred_fallthru
      _
    %p357 = scmp.lt.s32.totalorder %s16, 2
    // Predicated region
    $region37: #{transformer_block_forward.5} parent=5 // pred_check
      %p358 = pneg %p357
    $region38: #{transformer_block_forward.5} parent=5 // pred_check_branch
      %360 = sbr.rel (%p358) target = $region40
    $region39: #{transformer_block_forward.5} parent=5 // pred_region
      // Predicated region
      $region41: #{transformer_block_forward.5} parent=39 // pred_check
        %p361 = pneg %p57
      $region42: #{transformer_block_forward.5} parent=39 // pred_check_branch
        %363 = sbr.rel (%p361) target = $region44
      $region43: #{transformer_block_forward.5} parent=39 // pred_region
        %p364 = scmp.lt.s32.totalorder %s23, 1
        %s365 = scalar_select %p364, %s23, 1
        %p366 = scmp.lt.s32.totalorder %s24, 0
        %s367 = scalar_select %p366, %s24, 0
        %s368 = sadd.s32 %s367, %s365
        %s369 = smul.addr %s368, 8
        %s370 = scalar_lea.vmem %s0, %s369
      $region44: #{transformer_block_forward.5} parent=39 // pred_fallthru
        _
    $region40: #{transformer_block_forward.5} parent=5 // pred_fallthru
      _
    %p371 = scmp.le.s32.totalorder 1, %s16
    %p372 = scmp.lt.s32.totalorder %s16, 3
    %p373 = pnand %p371, %p372
    %p374 = pneg %p373
    // Predicated region
    $region45: #{transformer_block_forward.5} parent=5 // pred_check
      _
    $region46: #{transformer_block_forward.5} parent=5 // pred_check_branch
      %376 = sbr.rel (%p373) target = $region48
    $region47: #{transformer_block_forward.5} parent=5 // pred_region
      %s377 = ssub.s32 %s16, 1
      %p378 = scmp.lt.s32.totalorder %s26, 1
      %s379 = scalar_select %p378, %s26, 1
      %p380 = scmp.lt.s32.totalorder %s27, 0
      %s381 = scalar_select %p380, %s27, 0
      %s382 = sadd.s32 %s381, %s379
      %s383 = smul.addr %s382, 8
      %s384 = scalar_lea.vmem %s0, %s383
      %p385 = pneg %p63
      %p386 = pneg %p60
      %p387 = pneg %p84
      %p388 = pneg %p81
      %p389 = scmp.lt.s32.totalorder %s27, 0
      %s390 = scalar_select %p389, %s27, 0
      %s391 = smul.addr %s390, 8
      %s392 = scalar_lea.vmem %s2, %s391
      %p393 = pneg %p110
      %p394 = pneg %p107
      %p395 = scmp.lt.s32.totalorder %s27, 0
      %s396 = scalar_select %p395, %s27, 0
      %s397 = smul.addr %s396, 8
      %s398 = scalar_lea.vmem %s3, %s397
      %p399 = pneg %p136
      %p400 = pneg %p133
      %p401 = scmp.lt.s32.totalorder %s28, 0
      %s402 = scalar_select %p401, %s28, 0
      %s403 = smul.addr %s402, 4
      %s404 = scalar_lea.vmem %s4, %s403
      %p405 = pneg %p162
      %p406 = pneg %p159
      %p407 = scmp.lt.s32.totalorder %s28, 0
      %s408 = scalar_select %p407, %s28, 0
      %s409 = smul.addr %s408, 4
      %s410 = scalar_lea.vmem %s5, %s409
      %p411 = pneg %p188
      %p412 = pneg %p185
      %p413 = scmp.lt.s32.totalorder %s28, 0
      %s414 = scalar_select %p413, %s28, 0
      %s415 = smul.addr %s414, 4
      %s416 = scalar_lea.vmem %s6, %s415
      %p417 = pneg %p214
      %p418 = pneg %p211
      %p419 = pneg %p244
      %p420 = pneg %p241
      %p421 = scmp.lt.s32.totalorder %s26, 1
      %s422 = scalar_select %p421, %s26, 1
      %p423 = scmp.lt.s32.totalorder %s27, 0
      %s424 = scalar_select %p423, %s27, 0
      %p425 = scmp.lt.s32.totalorder %s28, 0
      %s426 = scalar_select %p425, %s28, 0
      %s427 = sadd.s32 %s426, %s424
      %s428 = sadd.s32 %s427, %s422
      %s429 = smul.addr %s428, 4
      %s430 = scalar_lea.vmem %s7, %s429
      %p431 = pneg %p274
      %p432 = pneg %p271
      %p433 = scmp.lt.s32.totalorder %s26, 1
      %s434 = scalar_select %p433, %s26, 1
      %p435 = scmp.lt.s32.totalorder %s27, 0
      %s436 = scalar_select %p435, %s27, 0
      %p437 = scmp.lt.s32.totalorder %s28, 0
      %s438 = scalar_select %p437, %s28, 0
      %s439 = sadd.s32 %s438, %s436
      %s440 = sadd.s32 %s439, %s434
      %s441 = smul.addr %s440, 4
      %s442 = scalar_lea.vmem %s8, %s441
      %p443 = pneg %p304
      %p444 = pneg %p301
      %p445 = scmp.lt.s32.totalorder %s26, 1
      %s446 = scalar_select %p445, %s26, 1
      %p447 = scmp.lt.s32.totalorder %s27, 0
      %s448 = scalar_select %p447, %s27, 0
      %p449 = scmp.lt.s32.totalorder %s28, 0
      %s450 = scalar_select %p449, %s28, 0
      %s451 = sadd.s32 %s450, %s448
      %s452 = sadd.s32 %s451, %s446
      %s453 = smul.addr %s452, 4
      %s454 = scalar_lea.vmem %s9, %s453
      %p455 = scmp.lt.s32.totalorder %s26, 1
      %s456 = scalar_select %p455, %s26, 1
      %p457 = scmp.lt.s32.totalorder %s27, 0
      %s458 = scalar_select %p457, %s27, 0
      %s459 = sadd.s32 %s458, %s456
      %s460 = smul.addr %s459, 8
      %s461 = scalar_lea.vmem %s0, %s460
      %p462 = scmp.lt.s32.totalorder %s27, 0
      %s463 = scalar_select %p462, %s27, 0
      %s464 = smul.addr %s463, 8
      %s465 = scalar_lea.vmem %s2, %s464
      %p466 = scmp.lt.s32.totalorder %s27, 0
      %s467 = scalar_select %p466, %s27, 0
      %s468 = smul.addr %s467, 8
      %s469 = scalar_lea.vmem %s3, %s468
      %p470 = scmp.lt.s32.totalorder %s28, 0
      %s471 = scalar_select %p470, %s28, 0
      %s472 = smul.addr %s471, 4
      %s473 = scalar_lea.vmem %s4, %s472
      %p474 = scmp.lt.s32.totalorder %s28, 0
      %s475 = scalar_select %p474, %s28, 0
      %s476 = smul.addr %s475, 4
      %s477 = scalar_lea.vmem %s5, %s476
      %p478 = scmp.lt.s32.totalorder %s28, 0
      %s479 = scalar_select %p478, %s28, 0
      %s480 = smul.addr %s479, 4
      %s481 = scalar_lea.vmem %s6, %s480
      %p482 = scmp.lt.s32.totalorder %s26, 1
      %s483 = scalar_select %p482, %s26, 1
      %p484 = scmp.lt.s32.totalorder %s27, 0
      %s485 = scalar_select %p484, %s27, 0
      %p486 = scmp.lt.s32.totalorder %s28, 0
      %s487 = scalar_select %p486, %s28, 0
      %s488 = sadd.s32 %s487, %s485
      %s489 = sadd.s32 %s488, %s483
      %s490 = smul.addr %s489, 4
      %s491 = scalar_lea.vmem %s7, %s490
      %p492 = scmp.lt.s32.totalorder %s26, 1
      %s493 = scalar_select %p492, %s26, 1
      %p494 = scmp.lt.s32.totalorder %s27, 0
      %s495 = scalar_select %p494, %s27, 0
      %p496 = scmp.lt.s32.totalorder %s28, 0
      %s497 = scalar_select %p496, %s28, 0
      %s498 = sadd.s32 %s497, %s495
      %s499 = sadd.s32 %s498, %s493
      %s500 = smul.addr %s499, 4
      %s501 = scalar_lea.vmem %s8, %s500
      %p502 = scmp.lt.s32.totalorder %s26, 1
      %s503 = scalar_select %p502, %s26, 1
      %p504 = scmp.lt.s32.totalorder %s27, 0
      %s505 = scalar_select %p504, %s27, 0
      %p506 = scmp.lt.s32.totalorder %s28, 0
      %s507 = scalar_select %p506, %s28, 0
      %s508 = sadd.s32 %s507, %s505
      %s509 = sadd.s32 %s508, %s503
      %s510 = smul.addr %s509, 4
      %s511 = scalar_lea.vmem %s9, %s510
      %p513 = scmp.eq.s32.totalorder %s28, 0
      // Predicated region
      $region49: #{transformer_block_forward.5} parent=47 // pred_check
        %p514 = pneg %p513
      $region50: #{transformer_block_forward.5} parent=47 // pred_check_branch
        %516 = sbr.rel (%p514) target = $region52
      $region51: #{transformer_block_forward.5} parent=47 // pred_region
        %v517 = vld [vmem:[%s461] sm:$0xff]
        %v518 = vmul.f32 %v517, %v517
        %vm519 = vcmask 261120
        %v520 = vsel %vm519, %v518, 0.0
        %521 = vadd.xlane.f32.xlu0 %v520
        %v522 = vpop.xlane.xlu0 %521
        %v523 = vrcp.pop 32.0
        %v524 = vmul.f32 %v522, %v523
        %v525 = vadd.f32 %v524, 1e-05
        %v526 = vrsqrt.pop %v525
        %v527 = vmul.f32 %v517, %v526
        %v528 = vld [vmem:[%s1] sm:$0x1]
        %v530 = vlaneseq
        %v531 = vshrl.u32 %v530, 7
        %v532 = vsub.s32 0, %v531
        %v533 = vrot.slane %v528, %v532
        %v535 = vmul.f32 %v527, %v533
        %v536 = vpack.c.bf16 %v535, %v535
        %vm537 = vcmask 257024
        %538 = vst.msk [vmem:[#allocation2] sm:$0xf] %vm537, %v536
      $region52: #{transformer_block_forward.5} parent=47 // pred_fallthru
        _
      %v539 = vld [vmem:[#allocation2] sm:$0xf]
      %v540 = vld [vmem:[%s473] sm:$0xf]
      %v541 = vld [vmem:[%s473 + $0x4] sm:$0xf]
      %v542 = vld [vmem:[%s473 + $0x8] sm:$0xf]
      %v543 = vld [vmem:[%s473 + $0xc] sm:$0xf]
      %v548 = vunpack.c.l.b16 %v540
      %v549 = vunpack.c.l.b16 %v541
      %v550 = vunpack.c.l.b16 %v542
      %v551 = vunpack.c.l.b16 %v543
      %v552 = vpack.c.b16 %v549, %v548
      %v553 = vpack.c.b16 %v551, %v550
      %vm556 = vcmask 261120
      %v558 = vsel %vm556, %v539, 0
      %560 = vmatprep.subr.bf16.mxu0 0
      %561 = vmatpush1.bf16.msra.mxu0 %v552
      %562 = vmatprep.subr.bf16.mxu0 0
      %563 = vmatpush1.bf16.msra.mxu0 %v553
      %564 = vmatprep.subr.bf16.mxu0 0
      %565 = vmatpush1.bf16.msra.mxu0 0
      %566 = vmatprep.subr.bf16.mxu0 0
      %567 = vmatpush1.bf16.msra.mxu0 0
      %568 = vmatprep.subr.bf16.mxu0 0
      %569 = vmatpush1.bf16.msra.mxu0 0
      %570 = vmatprep.subr.bf16.mxu0 0
      %571 = vmatpush1.bf16.msra.mxu0 0
      %572 = vmatprep.subr.bf16.mxu0 0
      %573 = vmatpush1.bf16.msra.mxu0 0
      %574 = vmatprep.subr.bf16.mxu0 0
      %575 = vmatpush1.bf16.msra.mxu0 0
      %576 = vmatprep.subr.bf16.mxu0 0
      %577 = vmatpush1.bf16.msra.mxu0 0
      %578 = vmatprep.subr.bf16.mxu0 0
      %579 = vmatpush1.bf16.msra.mxu0 0
      %580 = vmatprep.subr.bf16.mxu0 0
      %581 = vmatpush1.bf16.msra.mxu0 0
      %582 = vmatprep.subr.bf16.mxu0 0
      %583 = vmatpush1.bf16.msra.mxu0 0
      %584 = vmatprep.subr.bf16.mxu0 0
      %585 = vmatpush1.bf16.msra.mxu0 0
      %586 = vmatprep.subr.bf16.mxu0 0
      %587 = vmatpush1.bf16.msra.mxu0 0
      %588 = vmatprep.subr.bf16.mxu0 0
      %589 = vmatpush1.bf16.msra.mxu0 0
      %590 = vmatprep.subr.bf16.mxu0 0
      %591 = vmatpush1.bf16.msra.mxu0 0
      %592 = vmatprep.mubr.bf16.mxu0 0
      %593 = vmatmul.mubr.bf16.gmra.mrb[0].mxu0 %v558
      %v594 = vpop.f32.mrb[0].mxu0
      %v595 = vadd.f32 0.0, %v594
      %v596 = vpop.f32.mrb[0].mxu0
      %v597 = vpop.f32.mrb[0].mxu0
      %v598 = vpop.f32.mrb[0].mxu0
      %599 = vdwg.mxu0
      %v600 = vld [vmem:[%s477] sm:$0xf]
      %v601 = vld [vmem:[%s477 + $0x4] sm:$0xf]
      %v602 = vld [vmem:[%s477 + $0x8] sm:$0xf]
      %v603 = vld [vmem:[%s477 + $0xc] sm:$0xf]
      %v608 = vunpack.c.l.b16 %v600
      %v609 = vunpack.c.l.b16 %v601
      %v610 = vunpack.c.l.b16 %v602
      %v611 = vunpack.c.l.b16 %v603
      %v612 = vpack.c.b16 %v609, %v608
      %v613 = vpack.c.b16 %v611, %v610
      %616 = vmatprep.subr.bf16.mxu0 0
      %617 = vmatpush1.bf16.msra.mxu0 %v612
      %618 = vmatprep.subr.bf16.mxu0 0
      %619 = vmatpush1.bf16.msra.mxu0 %v613
      %620 = vmatprep.subr.bf16.mxu0 0
      %621 = vmatpush1.bf16.msra.mxu0 0
      %622 = vmatprep.subr.bf16.mxu0 0
      %623 = vmatpush1.bf16.msra.mxu0 0
      %624 = vmatprep.subr.bf16.mxu0 0
      %625 = vmatpush1.bf16.msra.mxu0 0
      %626 = vmatprep.subr.bf16.mxu0 0
      %627 = vmatpush1.bf16.msra.mxu0 0
      %628 = vmatprep.subr.bf16.mxu0 0
      %629 = vmatpush1.bf16.msra.mxu0 0
      %630 = vmatprep.subr.bf16.mxu0 0
      %631 = vmatpush1.bf16.msra.mxu0 0
      %632 = vmatprep.subr.bf16.mxu0 0
      %633 = vmatpush1.bf16.msra.mxu0 0
      %634 = vmatprep.subr.bf16.mxu0 0
      %635 = vmatpush1.bf16.msra.mxu0 0
      %636 = vmatprep.subr.bf16.mxu0 0
      %637 = vmatpush1.bf16.msra.mxu0 0
      %638 = vmatprep.subr.bf16.mxu0 0
      %639 = vmatpush1.bf16.msra.mxu0 0
      %640 = vmatprep.subr.bf16.mxu0 0
      %641 = vmatpush1.bf16.msra.mxu0 0
      %642 = vmatprep.subr.bf16.mxu0 0
      %643 = vmatpush1.bf16.msra.mxu0 0
      %644 = vmatprep.subr.bf16.mxu0 0
      %645 = vmatpush1.bf16.msra.mxu0 0
      %646 = vmatprep.subr.bf16.mxu0 0
      %647 = vmatpush1.bf16.msra.mxu0 0
      %648 = vmatprep.mubr.bf16.mxu0 0
      %649 = vmatmul.mubr.bf16.gmra.mrb[0].mxu0 %v558
      %v650 = vpop.f32.mrb[0].mxu0
      %v651 = vadd.f32 0.0, %v650
      %v652 = vpop.f32.mrb[0].mxu0
      %v653 = vpop.f32.mrb[0].mxu0
      %v654 = vpop.f32.mrb[0].mxu0
      %655 = vdwg.mxu0
      %v656 = vld [vmem:[%s481] sm:$0xf]
      %v657 = vld [vmem:[%s481 + $0x4] sm:$0xf]
      %v658 = vld [vmem:[%s481 + $0x8] sm:$0xf]
      %v659 = vld [vmem:[%s481 + $0xc] sm:$0xf]
      %v664 = vunpack.c.l.b16 %v656
      %v665 = vunpack.c.l.b16 %v657
      %v666 = vunpack.c.l.b16 %v658
      %v667 = vunpack.c.l.b16 %v659
      %v668 = vpack.c.b16 %v665, %v664
      %v669 = vpack.c.b16 %v667, %v666
      %672 = vmatprep.subr.bf16.mxu0 0
      %673 = vmatpush1.bf16.msra.mxu0 %v668
      %674 = vmatprep.subr.bf16.mxu0 0
      %675 = vmatpush1.bf16.msra.mxu0 %v669
      %676 = vmatprep.subr.bf16.mxu0 0
      %677 = vmatpush1.bf16.msra.mxu0 0
      %678 = vmatprep.subr.bf16.mxu0 0
      %679 = vmatpush1.bf16.msra.mxu0 0
      %680 = vmatprep.subr.bf16.mxu0 0
      %681 = vmatpush1.bf16.msra.mxu0 0
      %682 = vmatprep.subr.bf16.mxu0 0
      %683 = vmatpush1.bf16.msra.mxu0 0
      %684 = vmatprep.subr.bf16.mxu0 0
      %685 = vmatpush1.bf16.msra.mxu0 0
      %686 = vmatprep.subr.bf16.mxu0 0
      %687 = vmatpush1.bf16.msra.mxu0 0
      %688 = vmatprep.subr.bf16.mxu0 0
      %689 = vmatpush1.bf16.msra.mxu0 0
      %690 = vmatprep.subr.bf16.mxu0 0
      %691 = vmatpush1.bf16.msra.mxu0 0
      %692 = vmatprep.subr.bf16.mxu0 0
      %693 = vmatpush1.bf16.msra.mxu0 0
      %694 = vmatprep.subr.bf16.mxu0 0
      %695 = vmatpush1.bf16.msra.mxu0 0
      %696 = vmatprep.subr.bf16.mxu0 0
      %697 = vmatpush1.bf16.msra.mxu0 0
      %698 = vmatprep.subr.bf16.mxu0 0
      %699 = vmatpush1.bf16.msra.mxu0 0
      %700 = vmatprep.subr.bf16.mxu0 0
      %701 = vmatpush1.bf16.msra.mxu0 0
      %702 = vmatprep.subr.bf16.mxu0 0
      %703 = vmatpush1.bf16.msra.mxu0 0
      %704 = vmatprep.mubr.bf16.mxu0 0
      %705 = vmatmul.mubr.bf16.gmra.mrb[0].mxu0 %v558
      %v706 = vpop.f32.mrb[0].mxu0
      %v707 = vadd.f32 0.0, %v706
      %v708 = vpop.f32.mrb[0].mxu0
      %v709 = vpop.f32.mrb[0].mxu0
      %v710 = vpop.f32.mrb[0].mxu0
      %711 = vdwg.mxu0
      %v712 = vld [vmem:[%s465] sm:$0xff]
      %v713 = vld [vmem:[%s469] sm:$0xff]
      %v714 = vmul.f32 %v595, %v712
      %716 = vrot.lane.b32.xlu0 %v713, 4
      %v717 = vpop.permute.xlu0 %716
      %v719 = vmul.f32 %v595, %v717
      %721 = vrot.lane.b32.xlu0 %v719, 124
      %v722 = vpop.permute.xlu0 %721
      %v724 = vsub.f32 %v714, %v722
      %726 = vrot.lane.b32.xlu0 %v712, 4
      %v727 = vpop.permute.xlu0 %726
      %v729 = vmul.f32 %v595, %v727
      %v730 = vmul.f32 %v595, %v713
      %732 = vrot.lane.b32.xlu0 %v730, 4
      %v733 = vpop.permute.xlu0 %732
      %v735 = vadd.f32 %v729, %v733
      %v736 = vmul.f32 %v651, %v712
      %v737 = vmul.f32 %v651, %v717
      %739 = vrot.lane.b32.xlu0 %v737, 124
      %v740 = vpop.permute.xlu0 %739
      %v742 = vsub.f32 %v736, %v740
      %v743 = vmul.f32 %v651, %v727
      %v744 = vmul.f32 %v651, %v713
      %746 = vrot.lane.b32.xlu0 %v744, 4
      %v747 = vpop.permute.xlu0 %746
      %v749 = vadd.f32 %v743, %v747
      %750 = vrot.lane.b32.xlu0 %v712, 8
      %v751 = vpop.permute.xlu0 %750
      %v753 = vmul.f32 %v595, %v751
      %754 = vrot.lane.b32.xlu0 %v713, 12
      %v755 = vpop.permute.xlu0 %754
      %v757 = vmul.f32 %v595, %v755
      %759 = vrot.lane.b32.xlu0 %v757, 124
      %v760 = vpop.permute.xlu0 %759
      %v762 = vsub.f32 %v753, %v760
      %763 = vrot.lane.b32.xlu0 %v712, 12
      %v764 = vpop.permute.xlu0 %763
      %v766 = vmul.f32 %v595, %v764
      %767 = vrot.lane.b32.xlu0 %v713, 8
      %v768 = vpop.permute.xlu0 %767
      %v770 = vmul.f32 %v595, %v768
      %772 = vrot.lane.b32.xlu0 %v770, 4
      %v773 = vpop.permute.xlu0 %772
      %v775 = vadd.f32 %v766, %v773
      %v776 = vmul.f32 %v651, %v751
      %v777 = vmul.f32 %v651, %v755
      %779 = vrot.lane.b32.xlu0 %v777, 124
      %v780 = vpop.permute.xlu0 %779
      %v782 = vsub.f32 %v776, %v780
      %v783 = vmul.f32 %v651, %v764
      %v784 = vmul.f32 %v651, %v768
      %786 = vrot.lane.b32.xlu0 %v784, 4
      %v787 = vpop.permute.xlu0 %786
      %v789 = vadd.f32 %v783, %v787
      %790 = vrot.lane.b32.xlu0 %v712, 16
      %v791 = vpop.permute.xlu0 %790
      %v793 = vmul.f32 %v595, %v791
      %794 = vrot.lane.b32.xlu0 %v713, 20
      %v795 = vpop.permute.xlu0 %794
      %v797 = vmul.f32 %v595, %v795
      %799 = vrot.lane.b32.xlu0 %v797, 124
      %v800 = vpop.permute.xlu0 %799
      %v802 = vsub.f32 %v793, %v800
      %803 = vrot.lane.b32.xlu0 %v712, 20
      %v804 = vpop.permute.xlu0 %803
      %v806 = vmul.f32 %v595, %v804
      %807 = vrot.lane.b32.xlu0 %v713, 16
      %v808 = vpop.permute.xlu0 %807
      %v810 = vmul.f32 %v595, %v808
      %812 = vrot.lane.b32.xlu0 %v810, 4
      %v813 = vpop.permute.xlu0 %812
      %v815 = vadd.f32 %v806, %v813
      %v816 = vmul.f32 %v651, %v791
      %v817 = vmul.f32 %v651, %v795
      %819 = vrot.lane.b32.xlu0 %v817, 124
      %v820 = vpop.permute.xlu0 %819
      %v822 = vsub.f32 %v816, %v820
      %v823 = vmul.f32 %v651, %v804
      %v824 = vmul.f32 %v651, %v808
      %826 = vrot.lane.b32.xlu0 %v824, 4
      %v827 = vpop.permute.xlu0 %826
      %v829 = vadd.f32 %v823, %v827
      %830 = vrot.lane.b32.xlu0 %v712, 24
      %v831 = vpop.permute.xlu0 %830
      %v833 = vmul.f32 %v595, %v831
      %834 = vrot.lane.b32.xlu0 %v713, 28
      %v835 = vpop.permute.xlu0 %834
      %v837 = vmul.f32 %v595, %v835
      %839 = vrot.lane.b32.xlu0 %v837, 124
      %v840 = vpop.permute.xlu0 %839
      %v842 = vsub.f32 %v833, %v840
      %843 = vrot.lane.b32.xlu0 %v712, 28
      %v844 = vpop.permute.xlu0 %843
      %v846 = vmul.f32 %v595, %v844
      %847 = vrot.lane.b32.xlu0 %v713, 24
      %v848 = vpop.permute.xlu0 %847
      %v850 = vmul.f32 %v595, %v848
      %852 = vrot.lane.b32.xlu0 %v850, 4
      %v853 = vpop.permute.xlu0 %852
      %v855 = vadd.f32 %v846, %v853
      %v856 = vmul.f32 %v651, %v831
      %v857 = vmul.f32 %v651, %v835
      %859 = vrot.lane.b32.xlu0 %v857, 124
      %v860 = vpop.permute.xlu0 %859
      %v862 = vsub.f32 %v856, %v860
      %v863 = vmul.f32 %v651, %v844
      %v864 = vmul.f32 %v651, %v848
      %866 = vrot.lane.b32.xlu0 %v864, 4
      %v867 = vpop.permute.xlu0 %866
      %v869 = vadd.f32 %v863, %v867
      %vm870 = vcmask 31744
      %v871 = vsel %vm870, %v724, %v735
      %vm872 = vcmask 64512
      %v873 = vsel %vm872, %v871, %v762
      %vm874 = vcmask 97280
      %v875 = vsel %vm874, %v873, %v775
      %vm876 = vcmask 130048
      %v877 = vsel %vm876, %v875, %v802
      %vm878 = vcmask 162816
      %v879 = vsel %vm878, %v877, %v815
      %vm880 = vcmask 195584
      %v881 = vsel %vm880, %v879, %v842
      %vm882 = vcmask 228352
      %v883 = vsel %vm882, %v881, %v855
      %v884 = vpack.c.bf16 %v883, %v883
      %vm885 = vcmask 257024
      %886 = vst.msk [vmem:[%s491] sm:$0xf] %vm885, %v884
      %v887 = vsel %vm870, %v742, %v749
      %v888 = vsel %vm872, %v887, %v782
      %v889 = vsel %vm874, %v888, %v789
      %v890 = vsel %vm876, %v889, %v822
      %v891 = vsel %vm878, %v890, %v829
      %v892 = vsel %vm880, %v891, %v862
      %v893 = vsel %vm882, %v892, %v869
      %v894 = vpack.c.bf16 %v893, %v893
      %895 = vst.msk [vmem:[%s501] sm:$0xf] %vm885, %v894
      %v896 = vpack.c.bf16 %v707, %v707
      %897 = vst.msk [vmem:[%s511] sm:$0xf] %vm885, %v896
      %p898 = scmp.lt.s32.totalorder %s26, 1
      %s899 = scalar_select %p898, %s26, 1
      %p900 = scmp.lt.s32.totalorder %s27, 0
      %s901 = scalar_select %p900, %s27, 0
      %p902 = scmp.lt.s32.totalorder %s28, 0
      %s903 = scalar_select %p902, %s28, 0
      %s904 = sadd.s32 %s903, %s901
      %s905 = sadd.s32 %s904, %s899
      %s906 = smul.addr %s905, 4
      %s907 = scalar_lea.vmem %s7, %s906
      %p908 = scmp.lt.s32.totalorder %s26, 1
      %s909 = scalar_select %p908, %s26, 1
      %p910 = scmp.lt.s32.totalorder %s27, 0
      %s911 = scalar_select %p910, %s27, 0
      %p912 = scmp.lt.s32.totalorder %s28, 0
      %s913 = scalar_select %p912, %s28, 0
      %s914 = sadd.s32 %s913, %s911
      %s915 = sadd.s32 %s914, %s909
      %s916 = smul.addr %s915, 4
      %s917 = scalar_lea.vmem %s8, %s916
      %p918 = scmp.lt.s32.totalorder %s26, 1
      %s919 = scalar_select %p918, %s26, 1
      %p920 = scmp.lt.s32.totalorder %s27, 0
      %s921 = scalar_select %p920, %s27, 0
      %p922 = scmp.lt.s32.totalorder %s28, 0
      %s923 = scalar_select %p922, %s28, 0
      %s924 = sadd.s32 %s923, %s921
      %s925 = sadd.s32 %s924, %s919
      %s926 = smul.addr %s925, 4
      %s927 = scalar_lea.vmem %s9, %s926
      // Predicated region
      $region53: #{transformer_block_forward.5} parent=47 // pred_check
        %p928 = pneg %p241
      $region54: #{transformer_block_forward.5} parent=47 // pred_check_branch
        %930 = sbr.rel (%p928) target = $region56
      $region55: #{transformer_block_forward.5} parent=47 // pred_region
        _
      $region56: #{transformer_block_forward.5} parent=47 // pred_fallthru
        _
      // Predicated region
      $region57: #{transformer_block_forward.5} parent=47 // pred_check
        %p931 = pneg %p271
      $region58: #{transformer_block_forward.5} parent=47 // pred_check_branch
        %933 = sbr.rel (%p931) target = $region60
      $region59: #{transformer_block_forward.5} parent=47 // pred_region
        _
      $region60: #{transformer_block_forward.5} parent=47 // pred_fallthru
        _
      // Predicated region
      $region61: #{transformer_block_forward.5} parent=47 // pred_check
        %p934 = pneg %p301
      $region62: #{transformer_block_forward.5} parent=47 // pred_check_branch
        %936 = sbr.rel (%p934) target = $region64
      $region63: #{transformer_block_forward.5} parent=47 // pred_region
        _
      $region64: #{transformer_block_forward.5} parent=47 // pred_fallthru
        _
    $region48: #{transformer_block_forward.5} parent=5 // pred_fallthru
      _
    %p937 = scmp.le.s32.totalorder 2, %s16
    // Predicated region
    $region65: #{transformer_block_forward.5} parent=5 // pred_check
      %p938 = pneg %p937
    $region66: #{transformer_block_forward.5} parent=5 // pred_check_branch
      %940 = sbr.rel (%p938) target = $region68
    $region67: #{transformer_block_forward.5} parent=5 // pred_region
      %s941 = ssub.s32 %s16, 2
      // Predicated region
      $region69: #{transformer_block_forward.5} parent=67 // pred_check
        %p942 = pneg %p247
      $region70: #{transformer_block_forward.5} parent=67 // pred_check_branch
        %944 = sbr.rel (%p942) target = $region72
      $region71: #{transformer_block_forward.5} parent=67 // pred_region
        %p945 = scmp.lt.s32.totalorder %s29, 1
        %s946 = scalar_select %p945, %s29, 1
        %p947 = scmp.lt.s32.totalorder %s30, 0
        %s948 = scalar_select %p947, %s30, 0
        %p949 = scmp.lt.s32.totalorder %s31, 0
        %s950 = scalar_select %p949, %s31, 0
        %s951 = sadd.s32 %s950, %s948
        %s952 = sadd.s32 %s951, %s946
        %s953 = smul.addr %s952, 4
        %s954 = scalar_lea.vmem %s7, %s953
      $region72: #{transformer_block_forward.5} parent=67 // pred_fallthru
        _
      // Predicated region
      $region73: #{transformer_block_forward.5} parent=67 // pred_check
        %p955 = pneg %p277
      $region74: #{transformer_block_forward.5} parent=67 // pred_check_branch
        %957 = sbr.rel (%p955) target = $region76
      $region75: #{transformer_block_forward.5} parent=67 // pred_region
        %p958 = scmp.lt.s32.totalorder %s29, 1
        %s959 = scalar_select %p958, %s29, 1
        %p960 = scmp.lt.s32.totalorder %s30, 0
        %s961 = scalar_select %p960, %s30, 0
        %p962 = scmp.lt.s32.totalorder %s31, 0
        %s963 = scalar_select %p962, %s31, 0
        %s964 = sadd.s32 %s963, %s961
        %s965 = sadd.s32 %s964, %s959
        %s966 = smul.addr %s965, 4
        %s967 = scalar_lea.vmem %s8, %s966
      $region76: #{transformer_block_forward.5} parent=67 // pred_fallthru
        _
      // Predicated region
      $region77: #{transformer_block_forward.5} parent=67 // pred_check
        %p968 = pneg %p307
      $region78: #{transformer_block_forward.5} parent=67 // pred_check_branch
        %970 = sbr.rel (%p968) target = $region80
      $region79: #{transformer_block_forward.5} parent=67 // pred_region
        %p971 = scmp.lt.s32.totalorder %s29, 1
        %s972 = scalar_select %p971, %s29, 1
        %p973 = scmp.lt.s32.totalorder %s30, 0
        %s974 = scalar_select %p973, %s30, 0
        %p975 = scmp.lt.s32.totalorder %s31, 0
        %s976 = scalar_select %p975, %s31, 0
        %s977 = sadd.s32 %s976, %s974
        %s978 = sadd.s32 %s977, %s972
        %s979 = smul.addr %s978, 4
        %s980 = scalar_lea.vmem %s9, %s979
      $region80: #{transformer_block_forward.5} parent=67 // pred_fallthru
        _
    $region68: #{transformer_block_forward.5} parent=5 // pred_fallthru
      _
  $region6: #{transformer_block_forward.5} parent=0 // loop_footer
    %s20 = sadd.s32 1, %s16
  $region7: #{transformer_block_forward.5} parent=0 // loop_footer_branch
    %15 = sbr.rel target = $region3
  $region8: #{transformer_block_forward.5} parent=0 // loop_exit
    _

// kernel: transformer_block_forward.6
$region0: #{transformer_block_forward.6}
  #allocation0 [shape = 'u32[]', space=smem, size = 0x4, offset = 0x4, fixed_abs, tag = 'smem constant byte address 0x4 - core index']
  #allocation1 [shape = 'u32[144,128]{1,0:T(1,128)}', space=vmem, size = 0x12000, scoped, tag = 'internal scratch']
  #allocation2 [shape = 'f32[8,4]{1,0:T(8,128)}', space=vmem, size = 0x1000, scoped, tag = 'scratch operand']
  #allocation3 [shape = 'f32[8,4]{1,0:T(8,128)}', space=vmem, size = 0x1000, scoped, tag = 'scratch operand']
  #allocation4 [shape = 'f32[8,32]{1,0:T(8,128)}', space=vmem, size = 0x1000, scoped, tag = 'scratch operand']
  %s0 = inlined_call_operand.vmem [shape: bf16[2,8,32], index: 0, kind: input, shape index: {}]
  %s1 = inlined_call_operand.vmem [shape: bf16[2,8,32], index: 1, kind: input, shape index: {}]
  %s2 = inlined_call_operand.vmem [shape: bf16[2,8,32], index: 2, kind: input, shape index: {}]
  %s3 = inlined_call_operand.vmem [shape: bf16[2,8,32], index: 3, kind: output, shape index: {}]
  %s4 = sld [smem:[#allocation0]]
  $region53: #{transformer_block_forward.6} parent=0
    _
  %s6 = ssub.s32 1, %s4
  %s7 = scalar_select 0, %s6, %s4
  loop: start=0, step=1, limit=4
  $region2: #{transformer_block_forward.6} parent=0 // loop_pre_header
    _
  $region3: #{transformer_block_forward.6} parent=0 // loop_header
    %s9 = sphi 0, %s13
    %p10 = scmp.ge.s32.totalorder %s9, 4
    %s16 = sphi 0, %s35
    %s17 = sphi 0, %s31
    %s18 = sphi 0, %s27
    %s19 = sphi 0, %s16
    %s20 = sphi 0, %s17
    %s21 = sphi 0, %s18
    %s22 = sphi 0, %s19
    %s23 = sphi 0, %s20
    %s24 = sphi 0, %s21
    %s40 = sphi 0, %s42
    %s43 = sphi 0, %s40
    %s44 = sphi 0, %s43
    %s60 = sphi 0, %s44
    %s68 = sphi 0, %s70
    %s71 = sphi 0, %s68
    %s72 = sphi 0, %s71
    %s88 = sphi 0, %s72
    %s96 = sphi 0, %s98
    %s99 = sphi 0, %s96
    %s100 = sphi 0, %s99
    %s116 = sphi 0, %s100
    %s124 = sphi 0, %s126
    %s127 = sphi 0, %s124
    %s128 = sphi 0, %s127
    %s144 = sphi 0, %s128
  $region4: #{transformer_block_forward.6} parent=0 // loop_header_branch
    %12 = sbr.rel (%p10) target = $region8
  $region5: #{transformer_block_forward.6} parent=0 // loop_body
    %s14 = ssub.s32 %s9, 1
    %s15 = ssub.s32 %s9, 2
    %s25 = sadd.s32 1, %s18
    %p26 = scmp.ge.s32.totalorder %s25, 1
    %s27 = scalar_select %p26, 0, %s25
    %s28 = sadd.s32 1, %s17
    %s29 = scalar_select %p26, %s28, %s17
    %p30 = scmp.ge.s32.totalorder %s29, 1
    %s31 = scalar_select %p30, 0, %s29
    %s32 = sadd.s32 1, %s16
    %s33 = scalar_select %p30, %s32, %s16
    %p34 = scmp.ge.s32.totalorder %s33, 2
    %s35 = scalar_select %p34, 0, %s33
    %s36 = ssub.s32 %s16, %s35
    %s37 = ssub.s32 %s17, %s31
    %s38 = sor.u32 %s36, %s37
    %p39 = scmp.eq.s32.totalorder %s38, 0
    %s41 = sadd.s32 %s40, 1
    %s42 = scalar_select %p39, %s40, %s41
    %p45 = pneg %p39
    %p46 = scmp.eq.s32.totalorder %s9, 1
    %p47 = por %p45, %p46
    %p48 = scmp.ne.s32.totalorder %s40, %s43
    %p49 = scmp.eq.s32.totalorder %s9, 0
    %p50 = por %p48, %p49
    %p51 = scmp.ne.s32.totalorder %s40, %s43
    %p52 = scmp.eq.s32.totalorder %s14, 1
    %p53 = por %p51, %p52
    %p54 = scmp.ne.s32.totalorder %s43, %s44
    %p55 = scmp.eq.s32.totalorder %s14, 0
    %p56 = por %p54, %p55
    %p57 = scmp.ne.s32.totalorder %s43, %s44
    %p58 = scmp.eq.s32.totalorder %s15, 1
    %p59 = por %p57, %p58
    %p61 = scmp.ne.s32.totalorder %s44, %s60
    %p62 = scmp.eq.s32.totalorder %s15, 0
    %p63 = por %p61, %p62
    %s64 = ssub.s32 %s16, %s35
    %s65 = ssub.s32 %s18, %s27
    %s66 = sor.u32 %s64, %s65
    %p67 = scmp.eq.s32.totalorder %s66, 0
    %s69 = sadd.s32 %s68, 1
    %s70 = scalar_select %p67, %s68, %s69
    %p73 = pneg %p67
    %p74 = scmp.eq.s32.totalorder %s9, 1
    %p75 = por %p73, %p74
    %p76 = scmp.ne.s32.totalorder %s68, %s71
    %p77 = scmp.eq.s32.totalorder %s9, 0
    %p78 = por %p76, %p77
    %p79 = scmp.ne.s32.totalorder %s68, %s71
    %p80 = scmp.eq.s32.totalorder %s14, 1
    %p81 = por %p79, %p80
    %p82 = scmp.ne.s32.totalorder %s71, %s72
    %p83 = scmp.eq.s32.totalorder %s14, 0
    %p84 = por %p82, %p83
    %p85 = scmp.ne.s32.totalorder %s71, %s72
    %p86 = scmp.eq.s32.totalorder %s15, 1
    %p87 = por %p85, %p86
    %p89 = scmp.ne.s32.totalorder %s72, %s88
    %p90 = scmp.eq.s32.totalorder %s15, 0
    %p91 = por %p89, %p90
    %s92 = ssub.s32 %s16, %s35
    %s93 = ssub.s32 %s18, %s27
    %s94 = sor.u32 %s92, %s93
    %p95 = scmp.eq.s32.totalorder %s94, 0
    %s97 = sadd.s32 %s96, 1
    %s98 = scalar_select %p95, %s96, %s97
    %p101 = pneg %p95
    %p102 = scmp.eq.s32.totalorder %s9, 1
    %p103 = por %p101, %p102
    %p104 = scmp.ne.s32.totalorder %s96, %s99
    %p105 = scmp.eq.s32.totalorder %s9, 0
    %p106 = por %p104, %p105
    %p107 = scmp.ne.s32.totalorder %s96, %s99
    %p108 = scmp.eq.s32.totalorder %s14, 1
    %p109 = por %p107, %p108
    %p110 = scmp.ne.s32.totalorder %s99, %s100
    %p111 = scmp.eq.s32.totalorder %s14, 0
    %p112 = por %p110, %p111
    %p113 = scmp.ne.s32.totalorder %s99, %s100
    %p114 = scmp.eq.s32.totalorder %s15, 1
    %p115 = por %p113, %p114
    %p117 = scmp.ne.s32.totalorder %s100, %s116
    %p118 = scmp.eq.s32.totalorder %s15, 0
    %p119 = por %p117, %p118
    %s120 = ssub.s32 %s16, %s35
    %s121 = ssub.s32 %s17, %s31
    %s122 = sor.u32 %s120, %s121
    %p123 = scmp.eq.s32.totalorder %s122, 0
    %s125 = sadd.s32 %s124, 1
    %s126 = scalar_select %p123, %s124, %s125
    %p129 = pneg %p123
    %p130 = scmp.eq.s32.totalorder %s9, 1
    %p131 = por %p129, %p130
    %p132 = scmp.ne.s32.totalorder %s124, %s127
    %p133 = scmp.eq.s32.totalorder %s9, 0
    %p134 = por %p132, %p133
    %p135 = scmp.ne.s32.totalorder %s124, %s127
    %p136 = scmp.eq.s32.totalorder %s14, 1
    %p137 = por %p135, %p136
    %p138 = scmp.ne.s32.totalorder %s127, %s128
    %p139 = scmp.eq.s32.totalorder %s14, 0
    %p140 = por %p138, %p139
    %p141 = scmp.ne.s32.totalorder %s127, %s128
    %p142 = scmp.eq.s32.totalorder %s15, 1
    %p143 = por %p141, %p142
    %p145 = scmp.ne.s32.totalorder %s128, %s144
    %p146 = scmp.eq.s32.totalorder %s15, 0
    %p147 = por %p145, %p146
    %p148 = scmp.le.s32.totalorder 1, %s9
    %p149 = scmp.lt.s32.totalorder %s9, 3
    %p150 = pnand %p148, %p149
    %p151 = pneg %p150
    // Predicated region
    $region9: #{transformer_block_forward.6} parent=5 // pred_check
      _
    $region10: #{transformer_block_forward.6} parent=5 // pred_check_branch
      %153 = sbr.rel (%p150) target = $region12
    $region11: #{transformer_block_forward.6} parent=5 // pred_region
      %s154 = ssub.s32 %s9, 1
    $region12: #{transformer_block_forward.6} parent=5 // pred_fallthru
      _
    %p155 = scmp.lt.s32.totalorder %s9, 2
    // Predicated region
    $region13: #{transformer_block_forward.6} parent=5 // pred_check
      %p156 = pneg %p155
    $region14: #{transformer_block_forward.6} parent=5 // pred_check_branch
      %158 = sbr.rel (%p156) target = $region16
    $region15: #{transformer_block_forward.6} parent=5 // pred_region
      // Predicated region
      $region17: #{transformer_block_forward.6} parent=15 // pred_check
        %p159 = pneg %p50
      $region18: #{transformer_block_forward.6} parent=15 // pred_check_branch
        %161 = sbr.rel (%p159) target = $region20
      $region19: #{transformer_block_forward.6} parent=15 // pred_region
        %p162 = scmp.lt.s32.totalorder %s16, 1
        %s163 = scalar_select %p162, %s16, 1
        %p164 = scmp.lt.s32.totalorder %s17, 0
        %s165 = scalar_select %p164, %s17, 0
        %s166 = sadd.s32 %s165, %s163
        %s167 = smul.addr %s166, 4
        %s168 = scalar_lea.vmem %s0, %s167
      $region20: #{transformer_block_forward.6} parent=15 // pred_fallthru
        _
      // Predicated region
      $region21: #{transformer_block_forward.6} parent=15 // pred_check
        %p169 = pneg %p78
      $region22: #{transformer_block_forward.6} parent=15 // pred_check_branch
        %171 = sbr.rel (%p169) target = $region24
      $region23: #{transformer_block_forward.6} parent=15 // pred_region
        %p172 = scmp.lt.s32.totalorder %s16, 1
        %s173 = scalar_select %p172, %s16, 1
        %p174 = scmp.lt.s32.totalorder %s18, 0
        %s175 = scalar_select %p174, %s18, 0
        %s176 = sadd.s32 %s175, %s173
        %s177 = smul.addr %s176, 4
        %s178 = scalar_lea.vmem %s1, %s177
      $region24: #{transformer_block_forward.6} parent=15 // pred_fallthru
        _
      // Predicated region
      $region25: #{transformer_block_forward.6} parent=15 // pred_check
        %p179 = pneg %p106
      $region26: #{transformer_block_forward.6} parent=15 // pred_check_branch
        %181 = sbr.rel (%p179) target = $region28
      $region27: #{transformer_block_forward.6} parent=15 // pred_region
        %p182 = scmp.lt.s32.totalorder %s16, 1
        %s183 = scalar_select %p182, %s16, 1
        %p184 = scmp.lt.s32.totalorder %s18, 0
        %s185 = scalar_select %p184, %s18, 0
        %s186 = sadd.s32 %s185, %s183
        %s187 = smul.addr %s186, 4
        %s188 = scalar_lea.vmem %s2, %s187
      $region28: #{transformer_block_forward.6} parent=15 // pred_fallthru
        _
    $region16: #{transformer_block_forward.6} parent=5 // pred_fallthru
      _
    %p189 = scmp.le.s32.totalorder 1, %s9
    %p190 = scmp.lt.s32.totalorder %s9, 3
    %p191 = pnand %p189, %p190
    %p192 = pneg %p191
    // Predicated region
    $region29: #{transformer_block_forward.6} parent=5 // pred_check
      _
    $region30: #{transformer_block_forward.6} parent=5 // pred_check_branch
      %194 = sbr.rel (%p191) target = $region32
    $region31: #{transformer_block_forward.6} parent=5 // pred_region
      %s195 = ssub.s32 %s9, 1
      %p196 = scmp.lt.s32.totalorder %s19, 1
      %s197 = scalar_select %p196, %s19, 1
      %p198 = scmp.lt.s32.totalorder %s20, 0
      %s199 = scalar_select %p198, %s20, 0
      %s200 = sadd.s32 %s199, %s197
      %s201 = smul.addr %s200, 4
      %s202 = scalar_lea.vmem %s0, %s201
      %p203 = pneg %p56
      %p204 = pneg %p53
      %p205 = scmp.lt.s32.totalorder %s19, 1
      %s206 = scalar_select %p205, %s19, 1
      %p207 = scmp.lt.s32.totalorder %s21, 0
      %s208 = scalar_select %p207, %s21, 0
      %s209 = sadd.s32 %s208, %s206
      %s210 = smul.addr %s209, 4
      %s211 = scalar_lea.vmem %s1, %s210
      %p212 = pneg %p84
      %p213 = pneg %p81
      %p214 = scmp.lt.s32.totalorder %s19, 1
      %s215 = scalar_select %p214, %s19, 1
      %p216 = scmp.lt.s32.totalorder %s21, 0
      %s217 = scalar_select %p216, %s21, 0
      %s218 = sadd.s32 %s217, %s215
      %s219 = smul.addr %s218, 4
      %s220 = scalar_lea.vmem %s2, %s219
      %p221 = pneg %p112
      %p222 = pneg %p109
      %p223 = pneg %p140
      %p224 = pneg %p137
      %p225 = scmp.lt.s32.totalorder %s19, 1
      %s226 = scalar_select %p225, %s19, 1
      %p227 = scmp.lt.s32.totalorder %s20, 0
      %s228 = scalar_select %p227, %s20, 0
      %s229 = sadd.s32 %s228, %s226
      %s230 = smul.addr %s229, 4
      %s231 = scalar_lea.vmem %s3, %s230
      %p232 = scmp.lt.s32.totalorder %s19, 1
      %s233 = scalar_select %p232, %s19, 1
      %p234 = scmp.lt.s32.totalorder %s20, 0
      %s235 = scalar_select %p234, %s20, 0
      %s236 = sadd.s32 %s235, %s233
      %s237 = smul.addr %s236, 4
      %s238 = scalar_lea.vmem %s0, %s237
      %p239 = scmp.lt.s32.totalorder %s19, 1
      %s240 = scalar_select %p239, %s19, 1
      %p241 = scmp.lt.s32.totalorder %s21, 0
      %s242 = scalar_select %p241, %s21, 0
      %s243 = sadd.s32 %s242, %s240
      %s244 = smul.addr %s243, 4
      %s245 = scalar_lea.vmem %s1, %s244
      %p246 = scmp.lt.s32.totalorder %s19, 1
      %s247 = scalar_select %p246, %s19, 1
      %p248 = scmp.lt.s32.totalorder %s21, 0
      %s249 = scalar_select %p248, %s21, 0
      %s250 = sadd.s32 %s249, %s247
      %s251 = smul.addr %s250, 4
      %s252 = scalar_lea.vmem %s2, %s251
      %p253 = scmp.lt.s32.totalorder %s19, 1
      %s254 = scalar_select %p253, %s19, 1
      %p255 = scmp.lt.s32.totalorder %s20, 0
      %s256 = scalar_select %p255, %s20, 0
      %s257 = sadd.s32 %s256, %s254
      %s258 = smul.addr %s257, 4
      %s259 = scalar_lea.vmem %s3, %s258
      %p261 = scmp.eq.s32.totalorder %s21, 0
      // Predicated region
      $region33: #{transformer_block_forward.6} parent=31 // pred_check
        %p262 = pneg %p261
      $region34: #{transformer_block_forward.6} parent=31 // pred_check_branch
        %264 = sbr.rel (%p262) target = $region36
      $region35: #{transformer_block_forward.6} parent=31 // pred_region
        %vm265 = vcmask 31744
        %266 = vst.msk [vmem:[#allocation2] sm:$0xff] %vm265, -inf
        %267 = vst.msk [vmem:[#allocation3] sm:$0xff] %vm265, 0.0
        %vm268 = vcmask 261120
        %269 = vst.msk [vmem:[#allocation4] sm:$0xff] %vm268, 0.0
      $region36: #{transformer_block_forward.6} parent=31 // pred_fallthru
        _
      %v270 = vld [vmem:[%s238] sm:$0xf]
      %v271 = vld [vmem:[%s245] sm:$0xf]
      %vm272 = vcmask 64512
      %v274 = vsel %vm272, %v270, 0
      %v277 = vsel %vm272, %v271, 0
      %279 = vmatprep.subr.bf16.mxu0 0
      %280 = vmatpush1.bf16.xpose.msra.mxu0 %v277
      %281 = vmatprep.subr.bf16.mxu0 0
      %282 = vmatpush1.bf16.xpose.msra.mxu0 0
      %283 = vmatprep.subr.bf16.mxu0 0
      %284 = vmatpush1.bf16.xpose.msra.mxu0 0
      %285 = vmatprep.subr.bf16.mxu0 0
      %286 = vmatpush1.bf16.xpose.msra.mxu0 0
      %287 = vmatprep.subr.bf16.mxu0 0
      %288 = vmatpush1.bf16.xpose.msra.mxu0 0
      %289 = vmatprep.subr.bf16.mxu0 0
      %290 = vmatpush1.bf16.xpose.msra.mxu0 0
      %291 = vmatprep.subr.bf16.mxu0 0
      %292 = vmatpush1.bf16.xpose.msra.mxu0 0
      %293 = vmatprep.subr.bf16.mxu0 0
      %294 = vmatpush1.bf16.xpose.msra.mxu0 0
      %295 = vmatprep.subr.bf16.mxu0 0
      %296 = vmatpush1.bf16.xpose.msra.mxu0 0
      %297 = vmatprep.subr.bf16.mxu0 0
      %298 = vmatpush1.bf16.xpose.msra.mxu0 0
      %299 = vmatprep.subr.bf16.mxu0 0
      %300 = vmatpush1.bf16.xpose.msra.mxu0 0
      %301 = vmatprep.subr.bf16.mxu0 0
      %302 = vmatpush1.bf16.xpose.msra.mxu0 0
      %303 = vmatprep.subr.bf16.mxu0 0
      %304 = vmatpush1.bf16.xpose.msra.mxu0 0
      %305 = vmatprep.subr.bf16.mxu0 0
      %306 = vmatpush1.bf16.xpose.msra.mxu0 0
      %307 = vmatprep.subr.bf16.mxu0 0
      %308 = vmatpush1.bf16.xpose.msra.mxu0 0
      %309 = vmatprep.subr.bf16.mxu0 0
      %310 = vmatpush1.bf16.xpose.msra.mxu0 0
      %311 = vmatprep.mubr.bf16.mxu0 0
      %312 = vmatmul.mubr.bf16.gmra.mrb[0].mxu0 %v274
      %v313 = vpop.f32.mrb[0].mxu0
      %v314 = vadd.f32 0.0, %v313
      %v315 = vpop.f32.mrb[0].mxu0
      %v316 = vpop.f32.mrb[0].mxu0
      %v317 = vpop.f32.mrb[0].mxu0
      %318 = vdwg.mxu0
      %v319 = vld [vmem:[#allocation2] sm:$0xff]
      %v320 = vld [vmem:[#allocation3] sm:$0xff]
      %v321 = vsel %vm272, %v314, -inf
      %322 = vmax.xlane.f32.xlu0 %v321
      %v323 = vpop.xlane.xlu0 %322
      %v324 = vmax.f32 %v319, %v323
      %v325 = vsub.f32 %v319, %v324
      %v326 = vmul.f32 %v325, 1.442695
      %v327 = vpow.pop %v326
      %329 = vset.pattern.permute.xlu0 0
      %330 = vperm.xlu0 %329, %v324
      %v331 = vpop.permute.xlu0 %330
      %v333 = vsub.f32 %v314, %v331
      %v334 = vmul.f32 %v333, 1.442695
      %v335 = vpow.pop %v334
      %v336 = vmul.f32 %v327, %v320
      %v337 = vsel %vm272, %v335, 0.0
      %338 = vadd.xlane.f32.xlu0 %v337
      %v339 = vpop.xlane.xlu0 %338
      %v340 = vadd.f32 %v336, %v339
      %vm341 = vcmask 7168
      %342 = vst.msk [vmem:[#allocation3] sm:$0xff] %vm341, %v340
      %343 = vst.msk [vmem:[#allocation2] sm:$0xff] %vm341, %v324
      %v344 = vpack.c.bf16 %v335, %v335
      %v345 = vld [vmem:[%s252] sm:$0xf]
      %v347 = vsel %vm272, %v344, 0
      %vm349 = vcmask 1043456
      %v351 = vsel %vm349, %v345, 0
      %353 = vmatprep.subr.bf16.mxu0 0
      %354 = vmatpush1.bf16.msra.mxu0 %v351
      %355 = vmatprep.subr.bf16.mxu0 0
      %356 = vmatpush1.bf16.msra.mxu0 0
      %357 = vmatprep.subr.bf16.mxu0 0
      %358 = vmatpush1.bf16.msra.mxu0 0
      %359 = vmatprep.subr.bf16.mxu0 0
      %360 = vmatpush1.bf16.msra.mxu0 0
      %361 = vmatprep.subr.bf16.mxu0 0
      %362 = vmatpush1.bf16.msra.mxu0 0
      %363 = vmatprep.subr.bf16.mxu0 0
      %364 = vmatpush1.bf16.msra.mxu0 0
      %365 = vmatprep.subr.bf16.mxu0 0
      %366 = vmatpush1.bf16.msra.mxu0 0
      %367 = vmatprep.subr.bf16.mxu0 0
      %368 = vmatpush1.bf16.msra.mxu0 0
      %369 = vmatprep.subr.bf16.mxu0 0
      %370 = vmatpush1.bf16.msra.mxu0 0
      %371 = vmatprep.subr.bf16.mxu0 0
      %372 = vmatpush1.bf16.msra.mxu0 0
      %373 = vmatprep.subr.bf16.mxu0 0
      %374 = vmatpush1.bf16.msra.mxu0 0
      %375 = vmatprep.subr.bf16.mxu0 0
      %376 = vmatpush1.bf16.msra.mxu0 0
      %377 = vmatprep.subr.bf16.mxu0 0
      %378 = vmatpush1.bf16.msra.mxu0 0
      %379 = vmatprep.subr.bf16.mxu0 0
      %380 = vmatpush1.bf16.msra.mxu0 0
      %381 = vmatprep.subr.bf16.mxu0 0
      %382 = vmatpush1.bf16.msra.mxu0 0
      %383 = vmatprep.subr.bf16.mxu0 0
      %384 = vmatpush1.bf16.msra.mxu0 0
      %385 = vmatprep.mubr.bf16.mxu0 0
      %386 = vmatmul.mubr.bf16.gmra.mrb[0].mxu0 %v347
      %v387 = vpop.f32.mrb[0].mxu0
      %v388 = vadd.f32 0.0, %v387
      %v389 = vpop.f32.mrb[0].mxu0
      %v390 = vpop.f32.mrb[0].mxu0
      %v391 = vpop.f32.mrb[0].mxu0
      %392 = vdwg.mxu0
      %v393 = vld [vmem:[#allocation4] sm:$0xff]
      %395 = vset.pattern.permute.xlu0 0
      %396 = vperm.xlu0 %395, %v327
      %v397 = vpop.permute.xlu0 %396
      %v399 = vmul.f32 %v397, %v393
      %v400 = vadd.f32 %v399, %v388
      %401 = vst.msk [vmem:[#allocation4] sm:$0xff] %vm272, %v400
      %v402 = vld [vmem:[%s238] sm:$0xf]
      %v403 = vld [vmem:[%s245] sm:$0xf]
      %v405 = vunpack.c.l.b16 %v402
      %v406 = vpack.c.b16 %v405, %v405
      %407 = vrot.lane.b32.xlu0 %v406, 120
      %v408 = vpop.permute.xlu0 %407
      %v410 = vunpack.c.l.b16 %v403
      %v411 = vpack.c.b16 %v410, %v410
      %412 = vrot.lane.b32.xlu0 %v411, 120
      %v413 = vpop.permute.xlu0 %412
      %v415 = vsel %vm272, %v408, 0
      %v418 = vsel %vm272, %v413, 0
      %420 = vmatprep.subr.bf16.mxu0 0
      %421 = vmatpush1.bf16.xpose.msra.mxu0 %v418
      %422 = vmatprep.subr.bf16.mxu0 0
      %423 = vmatpush1.bf16.xpose.msra.mxu0 0
      %424 = vmatprep.subr.bf16.mxu0 0
      %425 = vmatpush1.bf16.xpose.msra.mxu0 0
      %426 = vmatprep.subr.bf16.mxu0 0
      %427 = vmatpush1.bf16.xpose.msra.mxu0 0
      %428 = vmatprep.subr.bf16.mxu0 0
      %429 = vmatpush1.bf16.xpose.msra.mxu0 0
      %430 = vmatprep.subr.bf16.mxu0 0
      %431 = vmatpush1.bf16.xpose.msra.mxu0 0
      %432 = vmatprep.subr.bf16.mxu0 0
      %433 = vmatpush1.bf16.xpose.msra.mxu0 0
      %434 = vmatprep.subr.bf16.mxu0 0
      %435 = vmatpush1.bf16.xpose.msra.mxu0 0
      %436 = vmatprep.subr.bf16.mxu0 0
      %437 = vmatpush1.bf16.xpose.msra.mxu0 0
      %438 = vmatprep.subr.bf16.mxu0 0
      %439 = vmatpush1.bf16.xpose.msra.mxu0 0
      %440 = vmatprep.subr.bf16.mxu0 0
      %441 = vmatpush1.bf16.xpose.msra.mxu0 0
      %442 = vmatprep.subr.bf16.mxu0 0
      %443 = vmatpush1.bf16.xpose.msra.mxu0 0
      %444 = vmatprep.subr.bf16.mxu0 0
      %445 = vmatpush1.bf16.xpose.msra.mxu0 0
      %446 = vmatprep.subr.bf16.mxu0 0
      %447 = vmatpush1.bf16.xpose.msra.mxu0 0
      %448 = vmatprep.subr.bf16.mxu0 0
      %449 = vmatpush1.bf16.xpose.msra.mxu0 0
      %450 = vmatprep.subr.bf16.mxu0 0
      %451 = vmatpush1.bf16.xpose.msra.mxu0 0
      %452 = vmatprep.mubr.bf16.mxu0 0
      %453 = vmatmul.mubr.bf16.gmra.mrb[0].mxu0 %v415
      %v454 = vpop.f32.mrb[0].mxu0
      %v455 = vadd.f32 0.0, %v454
      %v456 = vpop.f32.mrb[0].mxu0
      %v457 = vpop.f32.mrb[0].mxu0
      %v458 = vpop.f32.mrb[0].mxu0
      %459 = vdwg.mxu0
      %v460 = vld [vmem:[#allocation2] sm:$0xff]
      %v461 = vld [vmem:[#allocation3] sm:$0xff]
      %v462 = vsel %vm272, %v455, -inf
      %463 = vmax.xlane.f32.xlu0 %v462
      %v464 = vpop.xlane.xlu0 %463
      %v465 = vmax.f32 %v460, %v464
      %v466 = vsub.f32 %v460, %v465
      %v467 = vmul.f32 %v466, 1.442695
      %v468 = vpow.pop %v467
      %470 = vset.pattern.permute.xlu0 1
      %471 = vperm.xlu0 %470, %v465
      %v472 = vpop.permute.xlu0 %471
      %v474 = vsub.f32 %v455, %v472
      %v475 = vmul.f32 %v474, 1.442695
      %v476 = vpow.pop %v475
      %v477 = vmul.f32 %v468, %v461
      %v478 = vsel %vm272, %v476, 0.0
      %479 = vadd.xlane.f32.xlu0 %v478
      %v480 = vpop.xlane.xlu0 %479
      %v481 = vadd.f32 %v477, %v480
      %vm482 = vcmask 15368
      %483 = vst.msk [vmem:[#allocation3] sm:$0xff] %vm482, %v481
      %484 = vst.msk [vmem:[#allocation2] sm:$0xff] %vm482, %v465
      %v485 = vpack.c.bf16 %v476, %v476
      %v486 = vld [vmem:[%s252] sm:$0xf]
      %v488 = vunpack.c.l.b16 %v486
      %v489 = vpack.c.b16 %v488, %v488
      %490 = vrot.lane.b32.xlu0 %v489, 120
      %v491 = vpop.permute.xlu0 %490
      %v493 = vsel %vm272, %v485, 0
      %v496 = vsel %vm349, %v491, 0
      %498 = vmatprep.subr.bf16.mxu0 0
      %499 = vmatpush1.bf16.msra.mxu0 %v496
      %500 = vmatprep.subr.bf16.mxu0 0
      %501 = vmatpush1.bf16.msra.mxu0 0
      %502 = vmatprep.subr.bf16.mxu0 0
      %503 = vmatpush1.bf16.msra.mxu0 0
      %504 = vmatprep.subr.bf16.mxu0 0
      %505 = vmatpush1.bf16.msra.mxu0 0
      %506 = vmatprep.subr.bf16.mxu0 0
      %507 = vmatpush1.bf16.msra.mxu0 0
      %508 = vmatprep.subr.bf16.mxu0 0
      %509 = vmatpush1.bf16.msra.mxu0 0
      %510 = vmatprep.subr.bf16.mxu0 0
      %511 = vmatpush1.bf16.msra.mxu0 0
      %512 = vmatprep.subr.bf16.mxu0 0
      %513 = vmatpush1.bf16.msra.mxu0 0
      %514 = vmatprep.subr.bf16.mxu0 0
      %515 = vmatpush1.bf16.msra.mxu0 0
      %516 = vmatprep.subr.bf16.mxu0 0
      %517 = vmatpush1.bf16.msra.mxu0 0
      %518 = vmatprep.subr.bf16.mxu0 0
      %519 = vmatpush1.bf16.msra.mxu0 0
      %520 = vmatprep.subr.bf16.mxu0 0
      %521 = vmatpush1.bf16.msra.mxu0 0
      %522 = vmatprep.subr.bf16.mxu0 0
      %523 = vmatpush1.bf16.msra.mxu0 0
      %524 = vmatprep.subr.bf16.mxu0 0
      %525 = vmatpush1.bf16.msra.mxu0 0
      %526 = vmatprep.subr.bf16.mxu0 0
      %527 = vmatpush1.bf16.msra.mxu0 0
      %528 = vmatprep.subr.bf16.mxu0 0
      %529 = vmatpush1.bf16.msra.mxu0 0
      %530 = vmatprep.mubr.bf16.mxu0 0
      %531 = vmatmul.mubr.bf16.gmra.mrb[0].mxu0 %v493
      %v532 = vpop.f32.mrb[0].mxu0
      %v533 = vadd.f32 0.0, %v532
      %v534 = vpop.f32.mrb[0].mxu0
      %v535 = vpop.f32.mrb[0].mxu0
      %v536 = vpop.f32.mrb[0].mxu0
      %537 = vdwg.mxu0
      %v538 = vld [vmem:[#allocation4] sm:$0xff]
      %540 = vset.pattern.permute.xlu0 1
      %541 = vperm.xlu0 %540, %v468
      %v542 = vpop.permute.xlu0 %541
      %v544 = vmul.f32 %v542, %v538
      %546 = vrot.lane.b32.xlu0 %v533, 8
      %v547 = vpop.permute.xlu0 %546
      %v549 = vadd.f32 %v544, %v547
      %vm550 = vcmask 130112
      %551 = vst.msk [vmem:[#allocation4] sm:$0xff] %vm550, %v549
      %v552 = vld [vmem:[%s238] sm:$0xf]
      %v553 = vld [vmem:[%s245] sm:$0xf]
      %v555 = vunpack.c.l.b16 %v552
      %v556 = vpack.c.b16 %v555, %v555
      %557 = vrot.lane.b32.xlu0 %v556, 112
      %v558 = vpop.permute.xlu0 %557
      %v560 = vunpack.c.l.b16 %v553
      %v561 = vpack.c.b16 %v560, %v560
      %562 = vrot.lane.b32.xlu0 %v561, 112
      %v563 = vpop.permute.xlu0 %562
      %v565 = vsel %vm272, %v558, 0
      %v568 = vsel %vm272, %v563, 0
      %570 = vmatprep.subr.bf16.mxu0 0
      %571 = vmatpush1.bf16.xpose.msra.mxu0 %v568
      %572 = vmatprep.subr.bf16.mxu0 0
      %573 = vmatpush1.bf16.xpose.msra.mxu0 0
      %574 = vmatprep.subr.bf16.mxu0 0
      %575 = vmatpush1.bf16.xpose.msra.mxu0 0
      %576 = vmatprep.subr.bf16.mxu0 0
      %577 = vmatpush1.bf16.xpose.msra.mxu0 0
      %578 = vmatprep.subr.bf16.mxu0 0
      %579 = vmatpush1.bf16.xpose.msra.mxu0 0
      %580 = vmatprep.subr.bf16.mxu0 0
      %581 = vmatpush1.bf16.xpose.msra.mxu0 0
      %582 = vmatprep.subr.bf16.mxu0 0
      %583 = vmatpush1.bf16.xpose.msra.mxu0 0
      %584 = vmatprep.subr.bf16.mxu0 0
      %585 = vmatpush1.bf16.xpose.msra.mxu0 0
      %586 = vmatprep.subr.bf16.mxu0 0
      %587 = vmatpush1.bf16.xpose.msra.mxu0 0
      %588 = vmatprep.subr.bf16.mxu0 0
      %589 = vmatpush1.bf16.xpose.msra.mxu0 0
      %590 = vmatprep.subr.bf16.mxu0 0
      %591 = vmatpush1.bf16.xpose.msra.mxu0 0
      %592 = vmatprep.subr.bf16.mxu0 0
      %593 = vmatpush1.bf16.xpose.msra.mxu0 0
      %594 = vmatprep.subr.bf16.mxu0 0
      %595 = vmatpush1.bf16.xpose.msra.mxu0 0
      %596 = vmatprep.subr.bf16.mxu0 0
      %597 = vmatpush1.bf16.xpose.msra.mxu0 0
      %598 = vmatprep.subr.bf16.mxu0 0
      %599 = vmatpush1.bf16.xpose.msra.mxu0 0
      %600 = vmatprep.subr.bf16.mxu0 0
      %601 = vmatpush1.bf16.xpose.msra.mxu0 0
      %602 = vmatprep.mubr.bf16.mxu0 0
      %603 = vmatmul.mubr.bf16.gmra.mrb[0].mxu0 %v565
      %v604 = vpop.f32.mrb[0].mxu0
      %v605 = vadd.f32 0.0, %v604
      %v606 = vpop.f32.mrb[0].mxu0
      %v607 = vpop.f32.mrb[0].mxu0
      %v608 = vpop.f32.mrb[0].mxu0
      %609 = vdwg.mxu0
      %v610 = vld [vmem:[#allocation2] sm:$0xff]
      %v611 = vld [vmem:[#allocation3] sm:$0xff]
      %v612 = vsel %vm272, %v605, -inf
      %613 = vmax.xlane.f32.xlu0 %v612
      %v614 = vpop.xlane.xlu0 %613
      %v615 = vmax.f32 %v610, %v614
      %v616 = vsub.f32 %v610, %v615
      %v617 = vmul.f32 %v616, 1.442695
      %v618 = vpow.pop %v617
      %620 = vset.pattern.permute.xlu0 2
      %621 = vperm.xlu0 %620, %v615
      %v622 = vpop.permute.xlu0 %621
      %v624 = vsub.f32 %v605, %v622
      %v625 = vmul.f32 %v624, 1.442695
      %v626 = vpow.pop %v625
      %v627 = vmul.f32 %v618, %v611
      %v628 = vsel %vm272, %v626, 0.0
      %629 = vadd.xlane.f32.xlu0 %v628
      %v630 = vpop.xlane.xlu0 %629
      %v631 = vadd.f32 %v627, %v630
      %vm632 = vcmask 23568
      %633 = vst.msk [vmem:[#allocation3] sm:$0xff] %vm632, %v631
      %634 = vst.msk [vmem:[#allocation2] sm:$0xff] %vm632, %v615
      %v635 = vpack.c.bf16 %v626, %v626
      %v636 = vld [vmem:[%s252] sm:$0xf]
      %v638 = vunpack.c.l.b16 %v636
      %v639 = vpack.c.b16 %v638, %v638
      %640 = vrot.lane.b32.xlu0 %v639, 112
      %v641 = vpop.permute.xlu0 %640
      %v643 = vsel %vm272, %v635, 0
      %v646 = vsel %vm349, %v641, 0
      %648 = vmatprep.subr.bf16.mxu0 0
      %649 = vmatpush1.bf16.msra.mxu0 %v646
      %650 = vmatprep.subr.bf16.mxu0 0
      %651 = vmatpush1.bf16.msra.mxu0 0
      %652 = vmatprep.subr.bf16.mxu0 0
      %653 = vmatpush1.bf16.msra.mxu0 0
      %654 = vmatprep.subr.bf16.mxu0 0
      %655 = vmatpush1.bf16.msra.mxu0 0
      %656 = vmatprep.subr.bf16.mxu0 0
      %657 = vmatpush1.bf16.msra.mxu0 0
      %658 = vmatprep.subr.bf16.mxu0 0
      %659 = vmatpush1.bf16.msra.mxu0 0
      %660 = vmatprep.subr.bf16.mxu0 0
      %661 = vmatpush1.bf16.msra.mxu0 0
      %662 = vmatprep.subr.bf16.mxu0 0
      %663 = vmatpush1.bf16.msra.mxu0 0
      %664 = vmatprep.subr.bf16.mxu0 0
      %665 = vmatpush1.bf16.msra.mxu0 0
      %666 = vmatprep.subr.bf16.mxu0 0
      %667 = vmatpush1.bf16.msra.mxu0 0
      %668 = vmatprep.subr.bf16.mxu0 0
      %669 = vmatpush1.bf16.msra.mxu0 0
      %670 = vmatprep.subr.bf16.mxu0 0
      %671 = vmatpush1.bf16.msra.mxu0 0
      %672 = vmatprep.subr.bf16.mxu0 0
      %673 = vmatpush1.bf16.msra.mxu0 0
      %674 = vmatprep.subr.bf16.mxu0 0
      %675 = vmatpush1.bf16.msra.mxu0 0
      %676 = vmatprep.subr.bf16.mxu0 0
      %677 = vmatpush1.bf16.msra.mxu0 0
      %678 = vmatprep.subr.bf16.mxu0 0
      %679 = vmatpush1.bf16.msra.mxu0 0
      %680 = vmatprep.mubr.bf16.mxu0 0
      %681 = vmatmul.mubr.bf16.gmra.mrb[0].mxu0 %v643
      %v682 = vpop.f32.mrb[0].mxu0
      %v683 = vadd.f32 0.0, %v682
      %v684 = vpop.f32.mrb[0].mxu0
      %v685 = vpop.f32.mrb[0].mxu0
      %v686 = vpop.f32.mrb[0].mxu0
      %687 = vdwg.mxu0
      %v688 = vld [vmem:[#allocation4] sm:$0xff]
      %690 = vset.pattern.permute.xlu0 2
      %691 = vperm.xlu0 %690, %v618
      %v692 = vpop.permute.xlu0 %691
      %v694 = vmul.f32 %v692, %v688
      %696 = vrot.lane.b32.xlu0 %v683, 16
      %v697 = vpop.permute.xlu0 %696
      %v699 = vadd.f32 %v694, %v697
      %vm700 = vcmask 195712
      %701 = vst.msk [vmem:[#allocation4] sm:$0xff] %vm700, %v699
      %v702 = vld [vmem:[%s238] sm:$0xf]
      %v703 = vld [vmem:[%s245] sm:$0xf]
      %v705 = vunpack.c.l.b16 %v702
      %v706 = vpack.c.b16 %v705, %v705
      %707 = vrot.lane.b32.xlu0 %v706, 104
      %v708 = vpop.permute.xlu0 %707
      %v710 = vunpack.c.l.b16 %v703
      %v711 = vpack.c.b16 %v710, %v710
      %712 = vrot.lane.b32.xlu0 %v711, 104
      %v713 = vpop.permute.xlu0 %712
      %v715 = vsel %vm272, %v708, 0
      %v718 = vsel %vm272, %v713, 0
      %720 = vmatprep.subr.bf16.mxu0 0
      %721 = vmatpush1.bf16.xpose.msra.mxu0 %v718
      %722 = vmatprep.subr.bf16.mxu0 0
      %723 = vmatpush1.bf16.xpose.msra.mxu0 0
      %724 = vmatprep.subr.bf16.mxu0 0
      %725 = vmatpush1.bf16.xpose.msra.mxu0 0
      %726 = vmatprep.subr.bf16.mxu0 0
      %727 = vmatpush1.bf16.xpose.msra.mxu0 0
      %728 = vmatprep.subr.bf16.mxu0 0
      %729 = vmatpush1.bf16.xpose.msra.mxu0 0
      %730 = vmatprep.subr.bf16.mxu0 0
      %731 = vmatpush1.bf16.xpose.msra.mxu0 0
      %732 = vmatprep.subr.bf16.mxu0 0
      %733 = vmatpush1.bf16.xpose.msra.mxu0 0
      %734 = vmatprep.subr.bf16.mxu0 0
      %735 = vmatpush1.bf16.xpose.msra.mxu0 0
      %736 = vmatprep.subr.bf16.mxu0 0
      %737 = vmatpush1.bf16.xpose.msra.mxu0 0
      %738 = vmatprep.subr.bf16.mxu0 0
      %739 = vmatpush1.bf16.xpose.msra.mxu0 0
      %740 = vmatprep.subr.bf16.mxu0 0
      %741 = vmatpush1.bf16.xpose.msra.mxu0 0
      %742 = vmatprep.subr.bf16.mxu0 0
      %743 = vmatpush1.bf16.xpose.msra.mxu0 0
      %744 = vmatprep.subr.bf16.mxu0 0
      %745 = vmatpush1.bf16.xpose.msra.mxu0 0
      %746 = vmatprep.subr.bf16.mxu0 0
      %747 = vmatpush1.bf16.xpose.msra.mxu0 0
      %748 = vmatprep.subr.bf16.mxu0 0
      %749 = vmatpush1.bf16.xpose.msra.mxu0 0
      %750 = vmatprep.subr.bf16.mxu0 0
      %751 = vmatpush1.bf16.xpose.msra.mxu0 0
      %752 = vmatprep.mubr.bf16.mxu0 0
      %753 = vmatmul.mubr.bf16.gmra.mrb[0].mxu0 %v715
      %v754 = vpop.f32.mrb[0].mxu0
      %v755 = vadd.f32 0.0, %v754
      %v756 = vpop.f32.mrb[0].mxu0
      %v757 = vpop.f32.mrb[0].mxu0
      %v758 = vpop.f32.mrb[0].mxu0
      %759 = vdwg.mxu0
      %v760 = vld [vmem:[#allocation2] sm:$0xff]
      %v761 = vld [vmem:[#allocation3] sm:$0xff]
      %v762 = vsel %vm272, %v755, -inf
      %763 = vmax.xlane.f32.xlu0 %v762
      %v764 = vpop.xlane.xlu0 %763
      %v765 = vmax.f32 %v760, %v764
      %v766 = vsub.f32 %v760, %v765
      %v767 = vmul.f32 %v766, 1.442695
      %v768 = vpow.pop %v767
      %770 = vset.pattern.permute.xlu0 3
      %771 = vperm.xlu0 %770, %v765
      %v772 = vpop.permute.xlu0 %771
      %v774 = vsub.f32 %v755, %v772
      %v775 = vmul.f32 %v774, 1.442695
      %v776 = vpow.pop %v775
      %v777 = vmul.f32 %v768, %v761
      %v778 = vsel %vm272, %v776, 0.0
      %779 = vadd.xlane.f32.xlu0 %v778
      %v780 = vpop.xlane.xlu0 %779
      %v781 = vadd.f32 %v777, %v780
      %vm782 = vcmask 31768
      %783 = vst.msk [vmem:[#allocation3] sm:$0xff] %vm782, %v781
      %784 = vst.msk [vmem:[#allocation2] sm:$0xff] %vm782, %v765
      %v785 = vpack.c.bf16 %v776, %v776
      %v786 = vld [vmem:[%s252] sm:$0xf]
      %v788 = vunpack.c.l.b16 %v786
      %v789 = vpack.c.b16 %v788, %v788
      %790 = vrot.lane.b32.xlu0 %v789, 104
      %v791 = vpop.permute.xlu0 %790
      %v793 = vsel %vm272, %v785, 0
      %v796 = vsel %vm349, %v791, 0
      %798 = vmatprep.subr.bf16.mxu0 0
      %799 = vmatpush1.bf16.msra.mxu0 %v796
      %800 = vmatprep.subr.bf16.mxu0 0
      %801 = vmatpush1.bf16.msra.mxu0 0
      %802 = vmatprep.subr.bf16.mxu0 0
      %803 = vmatpush1.bf16.msra.mxu0 0
      %804 = vmatprep.subr.bf16.mxu0 0
      %805 = vmatpush1.bf16.msra.mxu0 0
      %806 = vmatprep.subr.bf16.mxu0 0
      %807 = vmatpush1.bf16.msra.mxu0 0
      %808 = vmatprep.subr.bf16.mxu0 0
      %809 = vmatpush1.bf16.msra.mxu0 0
      %810 = vmatprep.subr.bf16.mxu0 0
      %811 = vmatpush1.bf16.msra.mxu0 0
      %812 = vmatprep.subr.bf16.mxu0 0
      %813 = vmatpush1.bf16.msra.mxu0 0
      %814 = vmatprep.subr.bf16.mxu0 0
      %815 = vmatpush1.bf16.msra.mxu0 0
      %816 = vmatprep.subr.bf16.mxu0 0
      %817 = vmatpush1.bf16.msra.mxu0 0
      %818 = vmatprep.subr.bf16.mxu0 0
      %819 = vmatpush1.bf16.msra.mxu0 0
      %820 = vmatprep.subr.bf16.mxu0 0
      %821 = vmatpush1.bf16.msra.mxu0 0
      %822 = vmatprep.subr.bf16.mxu0 0
      %823 = vmatpush1.bf16.msra.mxu0 0
      %824 = vmatprep.subr.bf16.mxu0 0
      %825 = vmatpush1.bf16.msra.mxu0 0
      %826 = vmatprep.subr.bf16.mxu0 0
      %827 = vmatpush1.bf16.msra.mxu0 0
      %828 = vmatprep.subr.bf16.mxu0 0
      %829 = vmatpush1.bf16.msra.mxu0 0
      %830 = vmatprep.mubr.bf16.mxu0 0
      %831 = vmatmul.mubr.bf16.gmra.mrb[0].mxu0 %v793
      %v832 = vpop.f32.mrb[0].mxu0
      %v833 = vadd.f32 0.0, %v832
      %v834 = vpop.f32.mrb[0].mxu0
      %v835 = vpop.f32.mrb[0].mxu0
      %v836 = vpop.f32.mrb[0].mxu0
      %837 = vdwg.mxu0
      %v838 = vld [vmem:[#allocation4] sm:$0xff]
      %840 = vset.pattern.permute.xlu0 3
      %841 = vperm.xlu0 %840, %v768
      %v842 = vpop.permute.xlu0 %841
      %v844 = vmul.f32 %v842, %v838
      %846 = vrot.lane.b32.xlu0 %v833, 24
      %v847 = vpop.permute.xlu0 %846
      %v849 = vadd.f32 %v844, %v847
      %vm850 = vcmask 261312
      %851 = vst.msk [vmem:[#allocation4] sm:$0xff] %vm850, %v849
      // Predicated region
      $region37: #{transformer_block_forward.6} parent=31 // pred_check
        %p852 = pneg %p261
      $region38: #{transformer_block_forward.6} parent=31 // pred_check_branch
        %854 = sbr.rel (%p852) target = $region40
      $region39: #{transformer_block_forward.6} parent=31 // pred_region
        %v855 = vld [vmem:[#allocation3] sm:$0xff]
        %v856 = vrcp.pop %v855
        %v857 = vld [vmem:[#allocation4] sm:$0xff]
        %859 = vset.pattern.permute.xlu0 0
        %860 = vperm.xlu0 %859, %v856
        %v861 = vpop.permute.xlu0 %860
        %v863 = vmul.f32 %v857, %v861
        %v864 = vpack.c.bf16 %v863, %v863
        %vm865 = vcmask 60416
        %866 = vst.msk [vmem:[%s259] sm:$0xf] %vm865, %v864
        %v867 = vld [vmem:[#allocation3] sm:$0xff]
        %v868 = vrcp.pop %v867
        %v869 = vld [vmem:[#allocation4] sm:$0xff]
        %871 = vset.pattern.permute.xlu0 1
        %872 = vperm.xlu0 %871, %v868
        %v873 = vpop.permute.xlu0 %872
        %v875 = vmul.f32 %v869, %v873
        %v876 = vpack.c.bf16 %v875, %v875
        %vm877 = vcmask 126016
        %878 = vst.msk [vmem:[%s259] sm:$0xf] %vm877, %v876
        %v879 = vld [vmem:[#allocation3] sm:$0xff]
        %v880 = vrcp.pop %v879
        %v881 = vld [vmem:[#allocation4] sm:$0xff]
        %883 = vset.pattern.permute.xlu0 2
        %884 = vperm.xlu0 %883, %v880
        %v885 = vpop.permute.xlu0 %884
        %v887 = vmul.f32 %v881, %v885
        %v888 = vpack.c.bf16 %v887, %v887
        %vm889 = vcmask 191616
        %890 = vst.msk [vmem:[%s259] sm:$0xf] %vm889, %v888
        %v891 = vld [vmem:[#allocation3] sm:$0xff]
        %v892 = vrcp.pop %v891
        %v893 = vld [vmem:[#allocation4] sm:$0xff]
        %895 = vset.pattern.permute.xlu0 3
        %896 = vperm.xlu0 %895, %v892
        %v897 = vpop.permute.xlu0 %896
        %v899 = vmul.f32 %v893, %v897
        %v900 = vpack.c.bf16 %v899, %v899
        %vm901 = vcmask 257216
        %902 = vst.msk [vmem:[%s259] sm:$0xf] %vm901, %v900
      $region40: #{transformer_block_forward.6} parent=31 // pred_fallthru
        _
      %p903 = scmp.lt.s32.totalorder %s19, 1
      %s904 = scalar_select %p903, %s19, 1
      %p905 = scmp.lt.s32.totalorder %s20, 0
      %s906 = scalar_select %p905, %s20, 0
      %s907 = sadd.s32 %s906, %s904
      %s908 = smul.addr %s907, 4
      %s909 = scalar_lea.vmem %s3, %s908
      // Predicated region
      $region41: #{transformer_block_forward.6} parent=31 // pred_check
        %p910 = pneg %p137
      $region42: #{transformer_block_forward.6} parent=31 // pred_check_branch
        %912 = sbr.rel (%p910) target = $region44
      $region43: #{transformer_block_forward.6} parent=31 // pred_region
        _
      $region44: #{transformer_block_forward.6} parent=31 // pred_fallthru
        _
    $region32: #{transformer_block_forward.6} parent=5 // pred_fallthru
      _
    %p913 = scmp.le.s32.totalorder 2, %s9
    // Predicated region
    $region45: #{transformer_block_forward.6} parent=5 // pred_check
      %p914 = pneg %p913
    $region46: #{transformer_block_forward.6} parent=5 // pred_check_branch
      %916 = sbr.rel (%p914) target = $region48
    $region47: #{transformer_block_forward.6} parent=5 // pred_region
      %s917 = ssub.s32 %s9, 2
      // Predicated region
      $region49: #{transformer_block_forward.6} parent=47 // pred_check
        %p918 = pneg %p143
      $region50: #{transformer_block_forward.6} parent=47 // pred_check_branch
        %920 = sbr.rel (%p918) target = $region52
      $region51: #{transformer_block_forward.6} parent=47 // pred_region
        %p921 = scmp.lt.s32.totalorder %s22, 1
        %s922 = scalar_select %p921, %s22, 1
        %p923 = scmp.lt.s32.totalorder %s23, 0
        %s924 = scalar_select %p923, %s23, 0
        %s925 = sadd.s32 %s924, %s922
        %s926 = smul.addr %s925, 4
        %s927 = scalar_lea.vmem %s3, %s926
      $region52: #{transformer_block_forward.6} parent=47 // pred_fallthru
        _
    $region48: #{transformer_block_forward.6} parent=5 // pred_fallthru
      _
  $region6: #{transformer_block_forward.6} parent=0 // loop_footer
    %s13 = sadd.s32 1, %s9
  $region7: #{transformer_block_forward.6} parent=0 // loop_footer_branch
    %8 = sbr.rel target = $region3
  $region8: #{transformer_block_forward.6} parent=0 // loop_exit
    _

// kernel: transformer_block_forward.9
$region0: #{transformer_block_forward.9}
  #allocation0 [shape = 'u32[]', space=smem, size = 0x4, offset = 0x4, fixed_abs, tag = 'smem constant byte address 0x4 - core index']
  #allocation1 [shape = 'u32[144,128]{1,0:T(1,128)}', space=vmem, size = 0x12000, scoped, tag = 'internal scratch']
  #allocation2 [shape = 'f32[16,32]{1,0:T(8,128)}', space=vmem, size = 0x2000, scoped, tag = 'scratch operand']
  %s0 = inlined_call_operand.vmem [shape: bf16[16,256], index: 0, kind: input, shape index: {}]
  %s1 = inlined_call_operand.vmem [shape: bf16[256,32], index: 1, kind: input, shape index: {}]
  %s2 = inlined_call_operand.vmem [shape: bf16[16,32], index: 2, kind: input, shape index: {}]
  %s3 = inlined_call_operand.hbm [shape: f32[16,32], index: 3, kind: output, shape index: {}]
  %s4 = sld [smem:[#allocation0]]
  $region30: #{transformer_block_forward.9} parent=0
    _
  %s6 = ssub.s32 1, %s4
  %s7 = scalar_select 0, %s6, %s4
  $region1: #{transformer_block_forward.9} parent=0
    #allocation3 [shape = 'u8[8192]{0}', space=vmem, size = 0x2000, scoped, tag = 'output window, operand 0, single buffered']
    #allocation4 [shape = 's32[1]{0}', space=sflag, size = 0x4, scoped, tag = 'scoped memory for transformer_block_forward.9']
    %8 = vsyncpa [#allocation4], 0
    // Predicated region
    $region2: #{transformer_block_forward.9} parent=1 // pred_check
      _
    $region3: #{transformer_block_forward.9} parent=1 // pred_check_branch
      %10 = sbr.rel (0) target = $region5
    $region4: #{transformer_block_forward.9} parent=1 // pred_region
      _
    $region5: #{transformer_block_forward.9} parent=1 // pred_fallthru
      _
    // Predicated region
    $region6: #{transformer_block_forward.9} parent=1 // pred_check
      _
    $region7: #{transformer_block_forward.9} parent=1 // pred_check_branch
      %12 = sbr.rel (0) target = $region9
    $region8: #{transformer_block_forward.9} parent=1 // pred_region
      _
    $region9: #{transformer_block_forward.9} parent=1 // pred_fallthru
      _
    // Predicated region
    $region10: #{transformer_block_forward.9} parent=1 // pred_check
      _
    $region11: #{transformer_block_forward.9} parent=1 // pred_check_branch
      %14 = sbr.rel (0) target = $region13
    $region12: #{transformer_block_forward.9} parent=1 // pred_region
      _
    $region13: #{transformer_block_forward.9} parent=1 // pred_fallthru
      _
    %p16 = scmp.eq.s32.totalorder 0, 0
    // Predicated region
    $region14: #{transformer_block_forward.9} parent=1 // pred_check
      %p17 = pneg %p16
    $region15: #{transformer_block_forward.9} parent=1 // pred_check_branch
      %19 = sbr.rel (%p17) target = $region17
    $region16: #{transformer_block_forward.9} parent=1 // pred_region
      %vm20 = vcmask 261120
      %21 = vst.msk [vmem:[#allocation2] sm:$0xff] %vm20, 0.0
      %22 = vst.msk [vmem:[#allocation2 + $0x8] sm:$0xff] %vm20, 0.0
    $region17: #{transformer_block_forward.9} parent=1 // pred_fallthru
      _
    %v23 = vld [vmem:[#allocation2] sm:$0xff]
    %v24 = vld [vmem:[#allocation2 + $0x8] sm:$0xff]
    %v25 = vld [vmem:[%s0] sm:$0xff]
    %v26 = vld [vmem:[%s0 + $0x8] sm:$0xff]
    %v27 = vld [vmem:[%s1] sm:$0xf]
    %v28 = vld [vmem:[%s1 + $0x4] sm:$0xf]
    %v29 = vld [vmem:[%s1 + $0x8] sm:$0xf]
    %v30 = vld [vmem:[%s1 + $0xc] sm:$0xf]
    %v31 = vld [vmem:[%s1 + $0x10] sm:$0xf]
    %v32 = vld [vmem:[%s1 + $0x14] sm:$0xf]
    %v33 = vld [vmem:[%s1 + $0x18] sm:$0xf]
    %v34 = vld [vmem:[%s1 + $0x1c] sm:$0xf]
    %v35 = vld [vmem:[%s1 + $0x20] sm:$0xf]
    %v36 = vld [vmem:[%s1 + $0x24] sm:$0xf]
    %v37 = vld [vmem:[%s1 + $0x28] sm:$0xf]
    %v38 = vld [vmem:[%s1 + $0x2c] sm:$0xf]
    %v39 = vld [vmem:[%s1 + $0x30] sm:$0xf]
    %v40 = vld [vmem:[%s1 + $0x34] sm:$0xf]
    %v41 = vld [vmem:[%s1 + $0x38] sm:$0xf]
    %v42 = vld [vmem:[%s1 + $0x3c] sm:$0xf]
    %v43 = vld [vmem:[%s1 + $0x40] sm:$0xf]
    %v44 = vld [vmem:[%s1 + $0x44] sm:$0xf]
    %v45 = vld [vmem:[%s1 + $0x48] sm:$0xf]
    %v46 = vld [vmem:[%s1 + $0x4c] sm:$0xf]
    %v47 = vld [vmem:[%s1 + $0x50] sm:$0xf]
    %v48 = vld [vmem:[%s1 + $0x54] sm:$0xf]
    %v49 = vld [vmem:[%s1 + $0x58] sm:$0xf]
    %v50 = vld [vmem:[%s1 + $0x5c] sm:$0xf]
    %v51 = vld [vmem:[%s1 + $0x60] sm:$0xf]
    %v52 = vld [vmem:[%s1 + $0x64] sm:$0xf]
    %v53 = vld [vmem:[%s1 + $0x68] sm:$0xf]
    %v54 = vld [vmem:[%s1 + $0x6c] sm:$0xf]
    %v55 = vld [vmem:[%s1 + $0x70] sm:$0xf]
    %v56 = vld [vmem:[%s1 + $0x74] sm:$0xf]
    %v57 = vld [vmem:[%s1 + $0x78] sm:$0xf]
    %v58 = vld [vmem:[%s1 + $0x7c] sm:$0xf]
    %v61 = vunpack.c.l.b16 %v25
    %v62 = vunpack.c.h.b16 %v25
    %v63 = vunpack.c.l.b16 %v26
    %v64 = vunpack.c.h.b16 %v26
    %v65 = vpack.c.b16 %v63, %v61
    %v66 = vpack.c.b16 %v64, %v62
    %v101 = vunpack.c.l.b16 %v27
    %v102 = vunpack.c.l.b16 %v28
    %v103 = vunpack.c.l.b16 %v29
    %v104 = vunpack.c.l.b16 %v30
    %v105 = vunpack.c.l.b16 %v31
    %v106 = vunpack.c.l.b16 %v32
    %v107 = vunpack.c.l.b16 %v33
    %v108 = vunpack.c.l.b16 %v34
    %v109 = vunpack.c.l.b16 %v35
    %v110 = vunpack.c.l.b16 %v36
    %v111 = vunpack.c.l.b16 %v37
    %v112 = vunpack.c.l.b16 %v38
    %v113 = vunpack.c.l.b16 %v39
    %v114 = vunpack.c.l.b16 %v40
    %v115 = vunpack.c.l.b16 %v41
    %v116 = vunpack.c.l.b16 %v42
    %v117 = vunpack.c.l.b16 %v43
    %v118 = vunpack.c.l.b16 %v44
    %v119 = vunpack.c.l.b16 %v45
    %v120 = vunpack.c.l.b16 %v46
    %v121 = vunpack.c.l.b16 %v47
    %v122 = vunpack.c.l.b16 %v48
    %v123 = vunpack.c.l.b16 %v49
    %v124 = vunpack.c.l.b16 %v50
    %v125 = vunpack.c.l.b16 %v51
    %v126 = vunpack.c.l.b16 %v52
    %v127 = vunpack.c.l.b16 %v53
    %v128 = vunpack.c.l.b16 %v54
    %v129 = vunpack.c.l.b16 %v55
    %v130 = vunpack.c.l.b16 %v56
    %v131 = vunpack.c.l.b16 %v57
    %v132 = vunpack.c.l.b16 %v58
    %v133 = vpack.c.b16 %v102, %v101
    %v134 = vpack.c.b16 %v104, %v103
    %v135 = vpack.c.b16 %v106, %v105
    %v136 = vpack.c.b16 %v108, %v107
    %v137 = vpack.c.b16 %v110, %v109
    %v138 = vpack.c.b16 %v112, %v111
    %v139 = vpack.c.b16 %v114, %v113
    %v140 = vpack.c.b16 %v116, %v115
    %v141 = vpack.c.b16 %v118, %v117
    %v142 = vpack.c.b16 %v120, %v119
    %v143 = vpack.c.b16 %v122, %v121
    %v144 = vpack.c.b16 %v124, %v123
    %v145 = vpack.c.b16 %v126, %v125
    %v146 = vpack.c.b16 %v128, %v127
    %v147 = vpack.c.b16 %v130, %v129
    %v148 = vpack.c.b16 %v132, %v131
    %165 = vmatprep.subr.bf16.mxu0 0
    %166 = vmatpush1.bf16.msra.mxu0 %v133
    %167 = vmatprep.subr.bf16.mxu0 0
    %168 = vmatpush1.bf16.msra.mxu0 %v134
    %169 = vmatprep.subr.bf16.mxu0 0
    %170 = vmatpush1.bf16.msra.mxu0 %v135
    %171 = vmatprep.subr.bf16.mxu0 0
    %172 = vmatpush1.bf16.msra.mxu0 %v136
    %173 = vmatprep.subr.bf16.mxu0 0
    %174 = vmatpush1.bf16.msra.mxu0 %v137
    %175 = vmatprep.subr.bf16.mxu0 0
    %176 = vmatpush1.bf16.msra.mxu0 %v138
    %177 = vmatprep.subr.bf16.mxu0 0
    %178 = vmatpush1.bf16.msra.mxu0 %v139
    %179 = vmatprep.subr.bf16.mxu0 0
    %180 = vmatpush1.bf16.msra.mxu0 %v140
    %181 = vmatprep.subr.bf16.mxu0 0
    %182 = vmatpush1.bf16.msra.mxu0 %v141
    %183 = vmatprep.subr.bf16.mxu0 0
    %184 = vmatpush1.bf16.msra.mxu0 %v142
    %185 = vmatprep.subr.bf16.mxu0 0
    %186 = vmatpush1.bf16.msra.mxu0 %v143
    %187 = vmatprep.subr.bf16.mxu0 0
    %188 = vmatpush1.bf16.msra.mxu0 %v144
    %189 = vmatprep.subr.bf16.mxu0 0
    %190 = vmatpush1.bf16.msra.mxu0 %v145
    %191 = vmatprep.subr.bf16.mxu0 0
    %192 = vmatpush1.bf16.msra.mxu0 %v146
    %193 = vmatprep.subr.bf16.mxu0 0
    %194 = vmatpush1.bf16.msra.mxu0 %v147
    %195 = vmatprep.subr.bf16.mxu0 0
    %196 = vmatpush1.bf16.msra.mxu0 %v148
    %197 = vmatprep.mubr.bf16.mxu0 %v66
    %198 = vmatmul.mubr.bf16.gmra.mrb[0].mxu0 %v65
    %v199 = vpop.f32.mrb[0].mxu0
    %v200 = vadd.f32 0.0, %v199
    %v201 = vpop.f32.mrb[0].mxu0
    %v202 = vpop.f32.mrb[0].mxu0
    %v203 = vadd.f32 0.0, %v202
    %v204 = vpop.f32.mrb[0].mxu0
    %205 = vdwg.mxu0
    %v206 = vadd.f32 %v23, %v200
    %v207 = vadd.f32 %v24, %v203
    %vm208 = vcmask 261120
    %209 = vst.msk [vmem:[#allocation2] sm:$0xff] %vm208, %v206
    %210 = vst.msk [vmem:[#allocation2 + $0x8] sm:$0xff] %vm208, %v207
    // Predicated region
    $region18: #{transformer_block_forward.9} parent=1 // pred_check
      %p211 = pneg %p16
    $region19: #{transformer_block_forward.9} parent=1 // pred_check_branch
      %213 = sbr.rel (%p211) target = $region21
    $region20: #{transformer_block_forward.9} parent=1 // pred_region
      %v214 = vld [vmem:[#allocation2] sm:$0xff]
      %v215 = vld [vmem:[#allocation2 + $0x8] sm:$0xff]
      %v216 = vld [vmem:[%s2] sm:$0xf]
      %v217 = vld [vmem:[%s2 + $0x4] sm:$0xf]
      %v218 = vunpack.c.l.bf16 %v216
      %v219 = vunpack.c.l.bf16 %v217
      %v220 = vadd.f32 %v214, %v218
      %v221 = vadd.f32 %v215, %v219
      %222 = vst.msk [vmem:[#allocation3] sm:$0xff] %vm208, %v220
      %223 = vst.msk [vmem:[#allocation3 + $0x8] sm:$0xff] %vm208, %v221
    $region21: #{transformer_block_forward.9} parent=1 // pred_fallthru
      _
    // Predicated region
    $region22: #{transformer_block_forward.9} parent=1 // pred_check
      _
    $region23: #{transformer_block_forward.9} parent=1 // pred_check_branch
      %225 = sbr.rel (0) target = $region25
    $region24: #{transformer_block_forward.9} parent=1 // pred_region
      %s227 = ssub.s32 256, 256
      %228 = vsyncadd [#allocation4], %s227
      %s229 = sshll.u32 [#allocation3], 4
      %s230 = int_to_ptr.vmem [resolvable:$true] %s229
      %235 = dma.vmem_to_hbm [thread:$0]  %s230, 256, %s3, [#allocation4], 128, 128, 8
    $region25: #{transformer_block_forward.9} parent=1 // pred_fallthru
      _
    // Predicated region
    $region26: #{transformer_block_forward.9} parent=1 // pred_check
      _
    $region27: #{transformer_block_forward.9} parent=1 // pred_check_branch
      %237 = sbr.rel (0) target = $region29
    $region28: #{transformer_block_forward.9} parent=1 // pred_region
      %238 = dma.done [#allocation4], 256
    $region29: #{transformer_block_forward.9} parent=1 // pred_fallthru
      _
    %239 = vsyncpa [#allocation4], 1

</llo_original>
